<compile_context>
chip_gen: v6e
topology: v6e:2x2x1
jax: 0.10.0
libtpu: 0.0.40
codegen_flags: <defaults>
</compile_context>

<pallas_src>
import jax
import jax.numpy as jnp
from jax.experimental import pallas as pl
from jax.experimental.pallas import tpu as pltpu

EPS = 1e-5

# ----- "config" constants (shapes implied by the module __init__) -----
N_FE_LAYERS = 2             # features_extractor n_layer
FE_K, FE_S, FE_P = 3, 2, 1  # features_extractor kernel / stride / padding(=1 in module)
FE_C = 32                   # features_extractor n_channel == n_feat_map_max
N_CHANNEL_HEAD = 16         # head_channel (int, != 'class'  ->  fc head path)
FC_N_HIDDEN = 32            # fc_n_hidden  (fc2 is never applied in forward)
EMBED_DIM = 16              # task_encoding embedding_dim (unused: modulators disabled)
C_IN = 4                    # vision input channels


# ------------------------- fused Pallas kernel -------------------------

def _bn_train(y, gamma=None, beta=None):
    """PyTorch train-mode BatchNorm over rows: per-column batch stats, biased variance."""
    mean = jnp.mean(y, axis=0, keepdims=True)
    var = jnp.mean((y - mean) ** 2, axis=0, keepdims=True)
    y = (y - mean) * jax.lax.rsqrt(var + EPS)
    if gamma is not None:
        y = gamma * y + beta
    return y


def _make_fused_kernel(n, oh1, ow1):
    # oh1/ow1: spatial size after the first conv (even).  Second conv (k3, s2, p1):
    oh2, ow2 = oh1 // 2, ow1 // 2
    ph_h, ph_w = oh2 + 1, ow2 + 1           # parity-phase buffer spatial extents
    sp2 = oh2 * ow2                          # spatial positions per sample after layer 1
    chunk = n * sp2                          # rows per parity chunk of the layer-0 output
    rows2 = n * sp2                          # layer-1 conv output rows (N*OH2*OW2)

    def kernel(p1_ref, w1_ref, b1_ref, g1_ref, be1_ref,
               w2_ref, b2_ref, g2_ref, be2_ref,
               wh_ref, bh_ref, wf_ref, bf_ref,
               o_ref,
               y1_ref, ph0, ph1, ph2, ph3, p2_ref, pool_ref):
        c1 = w1_ref.shape[1]                 # FE_C
        phases = [ph0, ph1, ph2, ph3]        # phase index = (pad_row%2)*2 + (pad_col%2)

        # ---- features_extractor layer 0: Conv2d(k3,s2,p1) as im2col matmul + BN2d + ReLU
        y1 = jnp.dot(p1_ref[...], w1_ref[...], preferred_element_type=jnp.float32)
        y1_ref[...] = jnp.maximum(_bn_train(y1 + b1_ref[...], g1_ref[...], be1_ref[...]), 0.0)

        # Scatter the (parity-ordered) layer-0 rows into four zero-padded parity phase
        # buffers so the stride-2 second conv only needs contiguous stride-1 slices.
        for p in phases:
            p[...] = jnp.zeros_like(p)
        for s in range(4):                   # chunk s holds rows with (oh1%2, ow1%2) = (pr, pc)
            pr, pc = s // 2, s % 2
            dst = phases[3 - s]              # interior point (h,w) lives in phase (1-pr, 1-pc)
            for nn in range(n):
                for ii in range(oh2):
                    row0 = s * chunk + nn * sp2 + ii * ow2
                    dst[nn, pl.ds((pr + ii) * ph_w + pc, ow2), :] = \
                        y1_ref[pl.ds(row0, ow2), :]

        # ---- features_extractor layer 1: assemble im2col patches in VMEM, 1 matmul + BN + ReLU
        for kh in range(FE_K):
            for kw in range(FE_K):
                t = kh * FE_K + kw
                src = phases[(kh % 2) * 2 + (kw % 2)]
                for nn in range(n):
                    for i2 in range(oh2):
                        p2_ref[pl.ds(nn * sp2 + i2 * ow2, ow2), pl.ds(t * c1, c1)] = \
                            src[nn, pl.ds((kh // 2 + i2) * ph_w + kw // 2, ow2), :]
        y2 = jnp.dot(p2_ref[...], w2_ref[...], preferred_element_type=jnp.float32)
        y2 = jnp.maximum(_bn_train(y2 + b2_ref[...], g2_ref[...], be2_ref[...]), 0.0)

        # ---- head_conv (1x1 conv == per-pixel matmul) + F.relu + global max_pool2d ----
        h = jnp.dot(y2, wh_ref[...], preferred_element_type=jnp.float32) + bh_ref[...]
        h = jnp.maximum(h, 0.0)
        for nn in range(n):                  # tiny per-sample spatial max into VMEM scratch
            pool_ref[pl.ds(nn, 1), :] = jnp.max(h[nn * sp2:(nn + 1) * sp2, :],
                                                axis=0, keepdims=True)

        # ---- fc1 -> fc_bn (BatchNorm1d, affine=False) -> identity FiLM mods -> ReLU ----
        z = jnp.dot(pool_ref[...], wf_ref[...], preferred_element_type=jnp.float32)
        z = _bn_train(z + bf_ref[...])
        # last_hidden_modulator / top_modulator return (0, 0):  (1+0)*z + 0 == z
        o_ref[...] = jnp.maximum(z, 0.0)     # single dense full-block HBM store

    return kernel


# ------------------------- pallas_call glue -------------------------

def _full_spec(shape):
    nd = len(shape)
    return pl.BlockSpec(shape, lambda i, _nd=nd: (0,) * _nd)


def _phase_ordered_patches(x_nhwc, k, s, p):
    # im2col for the FIRST conv only (its input comes from HBM anyway); rows are grouped
    # into 4 parity chunks (oh%2, ow%2) so the kernel can scatter the conv output into its
    # parity-phase VMEM buffers with stride-1 stores.  Column order: (kh*k + kw)*C + c.
    n, h, w, c = x_nhwc.shape
    xp = jnp.pad(x_nhwc, ((0, 0), (p, p), (p, p), (0, 0)))
    oh = (h + 2 * p - k) // s + 1
    ow = (w + 2 * p - k) // s + 1
    cols = []
    for kh in range(k):
        for kw in range(k):
            cols.append(xp[:, kh:kh + s * oh:s, kw:kw + s * ow:s, :])
    patches = jnp.stack(cols, axis=3).reshape(n, oh, ow, k * k * c)
    patches = patches.reshape(n, oh // 2, 2, ow // 2, 2, k * k * c)
    patches = jnp.transpose(patches, (2, 4, 0, 1, 3, 5))     # (pr, pc, n, oh//2, ow//2, K)
    return patches.reshape(4 * n * (oh // 2) * (ow // 2), k * k * c), oh, ow


# ------------------------- parameters & forward -------------------------

def init_params(key):
    ks = jax.random.split(key, 12)

    def nrm(k, shape, scale):
        return scale * jax.random.normal(k, shape, jnp.float32)

    params = {'fe': [],
              'head': {'w': nrm(ks[8], (FE_C, N_CHANNEL_HEAD), 0.1),
                       'b': nrm(ks[9], (1, N_CHANNEL_HEAD), 0.01)},
              'fc1': {'w': nrm(ks[10], (N_CHANNEL_HEAD, FC_N_HIDDEN), 0.1),
                      'b': nrm(ks[11], (1, FC_N_HIDDEN), 0.01)},
              'task': {'w': nrm(ks[6], (1, EMBED_DIM), 0.5),     # present in the module but
                       'b': nrm(ks[7], (1, EMBED_DIM), 0.1)}}    # unused (modulators disabled)
    cin = C_IN
    for layer in range(N_FE_LAYERS):
        params['fe'].append({
            'w': nrm(ks[2 * layer], (FE_K, FE_K, cin, FE_C), 0.1),   # HWIO
            'b': nrm(ks[2 * layer + 1], (1, FE_C), 0.01),
            'gamma': jnp.ones((1, FE_C), jnp.float32),               # BatchNorm2d default init
            'beta': jnp.zeros((1, FE_C), jnp.float32),
        })
        cin = FE_C
    return params


@jax.jit
def filmed_net_forward(params, vision_nchw, second_modality):
    # second_mod = self.text_embed_encode(second_mod): with n_modulated_block = 0 and all
    # modulate_top flags False it cannot influence the output, so it is elided.
    # TODO(synk): wire the task embedding / FiLM generator back in once the
    # SimpleFilmGen / Mlp_Modulation / FiLMedResBlock bodies are available.
    del second_modality
    n = vision_nchw.shape[0]

    x = jnp.transpose(vision_nchw, (0, 2, 3, 1)).astype(jnp.float32)   # NCHW -> NHWC
    patches1, oh1, ow1 = _phase_ordered_patches(x, FE_K, FE_S, FE_P)
    assert oh1 % 2 == 0 and ow1 % 2 == 0
    oh2, ow2 = oh1 // 2, ow1 // 2

    fe0, fe1 = params['fe']
    w1 = fe0['w'].reshape(FE_K * FE_K * C_IN, FE_C)
    w2 = fe1['w'].reshape(FE_K * FE_K * FE_C, FE_C)

    args = (patches1, w1, fe0['b'], fe0['gamma'], fe0['beta'],
            w2, fe1['b'], fe1['gamma'], fe1['beta'],
            params['head']['w'], params['head']['b'],
            params['fc1']['w'], params['fc1']['b'])

    kernel = _make_fused_kernel(n, oh1, ow1)
    out = pl.pallas_call(
        kernel,
        grid=(1,),
        in_specs=[_full_spec(a.shape) for a in args],
        out_specs=_full_spec((n, FC_N_HIDDEN)),
        out_shape=jax.ShapeDtypeStruct((n, FC_N_HIDDEN), jnp.float32),
        scratch_shapes=[
            pltpu.VMEM((n * oh1 * ow1, FE_C), jnp.float32),            # layer-0 activations
            pltpu.VMEM((n, (oh2 + 1) * (ow2 + 1), FE_C), jnp.float32),  # phase (0,0)
            pltpu.VMEM((n, (oh2 + 1) * (ow2 + 1), FE_C), jnp.float32),  # phase (0,1)
            pltpu.VMEM((n, (oh2 + 1) * (ow2 + 1), FE_C), jnp.float32),  # phase (1,0)
            pltpu.VMEM((n, (oh2 + 1) * (ow2 + 1), FE_C), jnp.float32),  # phase (1,1)
            pltpu.VMEM((n * oh2 * ow2, FE_K * FE_K * FE_C), jnp.float32),  # layer-1 im2col
            pltpu.VMEM((n, N_CHANNEL_HEAD), jnp.float32),              # pooled head features
        ],
        compiler_params=pltpu.CompilerParams(
            dimension_semantics=("arbitrary",)),
    )(*args)
    return out


if __name__ == "__main__":
    key = jax.random.PRNGKey(0)
    kp, kv, kt = jax.random.split(key, 3)
    params = init_params(kp)

    vision = jax.random.normal(kv, (2, C_IN, 16, 16), jnp.float32)   # NCHW (PyTorch convention)
    second_modality = jax.random.normal(kt, (2, 1), jnp.float32)     # 'task' scalar input

    out = filmed_net_forward(params, vision, second_modality)
    out = jax.block_until_ready(out)
    assert out.shape == (2, FC_N_HIDDEN) and out.dtype == jnp.float32
    print("KERNEL_OK")
</pallas_src>

<mosaic_0001>
module attributes {stable_mosaic.version = 11 : i64} {
  func.func @kernel(%arg0: i32, %arg1: memref<128x36xf32, #tpu.memory_space<vmem>>, %arg2: memref<36x32xf32, #tpu.memory_space<vmem>>, %arg3: memref<1x32xf32, #tpu.memory_space<vmem>>, %arg4: memref<1x32xf32, #tpu.memory_space<vmem>>, %arg5: memref<1x32xf32, #tpu.memory_space<vmem>>, %arg6: memref<288x32xf32, #tpu.memory_space<vmem>>, %arg7: memref<1x32xf32, #tpu.memory_space<vmem>>, %arg8: memref<1x32xf32, #tpu.memory_space<vmem>>, %arg9: memref<1x32xf32, #tpu.memory_space<vmem>>, %arg10: memref<32x16xf32, #tpu.memory_space<vmem>>, %arg11: memref<1x16xf32, #tpu.memory_space<vmem>>, %arg12: memref<16x32xf32, #tpu.memory_space<vmem>>, %arg13: memref<1x32xf32, #tpu.memory_space<vmem>>, %arg14: memref<2x32xf32, #tpu.memory_space<vmem>>, %arg15: memref<128x32xf32, #tpu.memory_space<vmem>>, %arg16: memref<2x25x32xf32, #tpu.memory_space<vmem>>, %arg17: memref<2x25x32xf32, #tpu.memory_space<vmem>>, %arg18: memref<2x25x32xf32, #tpu.memory_space<vmem>>, %arg19: memref<2x25x32xf32, #tpu.memory_space<vmem>>, %arg20: memref<32x288xf32, #tpu.memory_space<vmem>>, %arg21: memref<2x16xf32, #tpu.memory_space<vmem>>) attributes {dimension_semantics = [#tpu.dimension_semantics<arbitrary>], iteration_bounds = array<i64: 1>, scalar_prefetch = 0 : i64, scratch_operands = 7 : i64, tpu.core_type = #tpu.core_type<tc>, window_params = [{pipeline_mode = #tpu.pipeline_mode<synchronous>, transform_indices = @transform_0, window_bounds = array<i64: 128, 36>}, {pipeline_mode = #tpu.pipeline_mode<synchronous>, transform_indices = @transform_1, window_bounds = array<i64: 36, 32>}, {pipeline_mode = #tpu.pipeline_mode<synchronous>, transform_indices = @transform_2, window_bounds = array<i64: 1, 32>}, {pipeline_mode = #tpu.pipeline_mode<synchronous>, transform_indices = @transform_3, window_bounds = array<i64: 1, 32>}, {pipeline_mode = #tpu.pipeline_mode<synchronous>, transform_indices = @transform_4, window_bounds = array<i64: 1, 32>}, {pipeline_mode = #tpu.pipeline_mode<synchronous>, transform_indices = @transform_5, window_bounds = array<i64: 288, 32>}, {pipeline_mode = #tpu.pipeline_mode<synchronous>, transform_indices = @transform_6, window_bounds = array<i64: 1, 32>}, {pipeline_mode = #tpu.pipeline_mode<synchronous>, transform_indices = @transform_7, window_bounds = array<i64: 1, 32>}, {pipeline_mode = #tpu.pipeline_mode<synchronous>, transform_indices = @transform_8, window_bounds = array<i64: 1, 32>}, {pipeline_mode = #tpu.pipeline_mode<synchronous>, transform_indices = @transform_9, window_bounds = array<i64: 32, 16>}, {pipeline_mode = #tpu.pipeline_mode<synchronous>, transform_indices = @transform_10, window_bounds = array<i64: 1, 16>}, {pipeline_mode = #tpu.pipeline_mode<synchronous>, transform_indices = @transform_11, window_bounds = array<i64: 16, 32>}, {pipeline_mode = #tpu.pipeline_mode<synchronous>, transform_indices = @transform_12, window_bounds = array<i64: 1, 32>}, {pipeline_mode = #tpu.pipeline_mode<synchronous>, transform_indices = @transform_13, window_bounds = array<i64: 2, 32>}]} {
    %c0 = arith.constant 0 : index
    %c0_0 = arith.constant 0 : index
    %0 = vector.load %arg1[%c0, %c0_0] : memref<128x36xf32, #tpu.memory_space<vmem>>, vector<128x36xf32>
    %c0_1 = arith.constant 0 : index
    %c0_2 = arith.constant 0 : index
    %1 = vector.load %arg2[%c0_1, %c0_2] : memref<36x32xf32, #tpu.memory_space<vmem>>, vector<36x32xf32>
    %cst = arith.constant dense<0.000000e+00> : vector<128x32xf32>
    %2 = tpu.matmul %0, %1, %cst {dimension_numbers = #tpu.dot_dimension_numbers<[1], [0], [0], [1], [0, 0, 1, 1], [], []>} : vector<128x36xf32>, vector<36x32xf32>, vector<128x32xf32> -> vector<128x32xf32>
    %c0_3 = arith.constant 0 : index
    %c0_4 = arith.constant 0 : index
    %3 = vector.load %arg3[%c0_3, %c0_4] : memref<1x32xf32, #tpu.memory_space<vmem>>, vector<1x32xf32>
    %4 = vector.broadcast %3 : vector<1x32xf32> to vector<128x32xf32>
    %5 = arith.addf %2, %4 : vector<128x32xf32>
    %c0_5 = arith.constant 0 : index
    %c0_6 = arith.constant 0 : index
    %6 = vector.load %arg4[%c0_5, %c0_6] : memref<1x32xf32, #tpu.memory_space<vmem>>, vector<1x32xf32>
    %c0_7 = arith.constant 0 : index
    %c0_8 = arith.constant 0 : index
    %7 = vector.load %arg5[%c0_7, %c0_8] : memref<1x32xf32, #tpu.memory_space<vmem>>, vector<1x32xf32>
    %cst_9 = arith.constant dense<0.000000e+00> : vector<32xf32>
    %8 = vector.multi_reduction <add>, %5, %cst_9 [0] : vector<128x32xf32> to vector<32xf32>
    %9 = vector.shape_cast %8 : vector<32xf32> to vector<1x32xf32>
    %cst_10 = arith.constant 1.280000e+02 : f32
    %10 = vector.broadcast %cst_10 : f32 to vector<1x32xf32>
    %11 = arith.divf %9, %10 : vector<1x32xf32>
    %12 = vector.broadcast %11 : vector<1x32xf32> to vector<128x32xf32>
    %13 = arith.subf %5, %12 : vector<128x32xf32>
    %14 = arith.mulf %13, %13 : vector<128x32xf32>
    %cst_11 = arith.constant dense<0.000000e+00> : vector<32xf32>
    %15 = vector.multi_reduction <add>, %14, %cst_11 [0] : vector<128x32xf32> to vector<32xf32>
    %16 = vector.shape_cast %15 : vector<32xf32> to vector<1x32xf32>
    %cst_12 = arith.constant 1.280000e+02 : f32
    %17 = vector.broadcast %cst_12 : f32 to vector<1x32xf32>
    %18 = arith.divf %16, %17 : vector<1x32xf32>
    %19 = vector.broadcast %11 : vector<1x32xf32> to vector<128x32xf32>
    %20 = arith.subf %5, %19 : vector<128x32xf32>
    %cst_13 = arith.constant 9.99999974E-6 : f32
    %21 = vector.broadcast %cst_13 : f32 to vector<1x32xf32>
    %22 = arith.addf %18, %21 : vector<1x32xf32>
    %23 = math.rsqrt %22 : vector<1x32xf32>
    %24 = vector.broadcast %23 : vector<1x32xf32> to vector<128x32xf32>
    %25 = arith.mulf %20, %24 : vector<128x32xf32>
    %26 = vector.broadcast %6 : vector<1x32xf32> to vector<128x32xf32>
    %27 = arith.mulf %26, %25 : vector<128x32xf32>
    %28 = vector.broadcast %7 : vector<1x32xf32> to vector<128x32xf32>
    %29 = arith.addf %27, %28 : vector<128x32xf32>
    %cst_14 = arith.constant 0.000000e+00 : f32
    %30 = vector.broadcast %cst_14 : f32 to vector<128x32xf32>
    %31 = arith.maximumf %29, %30 : vector<128x32xf32>
    %c0_15 = arith.constant 0 : index
    %c0_16 = arith.constant 0 : index
    %32 = vector.load %arg15[%c0_15, %c0_16] : memref<128x32xf32, #tpu.memory_space<vmem>>, vector<128x32xf32>
    tpu.vector_store %arg15[%c0_15, %c0_16], %31 {strides = array<i32>} : memref<128x32xf32, #tpu.memory_space<vmem>>, vector<128x32xf32>,
    %cst_17 = arith.constant 0.000000e+00 : f32
    %33 = vector.broadcast %cst_17 : f32 to vector<2x25x32xf32>
    %c0_18 = arith.constant 0 : index
    %c0_19 = arith.constant 0 : index
    %c0_20 = arith.constant 0 : index
    %34 = vector.load %arg16[%c0_18, %c0_19, %c0_20] : memref<2x25x32xf32, #tpu.memory_space<vmem>>, vector<2x25x32xf32>
    tpu.vector_store %arg16[%c0_18, %c0_19, %c0_20], %33 {strides = array<i32>} : memref<2x25x32xf32, #tpu.memory_space<vmem>>, vector<2x25x32xf32>,
    %cst_21 = arith.constant 0.000000e+00 : f32
    %35 = vector.broadcast %cst_21 : f32 to vector<2x25x32xf32>
    %c0_22 = arith.constant 0 : index
    %c0_23 = arith.constant 0 : index
    %c0_24 = arith.constant 0 : index
    %36 = vector.load %arg17[%c0_22, %c0_23, %c0_24] : memref<2x25x32xf32, #tpu.memory_space<vmem>>, vector<2x25x32xf32>
    tpu.vector_store %arg17[%c0_22, %c0_23, %c0_24], %35 {strides = array<i32>} : memref<2x25x32xf32, #tpu.memory_space<vmem>>, vector<2x25x32xf32>,
    %cst_25 = arith.constant 0.000000e+00 : f32
    %37 = vector.broadcast %cst_25 : f32 to vector<2x25x32xf32>
    %c0_26 = arith.constant 0 : index
    %c0_27 = arith.constant 0 : index
    %c0_28 = arith.constant 0 : index
    %38 = vector.load %arg18[%c0_26, %c0_27, %c0_28] : memref<2x25x32xf32, #tpu.memory_space<vmem>>, vector<2x25x32xf32>
    tpu.vector_store %arg18[%c0_26, %c0_27, %c0_28], %37 {strides = array<i32>} : memref<2x25x32xf32, #tpu.memory_space<vmem>>, vector<2x25x32xf32>,
    %cst_29 = arith.constant 0.000000e+00 : f32
    %39 = vector.broadcast %cst_29 : f32 to vector<2x25x32xf32>
    %c0_30 = arith.constant 0 : index
    %c0_31 = arith.constant 0 : index
    %c0_32 = arith.constant 0 : index
    %40 = vector.load %arg19[%c0_30, %c0_31, %c0_32] : memref<2x25x32xf32, #tpu.memory_space<vmem>>, vector<2x25x32xf32>
    tpu.vector_store %arg19[%c0_30, %c0_31, %c0_32], %39 {strides = array<i32>} : memref<2x25x32xf32, #tpu.memory_space<vmem>>, vector<2x25x32xf32>,
    %c0_33 = arith.constant 0 : index
    %c0_34 = arith.constant 0 : index
    %41 = vector.load %arg15[%c0_33, %c0_34] : memref<128x32xf32, #tpu.memory_space<vmem>>, vector<4x32xf32>
    %c0_35 = arith.constant 0 : index
    %c0_36 = arith.constant 0 : index
    %c0_37 = arith.constant 0 : index
    %42 = vector.load %arg19[%c0_35, %c0_36, %c0_37] : memref<2x25x32xf32, #tpu.memory_space<vmem>>, vector<1x4x32xf32>
    %43 = vector.shape_cast %42 : vector<1x4x32xf32> to vector<4x32xf32>
    %44 = vector.shape_cast %41 : vector<4x32xf32> to vector<1x4x32xf32>
    tpu.vector_store %arg19[%c0_35, %c0_36, %c0_37], %44 {strides = array<i32>} : memref<2x25x32xf32, #tpu.memory_space<vmem>>, vector<1x4x32xf32>,
    %c4 = arith.constant 4 : index
    %c0_38 = arith.constant 0 : index
    %45 = vector.load %arg15[%c4, %c0_38] : memref<128x32xf32, #tpu.memory_space<vmem>>, vector<4x32xf32>
    %c0_39 = arith.constant 0 : index
    %c5 = arith.constant 5 : index
    %c0_40 = arith.constant 0 : index
    %46 = vector.load %arg19[%c0_39, %c5, %c0_40] : memref<2x25x32xf32, #tpu.memory_space<vmem>>, vector<1x4x32xf32>
    %47 = vector.shape_cast %46 : vector<1x4x32xf32> to vector<4x32xf32>
    %48 = vector.shape_cast %45 : vector<4x32xf32> to vector<1x4x32xf32>
    tpu.vector_store %arg19[%c0_39, %c5, %c0_40], %48 {strides = array<i32>} : memref<2x25x32xf32, #tpu.memory_space<vmem>>, vector<1x4x32xf32>,
    %c8 = arith.constant 8 : index
    %c0_41 = arith.constant 0 : index
    %49 = vector.load %arg15[%c8, %c0_41] : memref<128x32xf32, #tpu.memory_space<vmem>>, vector<4x32xf32>
    %c0_42 = arith.constant 0 : index
    %c10 = arith.constant 10 : index
    %c0_43 = arith.constant 0 : index
    %50 = vector.load %arg19[%c0_42, %c10, %c0_43] : memref<2x25x32xf32, #tpu.memory_space<vmem>>, vector<1x4x32xf32>
    %51 = vector.shape_cast %50 : vector<1x4x32xf32> to vector<4x32xf32>
    %52 = vector.shape_cast %49 : vector<4x32xf32> to vector<1x4x32xf32>
    tpu.vector_store %arg19[%c0_42, %c10, %c0_43], %52 {strides = array<i32>} : memref<2x25x32xf32, #tpu.memory_space<vmem>>, vector<1x4x32xf32>,
    %c12 = arith.constant 12 : index
    %c0_44 = arith.constant 0 : index
    %53 = vector.load %arg15[%c12, %c0_44] : memref<128x32xf32, #tpu.memory_space<vmem>>, vector<4x32xf32>
    %c0_45 = arith.constant 0 : index
    %c15 = arith.constant 15 : index
    %c0_46 = arith.constant 0 : index
    %54 = vector.load %arg19[%c0_45, %c15, %c0_46] : memref<2x25x32xf32, #tpu.memory_space<vmem>>, vector<1x4x32xf32>
    %55 = vector.shape_cast %54 : vector<1x4x32xf32> to vector<4x32xf32>
    %56 = vector.shape_cast %53 : vector<4x32xf32> to vector<1x4x32xf32>
    tpu.vector_store %arg19[%c0_45, %c15, %c0_46], %56 {strides = array<i32>} : memref<2x25x32xf32, #tpu.memory_space<vmem>>, vector<1x4x32xf32>,
    %c16 = arith.constant 16 : index
    %c0_47 = arith.constant 0 : index
    %57 = vector.load %arg15[%c16, %c0_47] : memref<128x32xf32, #tpu.memory_space<vmem>>, vector<4x32xf32>
    %c1 = arith.constant 1 : index
    %c0_48 = arith.constant 0 : index
    %c0_49 = arith.constant 0 : index
    %58 = vector.load %arg19[%c1, %c0_48, %c0_49] : memref<2x25x32xf32, #tpu.memory_space<vmem>>, vector<1x4x32xf32>
    %59 = vector.shape_cast %58 : vector<1x4x32xf32> to vector<4x32xf32>
    %60 = vector.shape_cast %57 : vector<4x32xf32> to vector<1x4x32xf32>
    tpu.vector_store %arg19[%c1, %c0_48, %c0_49], %60 {strides = array<i32>} : memref<2x25x32xf32, #tpu.memory_space<vmem>>, vector<1x4x32xf32>,
    %c20 = arith.constant 20 : index
    %c0_50 = arith.constant 0 : index
    %61 = vector.load %arg15[%c20, %c0_50] : memref<128x32xf32, #tpu.memory_space<vmem>>, vector<4x32xf32>
    %c1_51 = arith.constant 1 : index
    %c5_52 = arith.constant 5 : index
    %c0_53 = arith.constant 0 : index
    %62 = vector.load %arg19[%c1_51, %c5_52, %c0_53] : memref<2x25x32xf32, #tpu.memory_space<vmem>>, vector<1x4x32xf32>
    %63 = vector.shape_cast %62 : vector<1x4x32xf32> to vector<4x32xf32>
    %64 = vector.shape_cast %61 : vector<4x32xf32> to vector<1x4x32xf32>
    tpu.vector_store %arg19[%c1_51, %c5_52, %c0_53], %64 {strides = array<i32>} : memref<2x25x32xf32, #tpu.memory_space<vmem>>, vector<1x4x32xf32>,
    %c24 = arith.constant 24 : index
    %c0_54 = arith.constant 0 : index
    %65 = vector.load %arg15[%c24, %c0_54] : memref<128x32xf32, #tpu.memory_space<vmem>>, vector<4x32xf32>
    %c1_55 = arith.constant 1 : index
    %c10_56 = arith.constant 10 : index
    %c0_57 = arith.constant 0 : index
    %66 = vector.load %arg19[%c1_55, %c10_56, %c0_57] : memref<2x25x32xf32, #tpu.memory_space<vmem>>, vector<1x4x32xf32>
    %67 = vector.shape_cast %66 : vector<1x4x32xf32> to vector<4x32xf32>
    %68 = vector.shape_cast %65 : vector<4x32xf32> to vector<1x4x32xf32>
    tpu.vector_store %arg19[%c1_55, %c10_56, %c0_57], %68 {strides = array<i32>} : memref<2x25x32xf32, #tpu.memory_space<vmem>>, vector<1x4x32xf32>,
    %c28 = arith.constant 28 : index
    %c0_58 = arith.constant 0 : index
    %69 = vector.load %arg15[%c28, %c0_58] : memref<128x32xf32, #tpu.memory_space<vmem>>, vector<4x32xf32>
    %c1_59 = arith.constant 1 : index
    %c15_60 = arith.constant 15 : index
    %c0_61 = arith.constant 0 : index
    %70 = vector.load %arg19[%c1_59, %c15_60, %c0_61] : memref<2x25x32xf32, #tpu.memory_space<vmem>>, vector<1x4x32xf32>
    %71 = vector.shape_cast %70 : vector<1x4x32xf32> to vector<4x32xf32>
    %72 = vector.shape_cast %69 : vector<4x32xf32> to vector<1x4x32xf32>
    tpu.vector_store %arg19[%c1_59, %c15_60, %c0_61], %72 {strides = array<i32>} : memref<2x25x32xf32, #tpu.memory_space<vmem>>, vector<1x4x32xf32>,
    %c32 = arith.constant 32 : index
    %c0_62 = arith.constant 0 : index
    %73 = vector.load %arg15[%c32, %c0_62] : memref<128x32xf32, #tpu.memory_space<vmem>>, vector<4x32xf32>
    %c0_63 = arith.constant 0 : index
    %c1_64 = arith.constant 1 : index
    %c0_65 = arith.constant 0 : index
    %74 = vector.load %arg18[%c0_63, %c1_64, %c0_65] : memref<2x25x32xf32, #tpu.memory_space<vmem>>, vector<1x4x32xf32>
    %75 = vector.shape_cast %74 : vector<1x4x32xf32> to vector<4x32xf32>
    %76 = vector.shape_cast %73 : vector<4x32xf32> to vector<1x4x32xf32>
    tpu.vector_store %arg18[%c0_63, %c1_64, %c0_65], %76 {strides = array<i32>} : memref<2x25x32xf32, #tpu.memory_space<vmem>>, vector<1x4x32xf32>,
    %c36 = arith.constant 36 : index
    %c0_66 = arith.constant 0 : index
    %77 = vector.load %arg15[%c36, %c0_66] : memref<128x32xf32, #tpu.memory_space<vmem>>, vector<4x32xf32>
    %c0_67 = arith.constant 0 : index
    %c6 = arith.constant 6 : index
    %c0_68 = arith.constant 0 : index
    %78 = vector.load %arg18[%c0_67, %c6, %c0_68] : memref<2x25x32xf32, #tpu.memory_space<vmem>>, vector<1x4x32xf32>
    %79 = vector.shape_cast %78 : vector<1x4x32xf32> to vector<4x32xf32>
    %80 = vector.shape_cast %77 : vector<4x32xf32> to vector<1x4x32xf32>
    tpu.vector_store %arg18[%c0_67, %c6, %c0_68], %80 {strides = array<i32>} : memref<2x25x32xf32, #tpu.memory_space<vmem>>, vector<1x4x32xf32>,
    %c40 = arith.constant 40 : index
    %c0_69 = arith.constant 0 : index
    %81 = vector.load %arg15[%c40, %c0_69] : memref<128x32xf32, #tpu.memory_space<vmem>>, vector<4x32xf32>
    %c0_70 = arith.constant 0 : index
    %c11 = arith.constant 11 : index
    %c0_71 = arith.constant 0 : index
    %82 = vector.load %arg18[%c0_70, %c11, %c0_71] : memref<2x25x32xf32, #tpu.memory_space<vmem>>, vector<1x4x32xf32>
    %83 = vector.shape_cast %82 : vector<1x4x32xf32> to vector<4x32xf32>
    %84 = vector.shape_cast %81 : vector<4x32xf32> to vector<1x4x32xf32>
    tpu.vector_store %arg18[%c0_70, %c11, %c0_71], %84 {strides = array<i32>} : memref<2x25x32xf32, #tpu.memory_space<vmem>>, vector<1x4x32xf32>,
    %c44 = arith.constant 44 : index
    %c0_72 = arith.constant 0 : index
    %85 = vector.load %arg15[%c44, %c0_72] : memref<128x32xf32, #tpu.memory_space<vmem>>, vector<4x32xf32>
    %c0_73 = arith.constant 0 : index
    %c16_74 = arith.constant 16 : index
    %c0_75 = arith.constant 0 : index
    %86 = vector.load %arg18[%c0_73, %c16_74, %c0_75] : memref<2x25x32xf32, #tpu.memory_space<vmem>>, vector<1x4x32xf32>
    %87 = vector.shape_cast %86 : vector<1x4x32xf32> to vector<4x32xf32>
    %88 = vector.shape_cast %85 : vector<4x32xf32> to vector<1x4x32xf32>
    tpu.vector_store %arg18[%c0_73, %c16_74, %c0_75], %88 {strides = array<i32>} : memref<2x25x32xf32, #tpu.memory_space<vmem>>, vector<1x4x32xf32>,
    %c48 = arith.constant 48 : index
    %c0_76 = arith.constant 0 : index
    %89 = vector.load %arg15[%c48, %c0_76] : memref<128x32xf32, #tpu.memory_space<vmem>>, vector<4x32xf32>
    %c1_77 = arith.constant 1 : index
    %c1_78 = arith.constant 1 : index
    %c0_79 = arith.constant 0 : index
    %90 = vector.load %arg18[%c1_77, %c1_78, %c0_79] : memref<2x25x32xf32, #tpu.memory_space<vmem>>, vector<1x4x32xf32>
    %91 = vector.shape_cast %90 : vector<1x4x32xf32> to vector<4x32xf32>
    %92 = vector.shape_cast %89 : vector<4x32xf32> to vector<1x4x32xf32>
    tpu.vector_store %arg18[%c1_77, %c1_78, %c0_79], %92 {strides = array<i32>} : memref<2x25x32xf32, #tpu.memory_space<vmem>>, vector<1x4x32xf32>,
    %c52 = arith.constant 52 : index
    %c0_80 = arith.constant 0 : index
    %93 = vector.load %arg15[%c52, %c0_80] : memref<128x32xf32, #tpu.memory_space<vmem>>, vector<4x32xf32>
    %c1_81 = arith.constant 1 : index
    %c6_82 = arith.constant 6 : index
    %c0_83 = arith.constant 0 : index
    %94 = vector.load %arg18[%c1_81, %c6_82, %c0_83] : memref<2x25x32xf32, #tpu.memory_space<vmem>>, vector<1x4x32xf32>
    %95 = vector.shape_cast %94 : vector<1x4x32xf32> to vector<4x32xf32>
    %96 = vector.shape_cast %93 : vector<4x32xf32> to vector<1x4x32xf32>
    tpu.vector_store %arg18[%c1_81, %c6_82, %c0_83], %96 {strides = array<i32>} : memref<2x25x32xf32, #tpu.memory_space<vmem>>, vector<1x4x32xf32>,
    %c56 = arith.constant 56 : index
    %c0_84 = arith.constant 0 : index
    %97 = vector.load %arg15[%c56, %c0_84] : memref<128x32xf32, #tpu.memory_space<vmem>>, vector<4x32xf32>
    %c1_85 = arith.constant 1 : index
    %c11_86 = arith.constant 11 : index
    %c0_87 = arith.constant 0 : index
    %98 = vector.load %arg18[%c1_85, %c11_86, %c0_87] : memref<2x25x32xf32, #tpu.memory_space<vmem>>, vector<1x4x32xf32>
    %99 = vector.shape_cast %98 : vector<1x4x32xf32> to vector<4x32xf32>
    %100 = vector.shape_cast %97 : vector<4x32xf32> to vector<1x4x32xf32>
    tpu.vector_store %arg18[%c1_85, %c11_86, %c0_87], %100 {strides = array<i32>} : memref<2x25x32xf32, #tpu.memory_space<vmem>>, vector<1x4x32xf32>,
    %c60 = arith.constant 60 : index
    %c0_88 = arith.constant 0 : index
    %101 = vector.load %arg15[%c60, %c0_88] : memref<128x32xf32, #tpu.memory_space<vmem>>, vector<4x32xf32>
    %c1_89 = arith.constant 1 : index
    %c16_90 = arith.constant 16 : index
    %c0_91 = arith.constant 0 : index
    %102 = vector.load %arg18[%c1_89, %c16_90, %c0_91] : memref<2x25x32xf32, #tpu.memory_space<vmem>>, vector<1x4x32xf32>
    %103 = vector.shape_cast %102 : vector<1x4x32xf32> to vector<4x32xf32>
    %104 = vector.shape_cast %101 : vector<4x32xf32> to vector<1x4x32xf32>
    tpu.vector_store %arg18[%c1_89, %c16_90, %c0_91], %104 {strides = array<i32>} : memref<2x25x32xf32, #tpu.memory_space<vmem>>, vector<1x4x32xf32>,
    %c64 = arith.constant 64 : index
    %c0_92 = arith.constant 0 : index
    %105 = vector.load %arg15[%c64, %c0_92] : memref<128x32xf32, #tpu.memory_space<vmem>>, vector<4x32xf32>
    %c0_93 = arith.constant 0 : index
    %c5_94 = arith.constant 5 : index
    %c0_95 = arith.constant 0 : index
    %106 = vector.load %arg17[%c0_93, %c5_94, %c0_95] : memref<2x25x32xf32, #tpu.memory_space<vmem>>, vector<1x4x32xf32>
    %107 = vector.shape_cast %106 : vector<1x4x32xf32> to vector<4x32xf32>
    %108 = vector.shape_cast %105 : vector<4x32xf32> to vector<1x4x32xf32>
    tpu.vector_store %arg17[%c0_93, %c5_94, %c0_95], %108 {strides = array<i32>} : memref<2x25x32xf32, #tpu.memory_space<vmem>>, vector<1x4x32xf32>,
    %c68 = arith.constant 68 : index
    %c0_96 = arith.constant 0 : index
    %109 = vector.load %arg15[%c68, %c0_96] : memref<128x32xf32, #tpu.memory_space<vmem>>, vector<4x32xf32>
    %c0_97 = arith.constant 0 : index
    %c10_98 = arith.constant 10 : index
    %c0_99 = arith.constant 0 : index
    %110 = vector.load %arg17[%c0_97, %c10_98, %c0_99] : memref<2x25x32xf32, #tpu.memory_space<vmem>>, vector<1x4x32xf32>
    %111 = vector.shape_cast %110 : vector<1x4x32xf32> to vector<4x32xf32>
    %112 = vector.shape_cast %109 : vector<4x32xf32> to vector<1x4x32xf32>
    tpu.vector_store %arg17[%c0_97, %c10_98, %c0_99], %112 {strides = array<i32>} : memref<2x25x32xf32, #tpu.memory_space<vmem>>, vector<1x4x32xf32>,
    %c72 = arith.constant 72 : index
    %c0_100 = arith.constant 0 : index
    %113 = vector.load %arg15[%c72, %c0_100] : memref<128x32xf32, #tpu.memory_space<vmem>>, vector<4x32xf32>
    %c0_101 = arith.constant 0 : index
    %c15_102 = arith.constant 15 : index
    %c0_103 = arith.constant 0 : index
    %114 = vector.load %arg17[%c0_101, %c15_102, %c0_103] : memref<2x25x32xf32, #tpu.memory_space<vmem>>, vector<1x4x32xf32>
    %115 = vector.shape_cast %114 : vector<1x4x32xf32> to vector<4x32xf32>
    %116 = vector.shape_cast %113 : vector<4x32xf32> to vector<1x4x32xf32>
    tpu.vector_store %arg17[%c0_101, %c15_102, %c0_103], %116 {strides = array<i32>} : memref<2x25x32xf32, #tpu.memory_space<vmem>>, vector<1x4x32xf32>,
    %c76 = arith.constant 76 : index
    %c0_104 = arith.constant 0 : index
    %117 = vector.load %arg15[%c76, %c0_104] : memref<128x32xf32, #tpu.memory_space<vmem>>, vector<4x32xf32>
    %c0_105 = arith.constant 0 : index
    %c20_106 = arith.constant 20 : index
    %c0_107 = arith.constant 0 : index
    %118 = vector.load %arg17[%c0_105, %c20_106, %c0_107] : memref<2x25x32xf32, #tpu.memory_space<vmem>>, vector<1x4x32xf32>
    %119 = vector.shape_cast %118 : vector<1x4x32xf32> to vector<4x32xf32>
    %120 = vector.shape_cast %117 : vector<4x32xf32> to vector<1x4x32xf32>
    tpu.vector_store %arg17[%c0_105, %c20_106, %c0_107], %120 {strides = array<i32>} : memref<2x25x32xf32, #tpu.memory_space<vmem>>, vector<1x4x32xf32>,
    %c80 = arith.constant 80 : index
    %c0_108 = arith.constant 0 : index
    %121 = vector.load %arg15[%c80, %c0_108] : memref<128x32xf32, #tpu.memory_space<vmem>>, vector<4x32xf32>
    %c1_109 = arith.constant 1 : index
    %c5_110 = arith.constant 5 : index
    %c0_111 = arith.constant 0 : index
    %122 = vector.load %arg17[%c1_109, %c5_110, %c0_111] : memref<2x25x32xf32, #tpu.memory_space<vmem>>, vector<1x4x32xf32>
    %123 = vector.shape_cast %122 : vector<1x4x32xf32> to vector<4x32xf32>
    %124 = vector.shape_cast %121 : vector<4x32xf32> to vector<1x4x32xf32>
    tpu.vector_store %arg17[%c1_109, %c5_110, %c0_111], %124 {strides = array<i32>} : memref<2x25x32xf32, #tpu.memory_space<vmem>>, vector<1x4x32xf32>,
    %c84 = arith.constant 84 : index
    %c0_112 = arith.constant 0 : index
    %125 = vector.load %arg15[%c84, %c0_112] : memref<128x32xf32, #tpu.memory_space<vmem>>, vector<4x32xf32>
    %c1_113 = arith.constant 1 : index
    %c10_114 = arith.constant 10 : index
    %c0_115 = arith.constant 0 : index
    %126 = vector.load %arg17[%c1_113, %c10_114, %c0_115] : memref<2x25x32xf32, #tpu.memory_space<vmem>>, vector<1x4x32xf32>
    %127 = vector.shape_cast %126 : vector<1x4x32xf32> to vector<4x32xf32>
    %128 = vector.shape_cast %125 : vector<4x32xf32> to vector<1x4x32xf32>
    tpu.vector_store %arg17[%c1_113, %c10_114, %c0_115], %128 {strides = array<i32>} : memref<2x25x32xf32, #tpu.memory_space<vmem>>, vector<1x4x32xf32>,
    %c88 = arith.constant 88 : index
    %c0_116 = arith.constant 0 : index
    %129 = vector.load %arg15[%c88, %c0_116] : memref<128x32xf32, #tpu.memory_space<vmem>>, vector<4x32xf32>
    %c1_117 = arith.constant 1 : index
    %c15_118 = arith.constant 15 : index
    %c0_119 = arith.constant 0 : index
    %130 = vector.load %arg17[%c1_117, %c15_118, %c0_119] : memref<2x25x32xf32, #tpu.memory_space<vmem>>, vector<1x4x32xf32>
    %131 = vector.shape_cast %130 : vector<1x4x32xf32> to vector<4x32xf32>
    %132 = vector.shape_cast %129 : vector<4x32xf32> to vector<1x4x32xf32>
    tpu.vector_store %arg17[%c1_117, %c15_118, %c0_119], %132 {strides = array<i32>} : memref<2x25x32xf32, #tpu.memory_space<vmem>>, vector<1x4x32xf32>,
    %c92 = arith.constant 92 : index
    %c0_120 = arith.constant 0 : index
    %133 = vector.load %arg15[%c92, %c0_120] : memref<128x32xf32, #tpu.memory_space<vmem>>, vector<4x32xf32>
    %c1_121 = arith.constant 1 : index
    %c20_122 = arith.constant 20 : index
    %c0_123 = arith.constant 0 : index
    %134 = vector.load %arg17[%c1_121, %c20_122, %c0_123] : memref<2x25x32xf32, #tpu.memory_space<vmem>>, vector<1x4x32xf32>
    %135 = vector.shape_cast %134 : vector<1x4x32xf32> to vector<4x32xf32>
    %136 = vector.shape_cast %133 : vector<4x32xf32> to vector<1x4x32xf32>
    tpu.vector_store %arg17[%c1_121, %c20_122, %c0_123], %136 {strides = array<i32>} : memref<2x25x32xf32, #tpu.memory_space<vmem>>, vector<1x4x32xf32>,
    %c96 = arith.constant 96 : index
    %c0_124 = arith.constant 0 : index
    %137 = vector.load %arg15[%c96, %c0_124] : memref<128x32xf32, #tpu.memory_space<vmem>>, vector<4x32xf32>
    %c0_125 = arith.constant 0 : index
    %c6_126 = arith.constant 6 : index
    %c0_127 = arith.constant 0 : index
    %138 = vector.load %arg16[%c0_125, %c6_126, %c0_127] : memref<2x25x32xf32, #tpu.memory_space<vmem>>, vector<1x4x32xf32>
    %139 = vector.shape_cast %138 : vector<1x4x32xf32> to vector<4x32xf32>
    %140 = vector.shape_cast %137 : vector<4x32xf32> to vector<1x4x32xf32>
    tpu.vector_store %arg16[%c0_125, %c6_126, %c0_127], %140 {strides = array<i32>} : memref<2x25x32xf32, #tpu.memory_space<vmem>>, vector<1x4x32xf32>,
    %c100 = arith.constant 100 : index
    %c0_128 = arith.constant 0 : index
    %141 = vector.load %arg15[%c100, %c0_128] : memref<128x32xf32, #tpu.memory_space<vmem>>, vector<4x32xf32>
    %c0_129 = arith.constant 0 : index
    %c11_130 = arith.constant 11 : index
    %c0_131 = arith.constant 0 : index
    %142 = vector.load %arg16[%c0_129, %c11_130, %c0_131] : memref<2x25x32xf32, #tpu.memory_space<vmem>>, vector<1x4x32xf32>
    %143 = vector.shape_cast %142 : vector<1x4x32xf32> to vector<4x32xf32>
    %144 = vector.shape_cast %141 : vector<4x32xf32> to vector<1x4x32xf32>
    tpu.vector_store %arg16[%c0_129, %c11_130, %c0_131], %144 {strides = array<i32>} : memref<2x25x32xf32, #tpu.memory_space<vmem>>, vector<1x4x32xf32>,
    %c104 = arith.constant 104 : index
    %c0_132 = arith.constant 0 : index
    %145 = vector.load %arg15[%c104, %c0_132] : memref<128x32xf32, #tpu.memory_space<vmem>>, vector<4x32xf32>
    %c0_133 = arith.constant 0 : index
    %c16_134 = arith.constant 16 : index
    %c0_135 = arith.constant 0 : index
    %146 = vector.load %arg16[%c0_133, %c16_134, %c0_135] : memref<2x25x32xf32, #tpu.memory_space<vmem>>, vector<1x4x32xf32>
    %147 = vector.shape_cast %146 : vector<1x4x32xf32> to vector<4x32xf32>
    %148 = vector.shape_cast %145 : vector<4x32xf32> to vector<1x4x32xf32>
    tpu.vector_store %arg16[%c0_133, %c16_134, %c0_135], %148 {strides = array<i32>} : memref<2x25x32xf32, #tpu.memory_space<vmem>>, vector<1x4x32xf32>,
    %c108 = arith.constant 108 : index
    %c0_136 = arith.constant 0 : index
    %149 = vector.load %arg15[%c108, %c0_136] : memref<128x32xf32, #tpu.memory_space<vmem>>, vector<4x32xf32>
    %c0_137 = arith.constant 0 : index
    %c21 = arith.constant 21 : index
    %c0_138 = arith.constant 0 : index
    %150 = vector.load %arg16[%c0_137, %c21, %c0_138] : memref<2x25x32xf32, #tpu.memory_space<vmem>>, vector<1x4x32xf32>
    %151 = vector.shape_cast %150 : vector<1x4x32xf32> to vector<4x32xf32>
    %152 = vector.shape_cast %149 : vector<4x32xf32> to vector<1x4x32xf32>
    tpu.vector_store %arg16[%c0_137, %c21, %c0_138], %152 {strides = array<i32>} : memref<2x25x32xf32, #tpu.memory_space<vmem>>, vector<1x4x32xf32>,
    %c112 = arith.constant 112 : index
    %c0_139 = arith.constant 0 : index
    %153 = vector.load %arg15[%c112, %c0_139] : memref<128x32xf32, #tpu.memory_space<vmem>>, vector<4x32xf32>
    %c1_140 = arith.constant 1 : index
    %c6_141 = arith.constant 6 : index
    %c0_142 = arith.constant 0 : index
    %154 = vector.load %arg16[%c1_140, %c6_141, %c0_142] : memref<2x25x32xf32, #tpu.memory_space<vmem>>, vector<1x4x32xf32>
    %155 = vector.shape_cast %154 : vector<1x4x32xf32> to vector<4x32xf32>
    %156 = vector.shape_cast %153 : vector<4x32xf32> to vector<1x4x32xf32>
    tpu.vector_store %arg16[%c1_140, %c6_141, %c0_142], %156 {strides = array<i32>} : memref<2x25x32xf32, #tpu.memory_space<vmem>>, vector<1x4x32xf32>,
    %c116 = arith.constant 116 : index
    %c0_143 = arith.constant 0 : index
    %157 = vector.load %arg15[%c116, %c0_143] : memref<128x32xf32, #tpu.memory_space<vmem>>, vector<4x32xf32>
    %c1_144 = arith.constant 1 : index
    %c11_145 = arith.constant 11 : index
    %c0_146 = arith.constant 0 : index
    %158 = vector.load %arg16[%c1_144, %c11_145, %c0_146] : memref<2x25x32xf32, #tpu.memory_space<vmem>>, vector<1x4x32xf32>
    %159 = vector.shape_cast %158 : vector<1x4x32xf32> to vector<4x32xf32>
    %160 = vector.shape_cast %157 : vector<4x32xf32> to vector<1x4x32xf32>
    tpu.vector_store %arg16[%c1_144, %c11_145, %c0_146], %160 {strides = array<i32>} : memref<2x25x32xf32, #tpu.memory_space<vmem>>, vector<1x4x32xf32>,
    %c120 = arith.constant 120 : index
    %c0_147 = arith.constant 0 : index
    %161 = vector.load %arg15[%c120, %c0_147] : memref<128x32xf32, #tpu.memory_space<vmem>>, vector<4x32xf32>
    %c1_148 = arith.constant 1 : index
    %c16_149 = arith.constant 16 : index
    %c0_150 = arith.constant 0 : index
    %162 = vector.load %arg16[%c1_148, %c16_149, %c0_150] : memref<2x25x32xf32, #tpu.memory_space<vmem>>, vector<1x4x32xf32>
    %163 = vector.shape_cast %162 : vector<1x4x32xf32> to vector<4x32xf32>
    %164 = vector.shape_cast %161 : vector<4x32xf32> to vector<1x4x32xf32>
    tpu.vector_store %arg16[%c1_148, %c16_149, %c0_150], %164 {strides = array<i32>} : memref<2x25x32xf32, #tpu.memory_space<vmem>>, vector<1x4x32xf32>,
    %c124 = arith.constant 124 : index
    %c0_151 = arith.constant 0 : index
    %165 = vector.load %arg15[%c124, %c0_151] : memref<128x32xf32, #tpu.memory_space<vmem>>, vector<4x32xf32>
    %c1_152 = arith.constant 1 : index
    %c21_153 = arith.constant 21 : index
    %c0_154 = arith.constant 0 : index
    %166 = vector.load %arg16[%c1_152, %c21_153, %c0_154] : memref<2x25x32xf32, #tpu.memory_space<vmem>>, vector<1x4x32xf32>
    %167 = vector.shape_cast %166 : vector<1x4x32xf32> to vector<4x32xf32>
    %168 = vector.shape_cast %165 : vector<4x32xf32> to vector<1x4x32xf32>
    tpu.vector_store %arg16[%c1_152, %c21_153, %c0_154], %168 {strides = array<i32>} : memref<2x25x32xf32, #tpu.memory_space<vmem>>, vector<1x4x32xf32>,
    %c0_155 = arith.constant 0 : index
    %c0_156 = arith.constant 0 : index
    %c0_157 = arith.constant 0 : index
    %169 = vector.load %arg16[%c0_155, %c0_156, %c0_157] : memref<2x25x32xf32, #tpu.memory_space<vmem>>, vector<1x4x32xf32>
    %170 = vector.shape_cast %169 : vector<1x4x32xf32> to vector<4x32xf32>
    %c0_158 = arith.constant 0 : index
    %c0_159 = arith.constant 0 : index
    %171 = vector.load %arg20[%c0_158, %c0_159] : memref<32x288xf32, #tpu.memory_space<vmem>>, vector<4x32xf32>
    tpu.vector_store %arg20[%c0_158, %c0_159], %170 {strides = array<i32>} : memref<32x288xf32, #tpu.memory_space<vmem>>, vector<4x32xf32>,
    %c0_160 = arith.constant 0 : index
    %c5_161 = arith.constant 5 : index
    %c0_162 = arith.constant 0 : index
    %172 = vector.load %arg16[%c0_160, %c5_161, %c0_162] : memref<2x25x32xf32, #tpu.memory_space<vmem>>, vector<1x4x32xf32>
    %173 = vector.shape_cast %172 : vector<1x4x32xf32> to vector<4x32xf32>
    %c4_163 = arith.constant 4 : index
    %c0_164 = arith.constant 0 : index
    %174 = vector.load %arg20[%c4_163, %c0_164] : memref<32x288xf32, #tpu.memory_space<vmem>>, vector<4x32xf32>
    tpu.vector_store %arg20[%c4_163, %c0_164], %173 {strides = array<i32>} : memref<32x288xf32, #tpu.memory_space<vmem>>, vector<4x32xf32>,
    %c0_165 = arith.constant 0 : index
    %c10_166 = arith.constant 10 : index
    %c0_167 = arith.constant 0 : index
    %175 = vector.load %arg16[%c0_165, %c10_166, %c0_167] : memref<2x25x32xf32, #tpu.memory_space<vmem>>, vector<1x4x32xf32>
    %176 = vector.shape_cast %175 : vector<1x4x32xf32> to vector<4x32xf32>
    %c8_168 = arith.constant 8 : index
    %c0_169 = arith.constant 0 : index
    %177 = vector.load %arg20[%c8_168, %c0_169] : memref<32x288xf32, #tpu.memory_space<vmem>>, vector<4x32xf32>
    tpu.vector_store %arg20[%c8_168, %c0_169], %176 {strides = array<i32>} : memref<32x288xf32, #tpu.memory_space<vmem>>, vector<4x32xf32>,
    %c0_170 = arith.constant 0 : index
    %c15_171 = arith.constant 15 : index
    %c0_172 = arith.constant 0 : index
    %178 = vector.load %arg16[%c0_170, %c15_171, %c0_172] : memref<2x25x32xf32, #tpu.memory_space<vmem>>, vector<1x4x32xf32>
    %179 = vector.shape_cast %178 : vector<1x4x32xf32> to vector<4x32xf32>
    %c12_173 = arith.constant 12 : index
    %c0_174 = arith.constant 0 : index
    %180 = vector.load %arg20[%c12_173, %c0_174] : memref<32x288xf32, #tpu.memory_space<vmem>>, vector<4x32xf32>
    tpu.vector_store %arg20[%c12_173, %c0_174], %179 {strides = array<i32>} : memref<32x288xf32, #tpu.memory_space<vmem>>, vector<4x32xf32>,
    %c1_175 = arith.constant 1 : index
    %c0_176 = arith.constant 0 : index
    %c0_177 = arith.constant 0 : index
    %181 = vector.load %arg16[%c1_175, %c0_176, %c0_177] : memref<2x25x32xf32, #tpu.memory_space<vmem>>, vector<1x4x32xf32>
    %182 = vector.shape_cast %181 : vector<1x4x32xf32> to vector<4x32xf32>
    %c16_178 = arith.constant 16 : index
    %c0_179 = arith.constant 0 : index
    %183 = vector.load %arg20[%c16_178, %c0_179] : memref<32x288xf32, #tpu.memory_space<vmem>>, vector<4x32xf32>
    tpu.vector_store %arg20[%c16_178, %c0_179], %182 {strides = array<i32>} : memref<32x288xf32, #tpu.memory_space<vmem>>, vector<4x32xf32>,
    %c1_180 = arith.constant 1 : index
    %c5_181 = arith.constant 5 : index
    %c0_182 = arith.constant 0 : index
    %184 = vector.load %arg16[%c1_180, %c5_181, %c0_182] : memref<2x25x32xf32, #tpu.memory_space<vmem>>, vector<1x4x32xf32>
    %185 = vector.shape_cast %184 : vector<1x4x32xf32> to vector<4x32xf32>
    %c20_183 = arith.constant 20 : index
    %c0_184 = arith.constant 0 : index
    %186 = vector.load %arg20[%c20_183, %c0_184] : memref<32x288xf32, #tpu.memory_space<vmem>>, vector<4x32xf32>
    tpu.vector_store %arg20[%c20_183, %c0_184], %185 {strides = array<i32>} : memref<32x288xf32, #tpu.memory_space<vmem>>, vector<4x32xf32>,
    %c1_185 = arith.constant 1 : index
    %c10_186 = arith.constant 10 : index
    %c0_187 = arith.constant 0 : index
    %187 = vector.load %arg16[%c1_185, %c10_186, %c0_187] : memref<2x25x32xf32, #tpu.memory_space<vmem>>, vector<1x4x32xf32>
    %188 = vector.shape_cast %187 : vector<1x4x32xf32> to vector<4x32xf32>
    %c24_188 = arith.constant 24 : index
    %c0_189 = arith.constant 0 : index
    %189 = vector.load %arg20[%c24_188, %c0_189] : memref<32x288xf32, #tpu.memory_space<vmem>>, vector<4x32xf32>
    tpu.vector_store %arg20[%c24_188, %c0_189], %188 {strides = array<i32>} : memref<32x288xf32, #tpu.memory_space<vmem>>, vector<4x32xf32>,
    %c1_190 = arith.constant 1 : index
    %c15_191 = arith.constant 15 : index
    %c0_192 = arith.constant 0 : index
    %190 = vector.load %arg16[%c1_190, %c15_191, %c0_192] : memref<2x25x32xf32, #tpu.memory_space<vmem>>, vector<1x4x32xf32>
    %191 = vector.shape_cast %190 : vector<1x4x32xf32> to vector<4x32xf32>
    %c28_193 = arith.constant 28 : index
    %c0_194 = arith.constant 0 : index
    %192 = vector.load %arg20[%c28_193, %c0_194] : memref<32x288xf32, #tpu.memory_space<vmem>>, vector<4x32xf32>
    tpu.vector_store %arg20[%c28_193, %c0_194], %191 {strides = array<i32>} : memref<32x288xf32, #tpu.memory_space<vmem>>, vector<4x32xf32>,
    %c0_195 = arith.constant 0 : index
    %c0_196 = arith.constant 0 : index
    %c0_197 = arith.constant 0 : index
    %193 = vector.load %arg17[%c0_195, %c0_196, %c0_197] : memref<2x25x32xf32, #tpu.memory_space<vmem>>, vector<1x4x32xf32>
    %194 = vector.shape_cast %193 : vector<1x4x32xf32> to vector<4x32xf32>
    %c0_198 = arith.constant 0 : index
    %c32_199 = arith.constant 32 : index
    %195 = vector.load %arg20[%c0_198, %c32_199] : memref<32x288xf32, #tpu.memory_space<vmem>>, vector<4x32xf32>
    tpu.vector_store %arg20[%c0_198, %c32_199], %194 {strides = array<i32>} : memref<32x288xf32, #tpu.memory_space<vmem>>, vector<4x32xf32>,
    %c0_200 = arith.constant 0 : index
    %c5_201 = arith.constant 5 : index
    %c0_202 = arith.constant 0 : index
    %196 = vector.load %arg17[%c0_200, %c5_201, %c0_202] : memref<2x25x32xf32, #tpu.memory_space<vmem>>, vector<1x4x32xf32>
    %197 = vector.shape_cast %196 : vector<1x4x32xf32> to vector<4x32xf32>
    %c4_203 = arith.constant 4 : index
    %c32_204 = arith.constant 32 : index
    %198 = vector.load %arg20[%c4_203, %c32_204] : memref<32x288xf32, #tpu.memory_space<vmem>>, vector<4x32xf32>
    tpu.vector_store %arg20[%c4_203, %c32_204], %197 {strides = array<i32>} : memref<32x288xf32, #tpu.memory_space<vmem>>, vector<4x32xf32>,
    %c0_205 = arith.constant 0 : index
    %c10_206 = arith.constant 10 : index
    %c0_207 = arith.constant 0 : index
    %199 = vector.load %arg17[%c0_205, %c10_206, %c0_207] : memref<2x25x32xf32, #tpu.memory_space<vmem>>, vector<1x4x32xf32>
    %200 = vector.shape_cast %199 : vector<1x4x32xf32> to vector<4x32xf32>
    %c8_208 = arith.constant 8 : index
    %c32_209 = arith.constant 32 : index
    %201 = vector.load %arg20[%c8_208, %c32_209] : memref<32x288xf32, #tpu.memory_space<vmem>>, vector<4x32xf32>
    tpu.vector_store %arg20[%c8_208, %c32_209], %200 {strides = array<i32>} : memref<32x288xf32, #tpu.memory_space<vmem>>, vector<4x32xf32>,
    %c0_210 = arith.constant 0 : index
    %c15_211 = arith.constant 15 : index
    %c0_212 = arith.constant 0 : index
    %202 = vector.load %arg17[%c0_210, %c15_211, %c0_212] : memref<2x25x32xf32, #tpu.memory_space<vmem>>, vector<1x4x32xf32>
    %203 = vector.shape_cast %202 : vector<1x4x32xf32> to vector<4x32xf32>
    %c12_213 = arith.constant 12 : index
    %c32_214 = arith.constant 32 : index
    %204 = vector.load %arg20[%c12_213, %c32_214] : memref<32x288xf32, #tpu.memory_space<vmem>>, vector<4x32xf32>
    tpu.vector_store %arg20[%c12_213, %c32_214], %203 {strides = array<i32>} : memref<32x288xf32, #tpu.memory_space<vmem>>, vector<4x32xf32>,
    %c1_215 = arith.constant 1 : index
    %c0_216 = arith.constant 0 : index
    %c0_217 = arith.constant 0 : index
    %205 = vector.load %arg17[%c1_215, %c0_216, %c0_217] : memref<2x25x32xf32, #tpu.memory_space<vmem>>, vector<1x4x32xf32>
    %206 = vector.shape_cast %205 : vector<1x4x32xf32> to vector<4x32xf32>
    %c16_218 = arith.constant 16 : index
    %c32_219 = arith.constant 32 : index
    %207 = vector.load %arg20[%c16_218, %c32_219] : memref<32x288xf32, #tpu.memory_space<vmem>>, vector<4x32xf32>
    tpu.vector_store %arg20[%c16_218, %c32_219], %206 {strides = array<i32>} : memref<32x288xf32, #tpu.memory_space<vmem>>, vector<4x32xf32>,
    %c1_220 = arith.constant 1 : index
    %c5_221 = arith.constant 5 : index
    %c0_222 = arith.constant 0 : index
    %208 = vector.load %arg17[%c1_220, %c5_221, %c0_222] : memref<2x25x32xf32, #tpu.memory_space<vmem>>, vector<1x4x32xf32>
    %209 = vector.shape_cast %208 : vector<1x4x32xf32> to vector<4x32xf32>
    %c20_223 = arith.constant 20 : index
    %c32_224 = arith.constant 32 : index
    %210 = vector.load %arg20[%c20_223, %c32_224] : memref<32x288xf32, #tpu.memory_space<vmem>>, vector<4x32xf32>
    tpu.vector_store %arg20[%c20_223, %c32_224], %209 {strides = array<i32>} : memref<32x288xf32, #tpu.memory_space<vmem>>, vector<4x32xf32>,
    %c1_225 = arith.constant 1 : index
    %c10_226 = arith.constant 10 : index
    %c0_227 = arith.constant 0 : index
    %211 = vector.load %arg17[%c1_225, %c10_226, %c0_227] : memref<2x25x32xf32, #tpu.memory_space<vmem>>, vector<1x4x32xf32>
    %212 = vector.shape_cast %211 : vector<1x4x32xf32> to vector<4x32xf32>
    %c24_228 = arith.constant 24 : index
    %c32_229 = arith.constant 32 : index
    %213 = vector.load %arg20[%c24_228, %c32_229] : memref<32x288xf32, #tpu.memory_space<vmem>>, vector<4x32xf32>
    tpu.vector_store %arg20[%c24_228, %c32_229], %212 {strides = array<i32>} : memref<32x288xf32, #tpu.memory_space<vmem>>, vector<4x32xf32>,
    %c1_230 = arith.constant 1 : index
    %c15_231 = arith.constant 15 : index
    %c0_232 = arith.constant 0 : index
    %214 = vector.load %arg17[%c1_230, %c15_231, %c0_232] : memref<2x25x32xf32, #tpu.memory_space<vmem>>, vector<1x4x32xf32>
    %215 = vector.shape_cast %214 : vector<1x4x32xf32> to vector<4x32xf32>
    %c28_233 = arith.constant 28 : index
    %c32_234 = arith.constant 32 : index
    %216 = vector.load %arg20[%c28_233, %c32_234] : memref<32x288xf32, #tpu.memory_space<vmem>>, vector<4x32xf32>
    tpu.vector_store %arg20[%c28_233, %c32_234], %215 {strides = array<i32>} : memref<32x288xf32, #tpu.memory_space<vmem>>, vector<4x32xf32>,
    %c0_235 = arith.constant 0 : index
    %c1_236 = arith.constant 1 : index
    %c0_237 = arith.constant 0 : index
    %217 = vector.load %arg16[%c0_235, %c1_236, %c0_237] : memref<2x25x32xf32, #tpu.memory_space<vmem>>, vector<1x4x32xf32>
    %218 = vector.shape_cast %217 : vector<1x4x32xf32> to vector<4x32xf32>
    %c0_238 = arith.constant 0 : index
    %c64_239 = arith.constant 64 : index
    %219 = vector.load %arg20[%c0_238, %c64_239] : memref<32x288xf32, #tpu.memory_space<vmem>>, vector<4x32xf32>
    tpu.vector_store %arg20[%c0_238, %c64_239], %218 {strides = array<i32>} : memref<32x288xf32, #tpu.memory_space<vmem>>, vector<4x32xf32>,
    %c0_240 = arith.constant 0 : index
    %c6_241 = arith.constant 6 : index
    %c0_242 = arith.constant 0 : index
    %220 = vector.load %arg16[%c0_240, %c6_241, %c0_242] : memref<2x25x32xf32, #tpu.memory_space<vmem>>, vector<1x4x32xf32>
    %221 = vector.shape_cast %220 : vector<1x4x32xf32> to vector<4x32xf32>
    %c4_243 = arith.constant 4 : index
    %c64_244 = arith.constant 64 : index
    %222 = vector.load %arg20[%c4_243, %c64_244] : memref<32x288xf32, #tpu.memory_space<vmem>>, vector<4x32xf32>
    tpu.vector_store %arg20[%c4_243, %c64_244], %221 {strides = array<i32>} : memref<32x288xf32, #tpu.memory_space<vmem>>, vector<4x32xf32>,
    %c0_245 = arith.constant 0 : index
    %c11_246 = arith.constant 11 : index
    %c0_247 = arith.constant 0 : index
    %223 = vector.load %arg16[%c0_245, %c11_246, %c0_247] : memref<2x25x32xf32, #tpu.memory_space<vmem>>, vector<1x4x32xf32>
    %224 = vector.shape_cast %223 : vector<1x4x32xf32> to vector<4x32xf32>
    %c8_248 = arith.constant 8 : index
    %c64_249 = arith.constant 64 : index
    %225 = vector.load %arg20[%c8_248, %c64_249] : memref<32x288xf32, #tpu.memory_space<vmem>>, vector<4x32xf32>
    tpu.vector_store %arg20[%c8_248, %c64_249], %224 {strides = array<i32>} : memref<32x288xf32, #tpu.memory_space<vmem>>, vector<4x32xf32>,
    %c0_250 = arith.constant 0 : index
    %c16_251 = arith.constant 16 : index
    %c0_252 = arith.constant 0 : index
    %226 = vector.load %arg16[%c0_250, %c16_251, %c0_252] : memref<2x25x32xf32, #tpu.memory_space<vmem>>, vector<1x4x32xf32>
    %227 = vector.shape_cast %226 : vector<1x4x32xf32> to vector<4x32xf32>
    %c12_253 = arith.constant 12 : index
    %c64_254 = arith.constant 64 : index
    %228 = vector.load %arg20[%c12_253, %c64_254] : memref<32x288xf32, #tpu.memory_space<vmem>>, vector<4x32xf32>
    tpu.vector_store %arg20[%c12_253, %c64_254], %227 {strides = array<i32>} : memref<32x288xf32, #tpu.memory_space<vmem>>, vector<4x32xf32>,
    %c1_255 = arith.constant 1 : index
    %c1_256 = arith.constant 1 : index
    %c0_257 = arith.constant 0 : index
    %229 = vector.load %arg16[%c1_255, %c1_256, %c0_257] : memref<2x25x32xf32, #tpu.memory_space<vmem>>, vector<1x4x32xf32>
    %230 = vector.shape_cast %229 : vector<1x4x32xf32> to vector<4x32xf32>
    %c16_258 = arith.constant 16 : index
    %c64_259 = arith.constant 64 : index
    %231 = vector.load %arg20[%c16_258, %c64_259] : memref<32x288xf32, #tpu.memory_space<vmem>>, vector<4x32xf32>
    tpu.vector_store %arg20[%c16_258, %c64_259], %230 {strides = array<i32>} : memref<32x288xf32, #tpu.memory_space<vmem>>, vector<4x32xf32>,
    %c1_260 = arith.constant 1 : index
    %c6_261 = arith.constant 6 : index
    %c0_262 = arith.constant 0 : index
    %232 = vector.load %arg16[%c1_260, %c6_261, %c0_262] : memref<2x25x32xf32, #tpu.memory_space<vmem>>, vector<1x4x32xf32>
    %233 = vector.shape_cast %232 : vector<1x4x32xf32> to vector<4x32xf32>
    %c20_263 = arith.constant 20 : index
    %c64_264 = arith.constant 64 : index
    %234 = vector.load %arg20[%c20_263, %c64_264] : memref<32x288xf32, #tpu.memory_space<vmem>>, vector<4x32xf32>
    tpu.vector_store %arg20[%c20_263, %c64_264], %233 {strides = array<i32>} : memref<32x288xf32, #tpu.memory_space<vmem>>, vector<4x32xf32>,
    %c1_265 = arith.constant 1 : index
    %c11_266 = arith.constant 11 : index
    %c0_267 = arith.constant 0 : index
    %235 = vector.load %arg16[%c1_265, %c11_266, %c0_267] : memref<2x25x32xf32, #tpu.memory_space<vmem>>, vector<1x4x32xf32>
    %236 = vector.shape_cast %235 : vector<1x4x32xf32> to vector<4x32xf32>
    %c24_268 = arith.constant 24 : index
    %c64_269 = arith.constant 64 : index
    %237 = vector.load %arg20[%c24_268, %c64_269] : memref<32x288xf32, #tpu.memory_space<vmem>>, vector<4x32xf32>
    tpu.vector_store %arg20[%c24_268, %c64_269], %236 {strides = array<i32>} : memref<32x288xf32, #tpu.memory_space<vmem>>, vector<4x32xf32>,
    %c1_270 = arith.constant 1 : index
    %c16_271 = arith.constant 16 : index
    %c0_272 = arith.constant 0 : index
    %238 = vector.load %arg16[%c1_270, %c16_271, %c0_272] : memref<2x25x32xf32, #tpu.memory_space<vmem>>, vector<1x4x32xf32>
    %239 = vector.shape_cast %238 : vector<1x4x32xf32> to vector<4x32xf32>
    %c28_273 = arith.constant 28 : index
    %c64_274 = arith.constant 64 : index
    %240 = vector.load %arg20[%c28_273, %c64_274] : memref<32x288xf32, #tpu.memory_space<vmem>>, vector<4x32xf32>
    tpu.vector_store %arg20[%c28_273, %c64_274], %239 {strides = array<i32>} : memref<32x288xf32, #tpu.memory_space<vmem>>, vector<4x32xf32>,
    %c0_275 = arith.constant 0 : index
    %c0_276 = arith.constant 0 : index
    %c0_277 = arith.constant 0 : index
    %241 = vector.load %arg18[%c0_275, %c0_276, %c0_277] : memref<2x25x32xf32, #tpu.memory_space<vmem>>, vector<1x4x32xf32>
    %242 = vector.shape_cast %241 : vector<1x4x32xf32> to vector<4x32xf32>
    %c0_278 = arith.constant 0 : index
    %c96_279 = arith.constant 96 : index
    %243 = vector.load %arg20[%c0_278, %c96_279] : memref<32x288xf32, #tpu.memory_space<vmem>>, vector<4x32xf32>
    tpu.vector_store %arg20[%c0_278, %c96_279], %242 {strides = array<i32>} : memref<32x288xf32, #tpu.memory_space<vmem>>, vector<4x32xf32>,
    %c0_280 = arith.constant 0 : index
    %c5_281 = arith.constant 5 : index
    %c0_282 = arith.constant 0 : index
    %244 = vector.load %arg18[%c0_280, %c5_281, %c0_282] : memref<2x25x32xf32, #tpu.memory_space<vmem>>, vector<1x4x32xf32>
    %245 = vector.shape_cast %244 : vector<1x4x32xf32> to vector<4x32xf32>
    %c4_283 = arith.constant 4 : index
    %c96_284 = arith.constant 96 : index
    %246 = vector.load %arg20[%c4_283, %c96_284] : memref<32x288xf32, #tpu.memory_space<vmem>>, vector<4x32xf32>
    tpu.vector_store %arg20[%c4_283, %c96_284], %245 {strides = array<i32>} : memref<32x288xf32, #tpu.memory_space<vmem>>, vector<4x32xf32>,
    %c0_285 = arith.constant 0 : index
    %c10_286 = arith.constant 10 : index
    %c0_287 = arith.constant 0 : index
    %247 = vector.load %arg18[%c0_285, %c10_286, %c0_287] : memref<2x25x32xf32, #tpu.memory_space<vmem>>, vector<1x4x32xf32>
    %248 = vector.shape_cast %247 : vector<1x4x32xf32> to vector<4x32xf32>
    %c8_288 = arith.constant 8 : index
    %c96_289 = arith.constant 96 : index
    %249 = vector.load %arg20[%c8_288, %c96_289] : memref<32x288xf32, #tpu.memory_space<vmem>>, vector<4x32xf32>
    tpu.vector_store %arg20[%c8_288, %c96_289], %248 {strides = array<i32>} : memref<32x288xf32, #tpu.memory_space<vmem>>, vector<4x32xf32>,
    %c0_290 = arith.constant 0 : index
    %c15_291 = arith.constant 15 : index
    %c0_292 = arith.constant 0 : index
    %250 = vector.load %arg18[%c0_290, %c15_291, %c0_292] : memref<2x25x32xf32, #tpu.memory_space<vmem>>, vector<1x4x32xf32>
    %251 = vector.shape_cast %250 : vector<1x4x32xf32> to vector<4x32xf32>
    %c12_293 = arith.constant 12 : index
    %c96_294 = arith.constant 96 : index
    %252 = vector.load %arg20[%c12_293, %c96_294] : memref<32x288xf32, #tpu.memory_space<vmem>>, vector<4x32xf32>
    tpu.vector_store %arg20[%c12_293, %c96_294], %251 {strides = array<i32>} : memref<32x288xf32, #tpu.memory_space<vmem>>, vector<4x32xf32>,
    %c1_295 = arith.constant 1 : index
    %c0_296 = arith.constant 0 : index
    %c0_297 = arith.constant 0 : index
    %253 = vector.load %arg18[%c1_295, %c0_296, %c0_297] : memref<2x25x32xf32, #tpu.memory_space<vmem>>, vector<1x4x32xf32>
    %254 = vector.shape_cast %253 : vector<1x4x32xf32> to vector<4x32xf32>
    %c16_298 = arith.constant 16 : index
    %c96_299 = arith.constant 96 : index
    %255 = vector.load %arg20[%c16_298, %c96_299] : memref<32x288xf32, #tpu.memory_space<vmem>>, vector<4x32xf32>
    tpu.vector_store %arg20[%c16_298, %c96_299], %254 {strides = array<i32>} : memref<32x288xf32, #tpu.memory_space<vmem>>, vector<4x32xf32>,
    %c1_300 = arith.constant 1 : index
    %c5_301 = arith.constant 5 : index
    %c0_302 = arith.constant 0 : index
    %256 = vector.load %arg18[%c1_300, %c5_301, %c0_302] : memref<2x25x32xf32, #tpu.memory_space<vmem>>, vector<1x4x32xf32>
    %257 = vector.shape_cast %256 : vector<1x4x32xf32> to vector<4x32xf32>
    %c20_303 = arith.constant 20 : index
    %c96_304 = arith.constant 96 : index
    %258 = vector.load %arg20[%c20_303, %c96_304] : memref<32x288xf32, #tpu.memory_space<vmem>>, vector<4x32xf32>
    tpu.vector_store %arg20[%c20_303, %c96_304], %257 {strides = array<i32>} : memref<32x288xf32, #tpu.memory_space<vmem>>, vector<4x32xf32>,
    %c1_305 = arith.constant 1 : index
    %c10_306 = arith.constant 10 : index
    %c0_307 = arith.constant 0 : index
    %259 = vector.load %arg18[%c1_305, %c10_306, %c0_307] : memref<2x25x32xf32, #tpu.memory_space<vmem>>, vector<1x4x32xf32>
    %260 = vector.shape_cast %259 : vector<1x4x32xf32> to vector<4x32xf32>
    %c24_308 = arith.constant 24 : index
    %c96_309 = arith.constant 96 : index
    %261 = vector.load %arg20[%c24_308, %c96_309] : memref<32x288xf32, #tpu.memory_space<vmem>>, vector<4x32xf32>
    tpu.vector_store %arg20[%c24_308, %c96_309], %260 {strides = array<i32>} : memref<32x288xf32, #tpu.memory_space<vmem>>, vector<4x32xf32>,
    %c1_310 = arith.constant 1 : index
    %c15_311 = arith.constant 15 : index
    %c0_312 = arith.constant 0 : index
    %262 = vector.load %arg18[%c1_310, %c15_311, %c0_312] : memref<2x25x32xf32, #tpu.memory_space<vmem>>, vector<1x4x32xf32>
    %263 = vector.shape_cast %262 : vector<1x4x32xf32> to vector<4x32xf32>
    %c28_313 = arith.constant 28 : index
    %c96_314 = arith.constant 96 : index
    %264 = vector.load %arg20[%c28_313, %c96_314] : memref<32x288xf32, #tpu.memory_space<vmem>>, vector<4x32xf32>
    tpu.vector_store %arg20[%c28_313, %c96_314], %263 {strides = array<i32>} : memref<32x288xf32, #tpu.memory_space<vmem>>, vector<4x32xf32>,
    %c0_315 = arith.constant 0 : index
    %c0_316 = arith.constant 0 : index
    %c0_317 = arith.constant 0 : index
    %265 = vector.load %arg19[%c0_315, %c0_316, %c0_317] : memref<2x25x32xf32, #tpu.memory_space<vmem>>, vector<1x4x32xf32>
    %266 = vector.shape_cast %265 : vector<1x4x32xf32> to vector<4x32xf32>
    %c0_318 = arith.constant 0 : index
    %c128 = arith.constant 128 : index
    %267 = vector.load %arg20[%c0_318, %c128] : memref<32x288xf32, #tpu.memory_space<vmem>>, vector<4x32xf32>
    tpu.vector_store %arg20[%c0_318, %c128], %266 {strides = array<i32>} : memref<32x288xf32, #tpu.memory_space<vmem>>, vector<4x32xf32>,
    %c0_319 = arith.constant 0 : index
    %c5_320 = arith.constant 5 : index
    %c0_321 = arith.constant 0 : index
    %268 = vector.load %arg19[%c0_319, %c5_320, %c0_321] : memref<2x25x32xf32, #tpu.memory_space<vmem>>, vector<1x4x32xf32>
    %269 = vector.shape_cast %268 : vector<1x4x32xf32> to vector<4x32xf32>
    %c4_322 = arith.constant 4 : index
    %c128_323 = arith.constant 128 : index
    %270 = vector.load %arg20[%c4_322, %c128_323] : memref<32x288xf32, #tpu.memory_space<vmem>>, vector<4x32xf32>
    tpu.vector_store %arg20[%c4_322, %c128_323], %269 {strides = array<i32>} : memref<32x288xf32, #tpu.memory_space<vmem>>, vector<4x32xf32>,
    %c0_324 = arith.constant 0 : index
    %c10_325 = arith.constant 10 : index
    %c0_326 = arith.constant 0 : index
    %271 = vector.load %arg19[%c0_324, %c10_325, %c0_326] : memref<2x25x32xf32, #tpu.memory_space<vmem>>, vector<1x4x32xf32>
    %272 = vector.shape_cast %271 : vector<1x4x32xf32> to vector<4x32xf32>
    %c8_327 = arith.constant 8 : index
    %c128_328 = arith.constant 128 : index
    %273 = vector.load %arg20[%c8_327, %c128_328] : memref<32x288xf32, #tpu.memory_space<vmem>>, vector<4x32xf32>
    tpu.vector_store %arg20[%c8_327, %c128_328], %272 {strides = array<i32>} : memref<32x288xf32, #tpu.memory_space<vmem>>, vector<4x32xf32>,
    %c0_329 = arith.constant 0 : index
    %c15_330 = arith.constant 15 : index
    %c0_331 = arith.constant 0 : index
    %274 = vector.load %arg19[%c0_329, %c15_330, %c0_331] : memref<2x25x32xf32, #tpu.memory_space<vmem>>, vector<1x4x32xf32>
    %275 = vector.shape_cast %274 : vector<1x4x32xf32> to vector<4x32xf32>
    %c12_332 = arith.constant 12 : index
    %c128_333 = arith.constant 128 : index
    %276 = vector.load %arg20[%c12_332, %c128_333] : memref<32x288xf32, #tpu.memory_space<vmem>>, vector<4x32xf32>
    tpu.vector_store %arg20[%c12_332, %c128_333], %275 {strides = array<i32>} : memref<32x288xf32, #tpu.memory_space<vmem>>, vector<4x32xf32>,
    %c1_334 = arith.constant 1 : index
    %c0_335 = arith.constant 0 : index
    %c0_336 = arith.constant 0 : index
    %277 = vector.load %arg19[%c1_334, %c0_335, %c0_336] : memref<2x25x32xf32, #tpu.memory_space<vmem>>, vector<1x4x32xf32>
    %278 = vector.shape_cast %277 : vector<1x4x32xf32> to vector<4x32xf32>
    %c16_337 = arith.constant 16 : index
    %c128_338 = arith.constant 128 : index
    %279 = vector.load %arg20[%c16_337, %c128_338] : memref<32x288xf32, #tpu.memory_space<vmem>>, vector<4x32xf32>
    tpu.vector_store %arg20[%c16_337, %c128_338], %278 {strides = array<i32>} : memref<32x288xf32, #tpu.memory_space<vmem>>, vector<4x32xf32>,
    %c1_339 = arith.constant 1 : index
    %c5_340 = arith.constant 5 : index
    %c0_341 = arith.constant 0 : index
    %280 = vector.load %arg19[%c1_339, %c5_340, %c0_341] : memref<2x25x32xf32, #tpu.memory_space<vmem>>, vector<1x4x32xf32>
    %281 = vector.shape_cast %280 : vector<1x4x32xf32> to vector<4x32xf32>
    %c20_342 = arith.constant 20 : index
    %c128_343 = arith.constant 128 : index
    %282 = vector.load %arg20[%c20_342, %c128_343] : memref<32x288xf32, #tpu.memory_space<vmem>>, vector<4x32xf32>
    tpu.vector_store %arg20[%c20_342, %c128_343], %281 {strides = array<i32>} : memref<32x288xf32, #tpu.memory_space<vmem>>, vector<4x32xf32>,
    %c1_344 = arith.constant 1 : index
    %c10_345 = arith.constant 10 : index
    %c0_346 = arith.constant 0 : index
    %283 = vector.load %arg19[%c1_344, %c10_345, %c0_346] : memref<2x25x32xf32, #tpu.memory_space<vmem>>, vector<1x4x32xf32>
    %284 = vector.shape_cast %283 : vector<1x4x32xf32> to vector<4x32xf32>
    %c24_347 = arith.constant 24 : index
    %c128_348 = arith.constant 128 : index
    %285 = vector.load %arg20[%c24_347, %c128_348] : memref<32x288xf32, #tpu.memory_space<vmem>>, vector<4x32xf32>
    tpu.vector_store %arg20[%c24_347, %c128_348], %284 {strides = array<i32>} : memref<32x288xf32, #tpu.memory_space<vmem>>, vector<4x32xf32>,
    %c1_349 = arith.constant 1 : index
    %c15_350 = arith.constant 15 : index
    %c0_351 = arith.constant 0 : index
    %286 = vector.load %arg19[%c1_349, %c15_350, %c0_351] : memref<2x25x32xf32, #tpu.memory_space<vmem>>, vector<1x4x32xf32>
    %287 = vector.shape_cast %286 : vector<1x4x32xf32> to vector<4x32xf32>
    %c28_352 = arith.constant 28 : index
    %c128_353 = arith.constant 128 : index
    %288 = vector.load %arg20[%c28_352, %c128_353] : memref<32x288xf32, #tpu.memory_space<vmem>>, vector<4x32xf32>
    tpu.vector_store %arg20[%c28_352, %c128_353], %287 {strides = array<i32>} : memref<32x288xf32, #tpu.memory_space<vmem>>, vector<4x32xf32>,
    %c0_354 = arith.constant 0 : index
    %c1_355 = arith.constant 1 : index
    %c0_356 = arith.constant 0 : index
    %289 = vector.load %arg18[%c0_354, %c1_355, %c0_356] : memref<2x25x32xf32, #tpu.memory_space<vmem>>, vector<1x4x32xf32>
    %290 = vector.shape_cast %289 : vector<1x4x32xf32> to vector<4x32xf32>
    %c0_357 = arith.constant 0 : index
    %c160 = arith.constant 160 : index
    %291 = vector.load %arg20[%c0_357, %c160] : memref<32x288xf32, #tpu.memory_space<vmem>>, vector<4x32xf32>
    tpu.vector_store %arg20[%c0_357, %c160], %290 {strides = array<i32>} : memref<32x288xf32, #tpu.memory_space<vmem>>, vector<4x32xf32>,
    %c0_358 = arith.constant 0 : index
    %c6_359 = arith.constant 6 : index
    %c0_360 = arith.constant 0 : index
    %292 = vector.load %arg18[%c0_358, %c6_359, %c0_360] : memref<2x25x32xf32, #tpu.memory_space<vmem>>, vector<1x4x32xf32>
    %293 = vector.shape_cast %292 : vector<1x4x32xf32> to vector<4x32xf32>
    %c4_361 = arith.constant 4 : index
    %c160_362 = arith.constant 160 : index
    %294 = vector.load %arg20[%c4_361, %c160_362] : memref<32x288xf32, #tpu.memory_space<vmem>>, vector<4x32xf32>
    tpu.vector_store %arg20[%c4_361, %c160_362], %293 {strides = array<i32>} : memref<32x288xf32, #tpu.memory_space<vmem>>, vector<4x32xf32>,
    %c0_363 = arith.constant 0 : index
    %c11_364 = arith.constant 11 : index
    %c0_365 = arith.constant 0 : index
    %295 = vector.load %arg18[%c0_363, %c11_364, %c0_365] : memref<2x25x32xf32, #tpu.memory_space<vmem>>, vector<1x4x32xf32>
    %296 = vector.shape_cast %295 : vector<1x4x32xf32> to vector<4x32xf32>
    %c8_366 = arith.constant 8 : index
    %c160_367 = arith.constant 160 : index
    %297 = vector.load %arg20[%c8_366, %c160_367] : memref<32x288xf32, #tpu.memory_space<vmem>>, vector<4x32xf32>
    tpu.vector_store %arg20[%c8_366, %c160_367], %296 {strides = array<i32>} : memref<32x288xf32, #tpu.memory_space<vmem>>, vector<4x32xf32>,
    %c0_368 = arith.constant 0 : index
    %c16_369 = arith.constant 16 : index
    %c0_370 = arith.constant 0 : index
    %298 = vector.load %arg18[%c0_368, %c16_369, %c0_370] : memref<2x25x32xf32, #tpu.memory_space<vmem>>, vector<1x4x32xf32>
    %299 = vector.shape_cast %298 : vector<1x4x32xf32> to vector<4x32xf32>
    %c12_371 = arith.constant 12 : index
    %c160_372 = arith.constant 160 : index
    %300 = vector.load %arg20[%c12_371, %c160_372] : memref<32x288xf32, #tpu.memory_space<vmem>>, vector<4x32xf32>
    tpu.vector_store %arg20[%c12_371, %c160_372], %299 {strides = array<i32>} : memref<32x288xf32, #tpu.memory_space<vmem>>, vector<4x32xf32>,
    %c1_373 = arith.constant 1 : index
    %c1_374 = arith.constant 1 : index
    %c0_375 = arith.constant 0 : index
    %301 = vector.load %arg18[%c1_373, %c1_374, %c0_375] : memref<2x25x32xf32, #tpu.memory_space<vmem>>, vector<1x4x32xf32>
    %302 = vector.shape_cast %301 : vector<1x4x32xf32> to vector<4x32xf32>
    %c16_376 = arith.constant 16 : index
    %c160_377 = arith.constant 160 : index
    %303 = vector.load %arg20[%c16_376, %c160_377] : memref<32x288xf32, #tpu.memory_space<vmem>>, vector<4x32xf32>
    tpu.vector_store %arg20[%c16_376, %c160_377], %302 {strides = array<i32>} : memref<32x288xf32, #tpu.memory_space<vmem>>, vector<4x32xf32>,
    %c1_378 = arith.constant 1 : index
    %c6_379 = arith.constant 6 : index
    %c0_380 = arith.constant 0 : index
    %304 = vector.load %arg18[%c1_378, %c6_379, %c0_380] : memref<2x25x32xf32, #tpu.memory_space<vmem>>, vector<1x4x32xf32>
    %305 = vector.shape_cast %304 : vector<1x4x32xf32> to vector<4x32xf32>
    %c20_381 = arith.constant 20 : index
    %c160_382 = arith.constant 160 : index
    %306 = vector.load %arg20[%c20_381, %c160_382] : memref<32x288xf32, #tpu.memory_space<vmem>>, vector<4x32xf32>
    tpu.vector_store %arg20[%c20_381, %c160_382], %305 {strides = array<i32>} : memref<32x288xf32, #tpu.memory_space<vmem>>, vector<4x32xf32>,
    %c1_383 = arith.constant 1 : index
    %c11_384 = arith.constant 11 : index
    %c0_385 = arith.constant 0 : index
    %307 = vector.load %arg18[%c1_383, %c11_384, %c0_385] : memref<2x25x32xf32, #tpu.memory_space<vmem>>, vector<1x4x32xf32>
    %308 = vector.shape_cast %307 : vector<1x4x32xf32> to vector<4x32xf32>
    %c24_386 = arith.constant 24 : index
    %c160_387 = arith.constant 160 : index
    %309 = vector.load %arg20[%c24_386, %c160_387] : memref<32x288xf32, #tpu.memory_space<vmem>>, vector<4x32xf32>
    tpu.vector_store %arg20[%c24_386, %c160_387], %308 {strides = array<i32>} : memref<32x288xf32, #tpu.memory_space<vmem>>, vector<4x32xf32>,
    %c1_388 = arith.constant 1 : index
    %c16_389 = arith.constant 16 : index
    %c0_390 = arith.constant 0 : index
    %310 = vector.load %arg18[%c1_388, %c16_389, %c0_390] : memref<2x25x32xf32, #tpu.memory_space<vmem>>, vector<1x4x32xf32>
    %311 = vector.shape_cast %310 : vector<1x4x32xf32> to vector<4x32xf32>
    %c28_391 = arith.constant 28 : index
    %c160_392 = arith.constant 160 : index
    %312 = vector.load %arg20[%c28_391, %c160_392] : memref<32x288xf32, #tpu.memory_space<vmem>>, vector<4x32xf32>
    tpu.vector_store %arg20[%c28_391, %c160_392], %311 {strides = array<i32>} : memref<32x288xf32, #tpu.memory_space<vmem>>, vector<4x32xf32>,
    %c0_393 = arith.constant 0 : index
    %c5_394 = arith.constant 5 : index
    %c0_395 = arith.constant 0 : index
    %313 = vector.load %arg16[%c0_393, %c5_394, %c0_395] : memref<2x25x32xf32, #tpu.memory_space<vmem>>, vector<1x4x32xf32>
    %314 = vector.shape_cast %313 : vector<1x4x32xf32> to vector<4x32xf32>
    %c0_396 = arith.constant 0 : index
    %c192 = arith.constant 192 : index
    %315 = vector.load %arg20[%c0_396, %c192] : memref<32x288xf32, #tpu.memory_space<vmem>>, vector<4x32xf32>
    tpu.vector_store %arg20[%c0_396, %c192], %314 {strides = array<i32>} : memref<32x288xf32, #tpu.memory_space<vmem>>, vector<4x32xf32>,
    %c0_397 = arith.constant 0 : index
    %c10_398 = arith.constant 10 : index
    %c0_399 = arith.constant 0 : index
    %316 = vector.load %arg16[%c0_397, %c10_398, %c0_399] : memref<2x25x32xf32, #tpu.memory_space<vmem>>, vector<1x4x32xf32>
    %317 = vector.shape_cast %316 : vector<1x4x32xf32> to vector<4x32xf32>
    %c4_400 = arith.constant 4 : index
    %c192_401 = arith.constant 192 : index
    %318 = vector.load %arg20[%c4_400, %c192_401] : memref<32x288xf32, #tpu.memory_space<vmem>>, vector<4x32xf32>
    tpu.vector_store %arg20[%c4_400, %c192_401], %317 {strides = array<i32>} : memref<32x288xf32, #tpu.memory_space<vmem>>, vector<4x32xf32>,
    %c0_402 = arith.constant 0 : index
    %c15_403 = arith.constant 15 : index
    %c0_404 = arith.constant 0 : index
    %319 = vector.load %arg16[%c0_402, %c15_403, %c0_404] : memref<2x25x32xf32, #tpu.memory_space<vmem>>, vector<1x4x32xf32>
    %320 = vector.shape_cast %319 : vector<1x4x32xf32> to vector<4x32xf32>
    %c8_405 = arith.constant 8 : index
    %c192_406 = arith.constant 192 : index
    %321 = vector.load %arg20[%c8_405, %c192_406] : memref<32x288xf32, #tpu.memory_space<vmem>>, vector<4x32xf32>
    tpu.vector_store %arg20[%c8_405, %c192_406], %320 {strides = array<i32>} : memref<32x288xf32, #tpu.memory_space<vmem>>, vector<4x32xf32>,
    %c0_407 = arith.constant 0 : index
    %c20_408 = arith.constant 20 : index
    %c0_409 = arith.constant 0 : index
    %322 = vector.load %arg16[%c0_407, %c20_408, %c0_409] : memref<2x25x32xf32, #tpu.memory_space<vmem>>, vector<1x4x32xf32>
    %323 = vector.shape_cast %322 : vector<1x4x32xf32> to vector<4x32xf32>
    %c12_410 = arith.constant 12 : index
    %c192_411 = arith.constant 192 : index
    %324 = vector.load %arg20[%c12_410, %c192_411] : memref<32x288xf32, #tpu.memory_space<vmem>>, vector<4x32xf32>
    tpu.vector_store %arg20[%c12_410, %c192_411], %323 {strides = array<i32>} : memref<32x288xf32, #tpu.memory_space<vmem>>, vector<4x32xf32>,
    %c1_412 = arith.constant 1 : index
    %c5_413 = arith.constant 5 : index
    %c0_414 = arith.constant 0 : index
    %325 = vector.load %arg16[%c1_412, %c5_413, %c0_414] : memref<2x25x32xf32, #tpu.memory_space<vmem>>, vector<1x4x32xf32>
    %326 = vector.shape_cast %325 : vector<1x4x32xf32> to vector<4x32xf32>
    %c16_415 = arith.constant 16 : index
    %c192_416 = arith.constant 192 : index
    %327 = vector.load %arg20[%c16_415, %c192_416] : memref<32x288xf32, #tpu.memory_space<vmem>>, vector<4x32xf32>
    tpu.vector_store %arg20[%c16_415, %c192_416], %326 {strides = array<i32>} : memref<32x288xf32, #tpu.memory_space<vmem>>, vector<4x32xf32>,
    %c1_417 = arith.constant 1 : index
    %c10_418 = arith.constant 10 : index
    %c0_419 = arith.constant 0 : index
    %328 = vector.load %arg16[%c1_417, %c10_418, %c0_419] : memref<2x25x32xf32, #tpu.memory_space<vmem>>, vector<1x4x32xf32>
    %329 = vector.shape_cast %328 : vector<1x4x32xf32> to vector<4x32xf32>
    %c20_420 = arith.constant 20 : index
    %c192_421 = arith.constant 192 : index
    %330 = vector.load %arg20[%c20_420, %c192_421] : memref<32x288xf32, #tpu.memory_space<vmem>>, vector<4x32xf32>
    tpu.vector_store %arg20[%c20_420, %c192_421], %329 {strides = array<i32>} : memref<32x288xf32, #tpu.memory_space<vmem>>, vector<4x32xf32>,
    %c1_422 = arith.constant 1 : index
    %c15_423 = arith.constant 15 : index
    %c0_424 = arith.constant 0 : index
    %331 = vector.load %arg16[%c1_422, %c15_423, %c0_424] : memref<2x25x32xf32, #tpu.memory_space<vmem>>, vector<1x4x32xf32>
    %332 = vector.shape_cast %331 : vector<1x4x32xf32> to vector<4x32xf32>
    %c24_425 = arith.constant 24 : index
    %c192_426 = arith.constant 192 : index
    %333 = vector.load %arg20[%c24_425, %c192_426] : memref<32x288xf32, #tpu.memory_space<vmem>>, vector<4x32xf32>
    tpu.vector_store %arg20[%c24_425, %c192_426], %332 {strides = array<i32>} : memref<32x288xf32, #tpu.memory_space<vmem>>, vector<4x32xf32>,
    %c1_427 = arith.constant 1 : index
    %c20_428 = arith.constant 20 : index
    %c0_429 = arith.constant 0 : index
    %334 = vector.load %arg16[%c1_427, %c20_428, %c0_429] : memref<2x25x32xf32, #tpu.memory_space<vmem>>, vector<1x4x32xf32>
    %335 = vector.shape_cast %334 : vector<1x4x32xf32> to vector<4x32xf32>
    %c28_430 = arith.constant 28 : index
    %c192_431 = arith.constant 192 : index
    %336 = vector.load %arg20[%c28_430, %c192_431] : memref<32x288xf32, #tpu.memory_space<vmem>>, vector<4x32xf32>
    tpu.vector_store %arg20[%c28_430, %c192_431], %335 {strides = array<i32>} : memref<32x288xf32, #tpu.memory_space<vmem>>, vector<4x32xf32>,
    %c0_432 = arith.constant 0 : index
    %c5_433 = arith.constant 5 : index
    %c0_434 = arith.constant 0 : index
    %337 = vector.load %arg17[%c0_432, %c5_433, %c0_434] : memref<2x25x32xf32, #tpu.memory_space<vmem>>, vector<1x4x32xf32>
    %338 = vector.shape_cast %337 : vector<1x4x32xf32> to vector<4x32xf32>
    %c0_435 = arith.constant 0 : index
    %c224 = arith.constant 224 : index
    %339 = vector.load %arg20[%c0_435, %c224] : memref<32x288xf32, #tpu.memory_space<vmem>>, vector<4x32xf32>
    tpu.vector_store %arg20[%c0_435, %c224], %338 {strides = array<i32>} : memref<32x288xf32, #tpu.memory_space<vmem>>, vector<4x32xf32>,
    %c0_436 = arith.constant 0 : index
    %c10_437 = arith.constant 10 : index
    %c0_438 = arith.constant 0 : index
    %340 = vector.load %arg17[%c0_436, %c10_437, %c0_438] : memref<2x25x32xf32, #tpu.memory_space<vmem>>, vector<1x4x32xf32>
    %341 = vector.shape_cast %340 : vector<1x4x32xf32> to vector<4x32xf32>
    %c4_439 = arith.constant 4 : index
    %c224_440 = arith.constant 224 : index
    %342 = vector.load %arg20[%c4_439, %c224_440] : memref<32x288xf32, #tpu.memory_space<vmem>>, vector<4x32xf32>
    tpu.vector_store %arg20[%c4_439, %c224_440], %341 {strides = array<i32>} : memref<32x288xf32, #tpu.memory_space<vmem>>, vector<4x32xf32>,
    %c0_441 = arith.constant 0 : index
    %c15_442 = arith.constant 15 : index
    %c0_443 = arith.constant 0 : index
    %343 = vector.load %arg17[%c0_441, %c15_442, %c0_443] : memref<2x25x32xf32, #tpu.memory_space<vmem>>, vector<1x4x32xf32>
    %344 = vector.shape_cast %343 : vector<1x4x32xf32> to vector<4x32xf32>
    %c8_444 = arith.constant 8 : index
    %c224_445 = arith.constant 224 : index
    %345 = vector.load %arg20[%c8_444, %c224_445] : memref<32x288xf32, #tpu.memory_space<vmem>>, vector<4x32xf32>
    tpu.vector_store %arg20[%c8_444, %c224_445], %344 {strides = array<i32>} : memref<32x288xf32, #tpu.memory_space<vmem>>, vector<4x32xf32>,
    %c0_446 = arith.constant 0 : index
    %c20_447 = arith.constant 20 : index
    %c0_448 = arith.constant 0 : index
    %346 = vector.load %arg17[%c0_446, %c20_447, %c0_448] : memref<2x25x32xf32, #tpu.memory_space<vmem>>, vector<1x4x32xf32>
    %347 = vector.shape_cast %346 : vector<1x4x32xf32> to vector<4x32xf32>
    %c12_449 = arith.constant 12 : index
    %c224_450 = arith.constant 224 : index
    %348 = vector.load %arg20[%c12_449, %c224_450] : memref<32x288xf32, #tpu.memory_space<vmem>>, vector<4x32xf32>
    tpu.vector_store %arg20[%c12_449, %c224_450], %347 {strides = array<i32>} : memref<32x288xf32, #tpu.memory_space<vmem>>, vector<4x32xf32>,
    %c1_451 = arith.constant 1 : index
    %c5_452 = arith.constant 5 : index
    %c0_453 = arith.constant 0 : index
    %349 = vector.load %arg17[%c1_451, %c5_452, %c0_453] : memref<2x25x32xf32, #tpu.memory_space<vmem>>, vector<1x4x32xf32>
    %350 = vector.shape_cast %349 : vector<1x4x32xf32> to vector<4x32xf32>
    %c16_454 = arith.constant 16 : index
    %c224_455 = arith.constant 224 : index
    %351 = vector.load %arg20[%c16_454, %c224_455] : memref<32x288xf32, #tpu.memory_space<vmem>>, vector<4x32xf32>
    tpu.vector_store %arg20[%c16_454, %c224_455], %350 {strides = array<i32>} : memref<32x288xf32, #tpu.memory_space<vmem>>, vector<4x32xf32>,
    %c1_456 = arith.constant 1 : index
    %c10_457 = arith.constant 10 : index
    %c0_458 = arith.constant 0 : index
    %352 = vector.load %arg17[%c1_456, %c10_457, %c0_458] : memref<2x25x32xf32, #tpu.memory_space<vmem>>, vector<1x4x32xf32>
    %353 = vector.shape_cast %352 : vector<1x4x32xf32> to vector<4x32xf32>
    %c20_459 = arith.constant 20 : index
    %c224_460 = arith.constant 224 : index
    %354 = vector.load %arg20[%c20_459, %c224_460] : memref<32x288xf32, #tpu.memory_space<vmem>>, vector<4x32xf32>
    tpu.vector_store %arg20[%c20_459, %c224_460], %353 {strides = array<i32>} : memref<32x288xf32, #tpu.memory_space<vmem>>, vector<4x32xf32>,
    %c1_461 = arith.constant 1 : index
    %c15_462 = arith.constant 15 : index
    %c0_463 = arith.constant 0 : index
    %355 = vector.load %arg17[%c1_461, %c15_462, %c0_463] : memref<2x25x32xf32, #tpu.memory_space<vmem>>, vector<1x4x32xf32>
    %356 = vector.shape_cast %355 : vector<1x4x32xf32> to vector<4x32xf32>
    %c24_464 = arith.constant 24 : index
    %c224_465 = arith.constant 224 : index
    %357 = vector.load %arg20[%c24_464, %c224_465] : memref<32x288xf32, #tpu.memory_space<vmem>>, vector<4x32xf32>
    tpu.vector_store %arg20[%c24_464, %c224_465], %356 {strides = array<i32>} : memref<32x288xf32, #tpu.memory_space<vmem>>, vector<4x32xf32>,
    %c1_466 = arith.constant 1 : index
    %c20_467 = arith.constant 20 : index
    %c0_468 = arith.constant 0 : index
    %358 = vector.load %arg17[%c1_466, %c20_467, %c0_468] : memref<2x25x32xf32, #tpu.memory_space<vmem>>, vector<1x4x32xf32>
    %359 = vector.shape_cast %358 : vector<1x4x32xf32> to vector<4x32xf32>
    %c28_469 = arith.constant 28 : index
    %c224_470 = arith.constant 224 : index
    %360 = vector.load %arg20[%c28_469, %c224_470] : memref<32x288xf32, #tpu.memory_space<vmem>>, vector<4x32xf32>
    tpu.vector_store %arg20[%c28_469, %c224_470], %359 {strides = array<i32>} : memref<32x288xf32, #tpu.memory_space<vmem>>, vector<4x32xf32>,
    %c0_471 = arith.constant 0 : index
    %c6_472 = arith.constant 6 : index
    %c0_473 = arith.constant 0 : index
    %361 = vector.load %arg16[%c0_471, %c6_472, %c0_473] : memref<2x25x32xf32, #tpu.memory_space<vmem>>, vector<1x4x32xf32>
    %362 = vector.shape_cast %361 : vector<1x4x32xf32> to vector<4x32xf32>
    %c0_474 = arith.constant 0 : index
    %c256 = arith.constant 256 : index
    %363 = vector.load %arg20[%c0_474, %c256] : memref<32x288xf32, #tpu.memory_space<vmem>>, vector<4x32xf32>
    tpu.vector_store %arg20[%c0_474, %c256], %362 {strides = array<i32>} : memref<32x288xf32, #tpu.memory_space<vmem>>, vector<4x32xf32>,
    %c0_475 = arith.constant 0 : index
    %c11_476 = arith.constant 11 : index
    %c0_477 = arith.constant 0 : index
    %364 = vector.load %arg16[%c0_475, %c11_476, %c0_477] : memref<2x25x32xf32, #tpu.memory_space<vmem>>, vector<1x4x32xf32>
    %365 = vector.shape_cast %364 : vector<1x4x32xf32> to vector<4x32xf32>
    %c4_478 = arith.constant 4 : index
    %c256_479 = arith.constant 256 : index
    %366 = vector.load %arg20[%c4_478, %c256_479] : memref<32x288xf32, #tpu.memory_space<vmem>>, vector<4x32xf32>
    tpu.vector_store %arg20[%c4_478, %c256_479], %365 {strides = array<i32>} : memref<32x288xf32, #tpu.memory_space<vmem>>, vector<4x32xf32>,
    %c0_480 = arith.constant 0 : index
    %c16_481 = arith.constant 16 : index
    %c0_482 = arith.constant 0 : index
    %367 = vector.load %arg16[%c0_480, %c16_481, %c0_482] : memref<2x25x32xf32, #tpu.memory_space<vmem>>, vector<1x4x32xf32>
    %368 = vector.shape_cast %367 : vector<1x4x32xf32> to vector<4x32xf32>
    %c8_483 = arith.constant 8 : index
    %c256_484 = arith.constant 256 : index
    %369 = vector.load %arg20[%c8_483, %c256_484] : memref<32x288xf32, #tpu.memory_space<vmem>>, vector<4x32xf32>
    tpu.vector_store %arg20[%c8_483, %c256_484], %368 {strides = array<i32>} : memref<32x288xf32, #tpu.memory_space<vmem>>, vector<4x32xf32>,
    %c0_485 = arith.constant 0 : index
    %c21_486 = arith.constant 21 : index
    %c0_487 = arith.constant 0 : index
    %370 = vector.load %arg16[%c0_485, %c21_486, %c0_487] : memref<2x25x32xf32, #tpu.memory_space<vmem>>, vector<1x4x32xf32>
    %371 = vector.shape_cast %370 : vector<1x4x32xf32> to vector<4x32xf32>
    %c12_488 = arith.constant 12 : index
    %c256_489 = arith.constant 256 : index
    %372 = vector.load %arg20[%c12_488, %c256_489] : memref<32x288xf32, #tpu.memory_space<vmem>>, vector<4x32xf32>
    tpu.vector_store %arg20[%c12_488, %c256_489], %371 {strides = array<i32>} : memref<32x288xf32, #tpu.memory_space<vmem>>, vector<4x32xf32>,
    %c1_490 = arith.constant 1 : index
    %c6_491 = arith.constant 6 : index
    %c0_492 = arith.constant 0 : index
    %373 = vector.load %arg16[%c1_490, %c6_491, %c0_492] : memref<2x25x32xf32, #tpu.memory_space<vmem>>, vector<1x4x32xf32>
    %374 = vector.shape_cast %373 : vector<1x4x32xf32> to vector<4x32xf32>
    %c16_493 = arith.constant 16 : index
    %c256_494 = arith.constant 256 : index
    %375 = vector.load %arg20[%c16_493, %c256_494] : memref<32x288xf32, #tpu.memory_space<vmem>>, vector<4x32xf32>
    tpu.vector_store %arg20[%c16_493, %c256_494], %374 {strides = array<i32>} : memref<32x288xf32, #tpu.memory_space<vmem>>, vector<4x32xf32>,
    %c1_495 = arith.constant 1 : index
    %c11_496 = arith.constant 11 : index
    %c0_497 = arith.constant 0 : index
    %376 = vector.load %arg16[%c1_495, %c11_496, %c0_497] : memref<2x25x32xf32, #tpu.memory_space<vmem>>, vector<1x4x32xf32>
    %377 = vector.shape_cast %376 : vector<1x4x32xf32> to vector<4x32xf32>
    %c20_498 = arith.constant 20 : index
    %c256_499 = arith.constant 256 : index
    %378 = vector.load %arg20[%c20_498, %c256_499] : memref<32x288xf32, #tpu.memory_space<vmem>>, vector<4x32xf32>
    tpu.vector_store %arg20[%c20_498, %c256_499], %377 {strides = array<i32>} : memref<32x288xf32, #tpu.memory_space<vmem>>, vector<4x32xf32>,
    %c1_500 = arith.constant 1 : index
    %c16_501 = arith.constant 16 : index
    %c0_502 = arith.constant 0 : index
    %379 = vector.load %arg16[%c1_500, %c16_501, %c0_502] : memref<2x25x32xf32, #tpu.memory_space<vmem>>, vector<1x4x32xf32>
    %380 = vector.shape_cast %379 : vector<1x4x32xf32> to vector<4x32xf32>
    %c24_503 = arith.constant 24 : index
    %c256_504 = arith.constant 256 : index
    %381 = vector.load %arg20[%c24_503, %c256_504] : memref<32x288xf32, #tpu.memory_space<vmem>>, vector<4x32xf32>
    tpu.vector_store %arg20[%c24_503, %c256_504], %380 {strides = array<i32>} : memref<32x288xf32, #tpu.memory_space<vmem>>, vector<4x32xf32>,
    %c1_505 = arith.constant 1 : index
    %c21_506 = arith.constant 21 : index
    %c0_507 = arith.constant 0 : index
    %382 = vector.load %arg16[%c1_505, %c21_506, %c0_507] : memref<2x25x32xf32, #tpu.memory_space<vmem>>, vector<1x4x32xf32>
    %383 = vector.shape_cast %382 : vector<1x4x32xf32> to vector<4x32xf32>
    %c28_508 = arith.constant 28 : index
    %c256_509 = arith.constant 256 : index
    %384 = vector.load %arg20[%c28_508, %c256_509] : memref<32x288xf32, #tpu.memory_space<vmem>>, vector<4x32xf32>
    tpu.vector_store %arg20[%c28_508, %c256_509], %383 {strides = array<i32>} : memref<32x288xf32, #tpu.memory_space<vmem>>, vector<4x32xf32>,
    %c0_510 = arith.constant 0 : index
    %c0_511 = arith.constant 0 : index
    %385 = vector.load %arg20[%c0_510, %c0_511] : memref<32x288xf32, #tpu.memory_space<vmem>>, vector<32x288xf32>
    %c0_512 = arith.constant 0 : index
    %c0_513 = arith.constant 0 : index
    %386 = vector.load %arg6[%c0_512, %c0_513] : memref<288x32xf32, #tpu.memory_space<vmem>>, vector<288x32xf32>
    %cst_514 = arith.constant dense<0.000000e+00> : vector<32x32xf32>
    %387 = tpu.matmul %385, %386, %cst_514 {dimension_numbers = #tpu.dot_dimension_numbers<[1], [0], [0], [1], [0, 0, 1, 1], [], []>} : vector<32x288xf32>, vector<288x32xf32>, vector<32x32xf32> -> vector<32x32xf32>
    %c0_515 = arith.constant 0 : index
    %c0_516 = arith.constant 0 : index
    %388 = vector.load %arg7[%c0_515, %c0_516] : memref<1x32xf32, #tpu.memory_space<vmem>>, vector<1x32xf32>
    %389 = vector.broadcast %388 : vector<1x32xf32> to vector<32x32xf32>
    %390 = arith.addf %387, %389 : vector<32x32xf32>
    %c0_517 = arith.constant 0 : index
    %c0_518 = arith.constant 0 : index
    %391 = vector.load %arg8[%c0_517, %c0_518] : memref<1x32xf32, #tpu.memory_space<vmem>>, vector<1x32xf32>
    %c0_519 = arith.constant 0 : index
    %c0_520 = arith.constant 0 : index
    %392 = vector.load %arg9[%c0_519, %c0_520] : memref<1x32xf32, #tpu.memory_space<vmem>>, vector<1x32xf32>
    %cst_521 = arith.constant dense<0.000000e+00> : vector<32xf32>
    %393 = vector.multi_reduction <add>, %390, %cst_521 [0] : vector<32x32xf32> to vector<32xf32>
    %394 = vector.shape_cast %393 : vector<32xf32> to vector<1x32xf32>
    %cst_522 = arith.constant 3.200000e+01 : f32
    %395 = vector.broadcast %cst_522 : f32 to vector<1x32xf32>
    %396 = arith.divf %394, %395 : vector<1x32xf32>
    %397 = vector.broadcast %396 : vector<1x32xf32> to vector<32x32xf32>
    %398 = arith.subf %390, %397 : vector<32x32xf32>
    %399 = arith.mulf %398, %398 : vector<32x32xf32>
    %cst_523 = arith.constant dense<0.000000e+00> : vector<32xf32>
    %400 = vector.multi_reduction <add>, %399, %cst_523 [0] : vector<32x32xf32> to vector<32xf32>
    %401 = vector.shape_cast %400 : vector<32xf32> to vector<1x32xf32>
    %cst_524 = arith.constant 3.200000e+01 : f32
    %402 = vector.broadcast %cst_524 : f32 to vector<1x32xf32>
    %403 = arith.divf %401, %402 : vector<1x32xf32>
    %404 = vector.broadcast %396 : vector<1x32xf32> to vector<32x32xf32>
    %405 = arith.subf %390, %404 : vector<32x32xf32>
    %cst_525 = arith.constant 9.99999974E-6 : f32
    %406 = vector.broadcast %cst_525 : f32 to vector<1x32xf32>
    %407 = arith.addf %403, %406 : vector<1x32xf32>
    %408 = math.rsqrt %407 : vector<1x32xf32>
    %409 = vector.broadcast %408 : vector<1x32xf32> to vector<32x32xf32>
    %410 = arith.mulf %405, %409 : vector<32x32xf32>
    %411 = vector.broadcast %391 : vector<1x32xf32> to vector<32x32xf32>
    %412 = arith.mulf %411, %410 : vector<32x32xf32>
    %413 = vector.broadcast %392 : vector<1x32xf32> to vector<32x32xf32>
    %414 = arith.addf %412, %413 : vector<32x32xf32>
    %cst_526 = arith.constant 0.000000e+00 : f32
    %415 = vector.broadcast %cst_526 : f32 to vector<32x32xf32>
    %416 = arith.maximumf %414, %415 : vector<32x32xf32>
    %c0_527 = arith.constant 0 : index
    %c0_528 = arith.constant 0 : index
    %417 = vector.load %arg10[%c0_527, %c0_528] : memref<32x16xf32, #tpu.memory_space<vmem>>, vector<32x16xf32>
    %cst_529 = arith.constant dense<0.000000e+00> : vector<32x16xf32>
    %418 = tpu.matmul %416, %417, %cst_529 {dimension_numbers = #tpu.dot_dimension_numbers<[1], [0], [0], [1], [0, 0, 1, 1], [], []>} : vector<32x32xf32>, vector<32x16xf32>, vector<32x16xf32> -> vector<32x16xf32>
    %c0_530 = arith.constant 0 : index
    %c0_531 = arith.constant 0 : index
    %419 = vector.load %arg11[%c0_530, %c0_531] : memref<1x16xf32, #tpu.memory_space<vmem>>, vector<1x16xf32>
    %420 = vector.broadcast %419 : vector<1x16xf32> to vector<32x16xf32>
    %421 = arith.addf %418, %420 : vector<32x16xf32>
    %cst_532 = arith.constant 0.000000e+00 : f32
    %422 = vector.broadcast %cst_532 : f32 to vector<32x16xf32>
    %423 = arith.maximumf %421, %422 : vector<32x16xf32>
    %424 = vector.extract_strided_slice %423 {offsets = [0, 0], sizes = [16, 16], strides = [1, 1]} : vector<32x16xf32> to vector<16x16xf32>
    %cst_533 = arith.constant dense<0xFF800000> : vector<16xf32>
    %425 = vector.multi_reduction <maximumf>, %424, %cst_533 [0] : vector<16x16xf32> to vector<16xf32>
    %426 = vector.shape_cast %425 : vector<16xf32> to vector<1x16xf32>
    %c0_534 = arith.constant 0 : index
    %c0_535 = arith.constant 0 : index
    %427 = vector.load %arg21[%c0_534, %c0_535] : memref<2x16xf32, #tpu.memory_space<vmem>>, vector<1x16xf32>
    tpu.vector_store %arg21[%c0_534, %c0_535], %426 {strides = array<i32>} : memref<2x16xf32, #tpu.memory_space<vmem>>, vector<1x16xf32>,
    %428 = vector.extract_strided_slice %423 {offsets = [16, 0], sizes = [16, 16], strides = [1, 1]} : vector<32x16xf32> to vector<16x16xf32>
    %cst_536 = arith.constant dense<0xFF800000> : vector<16xf32>
    %429 = vector.multi_reduction <maximumf>, %428, %cst_536 [0] : vector<16x16xf32> to vector<16xf32>
    %430 = vector.shape_cast %429 : vector<16xf32> to vector<1x16xf32>
    %c1_537 = arith.constant 1 : index
    %c0_538 = arith.constant 0 : index
    %431 = vector.load %arg21[%c1_537, %c0_538] : memref<2x16xf32, #tpu.memory_space<vmem>>, vector<1x16xf32>
    tpu.vector_store %arg21[%c1_537, %c0_538], %430 {strides = array<i32>} : memref<2x16xf32, #tpu.memory_space<vmem>>, vector<1x16xf32>,
    %c0_539 = arith.constant 0 : index
    %c0_540 = arith.constant 0 : index
    %432 = vector.load %arg21[%c0_539, %c0_540] : memref<2x16xf32, #tpu.memory_space<vmem>>, vector<2x16xf32>
    %c0_541 = arith.constant 0 : index
    %c0_542 = arith.constant 0 : index
    %433 = vector.load %arg12[%c0_541, %c0_542] : memref<16x32xf32, #tpu.memory_space<vmem>>, vector<16x32xf32>
    %cst_543 = arith.constant dense<0.000000e+00> : vector<2x32xf32>
    %434 = tpu.matmul %432, %433, %cst_543 {dimension_numbers = #tpu.dot_dimension_numbers<[1], [0], [0], [1], [0, 0, 1, 1], [], []>} : vector<2x16xf32>, vector<16x32xf32>, vector<2x32xf32> -> vector<2x32xf32>
    %c0_544 = arith.constant 0 : index
    %c0_545 = arith.constant 0 : index
    %435 = vector.load %arg13[%c0_544, %c0_545] : memref<1x32xf32, #tpu.memory_space<vmem>>, vector<1x32xf32>
    %436 = vector.broadcast %435 : vector<1x32xf32> to vector<2x32xf32>
    %437 = arith.addf %434, %436 : vector<2x32xf32>
    %cst_546 = arith.constant dense<0.000000e+00> : vector<32xf32>
    %438 = vector.multi_reduction <add>, %437, %cst_546 [0] : vector<2x32xf32> to vector<32xf32>
    %439 = vector.shape_cast %438 : vector<32xf32> to vector<1x32xf32>
    %cst_547 = arith.constant 2.000000e+00 : f32
    %440 = vector.broadcast %cst_547 : f32 to vector<1x32xf32>
    %441 = arith.divf %439, %440 : vector<1x32xf32>
    %442 = vector.broadcast %441 : vector<1x32xf32> to vector<2x32xf32>
    %443 = arith.subf %437, %442 : vector<2x32xf32>
    %444 = arith.mulf %443, %443 : vector<2x32xf32>
    %cst_548 = arith.constant dense<0.000000e+00> : vector<32xf32>
    %445 = vector.multi_reduction <add>, %444, %cst_548 [0] : vector<2x32xf32> to vector<32xf32>
    %446 = vector.shape_cast %445 : vector<32xf32> to vector<1x32xf32>
    %cst_549 = arith.constant 2.000000e+00 : f32
    %447 = vector.broadcast %cst_549 : f32 to vector<1x32xf32>
    %448 = arith.divf %446, %447 : vector<1x32xf32>
    %449 = vector.broadcast %441 : vector<1x32xf32> to vector<2x32xf32>
    %450 = arith.subf %437, %449 : vector<2x32xf32>
    %cst_550 = arith.constant 9.99999974E-6 : f32
    %451 = vector.broadcast %cst_550 : f32 to vector<1x32xf32>
    %452 = arith.addf %448, %451 : vector<1x32xf32>
    %453 = math.rsqrt %452 : vector<1x32xf32>
    %454 = vector.broadcast %453 : vector<1x32xf32> to vector<2x32xf32>
    %455 = arith.mulf %450, %454 : vector<2x32xf32>
    %cst_551 = arith.constant 0.000000e+00 : f32
    %456 = vector.broadcast %cst_551 : f32 to vector<2x32xf32>
    %457 = arith.maximumf %455, %456 : vector<2x32xf32>
    %c0_552 = arith.constant 0 : index
    %c0_553 = arith.constant 0 : index
    %458 = vector.load %arg14[%c0_552, %c0_553] : memref<2x32xf32, #tpu.memory_space<vmem>>, vector<2x32xf32>
    tpu.vector_store %arg14[%c0_552, %c0_553], %457 {strides = array<i32>} : memref<2x32xf32, #tpu.memory_space<vmem>>, vector<2x32xf32>,
    return
  }
  func.func @transform_0(%arg0: i32) -> (i32, i32) {
    %c0_i32 = arith.constant 0 : i32
    %c0_i32_0 = arith.constant 0 : i32
    %c0_i32_1 = arith.constant 0 : i32
    return %c0_i32, %c0_i32_0 : i32, i32
  }
  func.func @transform_1(%arg0: i32) -> (i32, i32) {
    %c0_i32 = arith.constant 0 : i32
    %c0_i32_0 = arith.constant 0 : i32
    %c0_i32_1 = arith.constant 0 : i32
    return %c0_i32, %c0_i32_0 : i32, i32
  }
  func.func @transform_2(%arg0: i32) -> (i32, i32) {
    %c0_i32 = arith.constant 0 : i32
    %c0_i32_0 = arith.constant 0 : i32
    %c0_i32_1 = arith.constant 0 : i32
    return %c0_i32, %c0_i32_0 : i32, i32
  }
  func.func @transform_3(%arg0: i32) -> (i32, i32) {
    %c0_i32 = arith.constant 0 : i32
    %c0_i32_0 = arith.constant 0 : i32
    %c0_i32_1 = arith.constant 0 : i32
    return %c0_i32, %c0_i32_0 : i32, i32
  }
  func.func @transform_4(%arg0: i32) -> (i32, i32) {
    %c0_i32 = arith.constant 0 : i32
    %c0_i32_0 = arith.constant 0 : i32
    %c0_i32_1 = arith.constant 0 : i32
    return %c0_i32, %c0_i32_0 : i32, i32
  }
  func.func @transform_5(%arg0: i32) -> (i32, i32) {
    %c0_i32 = arith.constant 0 : i32
    %c0_i32_0 = arith.constant 0 : i32
    %c0_i32_1 = arith.constant 0 : i32
    return %c0_i32, %c0_i32_0 : i32, i32
  }
  func.func @transform_6(%arg0: i32) -> (i32, i32) {
    %c0_i32 = arith.constant 0 : i32
    %c0_i32_0 = arith.constant 0 : i32
    %c0_i32_1 = arith.constant 0 : i32
    return %c0_i32, %c0_i32_0 : i32, i32
  }
  func.func @transform_7(%arg0: i32) -> (i32, i32) {
    %c0_i32 = arith.constant 0 : i32
    %c0_i32_0 = arith.constant 0 : i32
    %c0_i32_1 = arith.constant 0 : i32
    return %c0_i32, %c0_i32_0 : i32, i32
  }
  func.func @transform_8(%arg0: i32) -> (i32, i32) {
    %c0_i32 = arith.constant 0 : i32
    %c0_i32_0 = arith.constant 0 : i32
    %c0_i32_1 = arith.constant 0 : i32
    return %c0_i32, %c0_i32_0 : i32, i32
  }
  func.func @transform_9(%arg0: i32) -> (i32, i32) {
    %c0_i32 = arith.constant 0 : i32
    %c0_i32_0 = arith.constant 0 : i32
    %c0_i32_1 = arith.constant 0 : i32
    return %c0_i32, %c0_i32_0 : i32, i32
  }
  func.func @transform_10(%arg0: i32) -> (i32, i32) {
    %c0_i32 = arith.constant 0 : i32
    %c0_i32_0 = arith.constant 0 : i32
    %c0_i32_1 = arith.constant 0 : i32
    return %c0_i32, %c0_i32_0 : i32, i32
  }
  func.func @transform_11(%arg0: i32) -> (i32, i32) {
    %c0_i32 = arith.constant 0 : i32
    %c0_i32_0 = arith.constant 0 : i32
    %c0_i32_1 = arith.constant 0 : i32
    return %c0_i32, %c0_i32_0 : i32, i32
  }
  func.func @transform_12(%arg0: i32) -> (i32, i32) {
    %c0_i32 = arith.constant 0 : i32
    %c0_i32_0 = arith.constant 0 : i32
    %c0_i32_1 = arith.constant 0 : i32
    return %c0_i32, %c0_i32_0 : i32, i32
  }
  func.func @transform_13(%arg0: i32) -> (i32, i32) {
    %c0_i32 = arith.constant 0 : i32
    %c0_i32_0 = arith.constant 0 : i32
    %c0_i32_1 = arith.constant 0 : i32
    return %c0_i32, %c0_i32_0 : i32, i32
  }
}

</mosaic_0001>

<llo_original>
// kernel: filmed_net_forward.1
$region0: #{filmed_net_forward.1}
  #allocation0 [shape = 'u32[]', space=smem, size = 0x4, offset = 0x4, fixed_abs, tag = 'smem constant byte address 0x4 - core index']
  #allocation1 [shape = 'u32[144,128]{1,0:T(1,128)}', space=vmem, size = 0x12000, scoped, tag = 'internal scratch']
  #allocation2 [shape = 'f32[128,32]{1,0:T(8,128)}', space=vmem, size = 0x10000, scoped, tag = 'scratch operand']
  #allocation3 [shape = 'f32[2,25,32]{2,1,0:T(8,128)}', space=vmem, size = 0x8000, scoped, tag = 'scratch operand']
  #allocation4 [shape = 'f32[2,25,32]{2,1,0:T(8,128)}', space=vmem, size = 0x8000, scoped, tag = 'scratch operand']
  #allocation5 [shape = 'f32[2,25,32]{2,1,0:T(8,128)}', space=vmem, size = 0x8000, scoped, tag = 'scratch operand']
  #allocation6 [shape = 'f32[2,25,32]{2,1,0:T(8,128)}', space=vmem, size = 0x8000, scoped, tag = 'scratch operand']
  #allocation7 [shape = 'f32[32,288]{1,0:T(8,128)}', space=vmem, size = 0xc000, scoped, tag = 'scratch operand']
  #allocation8 [shape = 'f32[2,16]{1,0:T(2,128)}', space=vmem, size = 0x400, scoped, tag = 'scratch operand']
  %s0 = inlined_call_operand.vmem [shape: f32[128,36], index: 0, kind: input, shape index: {}]
  %s1 = inlined_call_operand.vmem [shape: f32[36,32], index: 1, kind: input, shape index: {}]
  %s2 = inlined_call_operand.vmem [shape: f32[1,32], index: 2, kind: input, shape index: {}]
  %s3 = inlined_call_operand.vmem [shape: f32[1,32], index: 3, kind: input, shape index: {}]
  %s4 = inlined_call_operand.vmem [shape: f32[1,32], index: 4, kind: input, shape index: {}]
  %s5 = inlined_call_operand.vmem [shape: f32[288,32], index: 5, kind: input, shape index: {}]
  %s6 = inlined_call_operand.vmem [shape: f32[1,32], index: 6, kind: input, shape index: {}]
  %s7 = inlined_call_operand.vmem [shape: f32[1,32], index: 7, kind: input, shape index: {}]
  %s8 = inlined_call_operand.vmem [shape: f32[1,32], index: 8, kind: input, shape index: {}]
  %s9 = inlined_call_operand.vmem [shape: f32[32,16], index: 9, kind: input, shape index: {}]
  %s10 = inlined_call_operand.vmem [shape: f32[1,16], index: 10, kind: input, shape index: {}]
  %s11 = inlined_call_operand.vmem [shape: f32[16,32], index: 11, kind: input, shape index: {}]
  %s12 = inlined_call_operand.vmem [shape: f32[1,32], index: 12, kind: input, shape index: {}]
  %s13 = inlined_call_operand.hbm [shape: f32[2,32], index: 13, kind: output, shape index: {}]
  %s14 = sld [smem:[#allocation0]]
  $region62: #{filmed_net_forward.1} parent=0
    _
  %s16 = ssub.s32 1, %s14
  %s17 = scalar_select 0, %s16, %s14
  $region1: #{filmed_net_forward.1} parent=0
    #allocation9 [shape = 'u8[1024]{0}', space=vmem, size = 0x400, scoped, tag = 'output window, operand 0, single buffered']
    #allocation10 [shape = 's32[1]{0}', space=sflag, size = 0x4, scoped, tag = 'scoped memory for filmed_net_forward.1']
    %18 = vsyncpa [#allocation10], 0
    // Predicated region
    $region2: #{filmed_net_forward.1} parent=1 // pred_check
      _
    $region3: #{filmed_net_forward.1} parent=1 // pred_check_branch
      %20 = sbr.rel (0) target = $region5
    $region4: #{filmed_net_forward.1} parent=1 // pred_region
      _
    $region5: #{filmed_net_forward.1} parent=1 // pred_fallthru
      _
    // Predicated region
    $region6: #{filmed_net_forward.1} parent=1 // pred_check
      _
    $region7: #{filmed_net_forward.1} parent=1 // pred_check_branch
      %22 = sbr.rel (0) target = $region9
    $region8: #{filmed_net_forward.1} parent=1 // pred_region
      _
    $region9: #{filmed_net_forward.1} parent=1 // pred_fallthru
      _
    // Predicated region
    $region10: #{filmed_net_forward.1} parent=1 // pred_check
      _
    $region11: #{filmed_net_forward.1} parent=1 // pred_check_branch
      %24 = sbr.rel (0) target = $region13
    $region12: #{filmed_net_forward.1} parent=1 // pred_region
      _
    $region13: #{filmed_net_forward.1} parent=1 // pred_fallthru
      _
    // Predicated region
    $region14: #{filmed_net_forward.1} parent=1 // pred_check
      _
    $region15: #{filmed_net_forward.1} parent=1 // pred_check_branch
      %26 = sbr.rel (0) target = $region17
    $region16: #{filmed_net_forward.1} parent=1 // pred_region
      _
    $region17: #{filmed_net_forward.1} parent=1 // pred_fallthru
      _
    // Predicated region
    $region18: #{filmed_net_forward.1} parent=1 // pred_check
      _
    $region19: #{filmed_net_forward.1} parent=1 // pred_check_branch
      %28 = sbr.rel (0) target = $region21
    $region20: #{filmed_net_forward.1} parent=1 // pred_region
      _
    $region21: #{filmed_net_forward.1} parent=1 // pred_fallthru
      _
    // Predicated region
    $region22: #{filmed_net_forward.1} parent=1 // pred_check
      _
    $region23: #{filmed_net_forward.1} parent=1 // pred_check_branch
      %30 = sbr.rel (0) target = $region25
    $region24: #{filmed_net_forward.1} parent=1 // pred_region
      _
    $region25: #{filmed_net_forward.1} parent=1 // pred_fallthru
      _
    // Predicated region
    $region26: #{filmed_net_forward.1} parent=1 // pred_check
      _
    $region27: #{filmed_net_forward.1} parent=1 // pred_check_branch
      %32 = sbr.rel (0) target = $region29
    $region28: #{filmed_net_forward.1} parent=1 // pred_region
      _
    $region29: #{filmed_net_forward.1} parent=1 // pred_fallthru
      _
    // Predicated region
    $region30: #{filmed_net_forward.1} parent=1 // pred_check
      _
    $region31: #{filmed_net_forward.1} parent=1 // pred_check_branch
      %34 = sbr.rel (0) target = $region33
    $region32: #{filmed_net_forward.1} parent=1 // pred_region
      _
    $region33: #{filmed_net_forward.1} parent=1 // pred_fallthru
      _
    // Predicated region
    $region34: #{filmed_net_forward.1} parent=1 // pred_check
      _
    $region35: #{filmed_net_forward.1} parent=1 // pred_check_branch
      %36 = sbr.rel (0) target = $region37
    $region36: #{filmed_net_forward.1} parent=1 // pred_region
      _
    $region37: #{filmed_net_forward.1} parent=1 // pred_fallthru
      _
    // Predicated region
    $region38: #{filmed_net_forward.1} parent=1 // pred_check
      _
    $region39: #{filmed_net_forward.1} parent=1 // pred_check_branch
      %38 = sbr.rel (0) target = $region41
    $region40: #{filmed_net_forward.1} parent=1 // pred_region
      _
    $region41: #{filmed_net_forward.1} parent=1 // pred_fallthru
      _
    // Predicated region
    $region42: #{filmed_net_forward.1} parent=1 // pred_check
      _
    $region43: #{filmed_net_forward.1} parent=1 // pred_check_branch
      %40 = sbr.rel (0) target = $region45
    $region44: #{filmed_net_forward.1} parent=1 // pred_region
      _
    $region45: #{filmed_net_forward.1} parent=1 // pred_fallthru
      _
    // Predicated region
    $region46: #{filmed_net_forward.1} parent=1 // pred_check
      _
    $region47: #{filmed_net_forward.1} parent=1 // pred_check_branch
      %42 = sbr.rel (0) target = $region49
    $region48: #{filmed_net_forward.1} parent=1 // pred_region
      _
    $region49: #{filmed_net_forward.1} parent=1 // pred_fallthru
      _
    // Predicated region
    $region50: #{filmed_net_forward.1} parent=1 // pred_check
      _
    $region51: #{filmed_net_forward.1} parent=1 // pred_check_branch
      %44 = sbr.rel (0) target = $region53
    $region52: #{filmed_net_forward.1} parent=1 // pred_region
      _
    $region53: #{filmed_net_forward.1} parent=1 // pred_fallthru
      _
    %v45 = vld [vmem:[%s0] sm:$0xff]
    %v46 = vld [vmem:[%s0 + $0x8] sm:$0xff]
    %v47 = vld [vmem:[%s0 + $0x10] sm:$0xff]
    %v48 = vld [vmem:[%s0 + $0x18] sm:$0xff]
    %v49 = vld [vmem:[%s0 + $0x20] sm:$0xff]
    %v50 = vld [vmem:[%s0 + $0x28] sm:$0xff]
    %v51 = vld [vmem:[%s0 + $0x30] sm:$0xff]
    %v52 = vld [vmem:[%s0 + $0x38] sm:$0xff]
    %v53 = vld [vmem:[%s0 + $0x40] sm:$0xff]
    %v54 = vld [vmem:[%s0 + $0x48] sm:$0xff]
    %v55 = vld [vmem:[%s0 + $0x50] sm:$0xff]
    %v56 = vld [vmem:[%s0 + $0x58] sm:$0xff]
    %v57 = vld [vmem:[%s0 + $0x60] sm:$0xff]
    %v58 = vld [vmem:[%s0 + $0x68] sm:$0xff]
    %v59 = vld [vmem:[%s0 + $0x70] sm:$0xff]
    %v60 = vld [vmem:[%s0 + $0x78] sm:$0xff]
    %v61 = vld [vmem:[%s1] sm:$0xff]
    %v62 = vld [vmem:[%s1 + $0x8] sm:$0xff]
    %v63 = vld [vmem:[%s1 + $0x10] sm:$0xff]
    %v64 = vld [vmem:[%s1 + $0x18] sm:$0xff]
    %v65 = vld [vmem:[%s1 + $0x20] sm:$0xf]
    %v66 = vld [vmem:[%s2] sm:$0x1]
    %v68 = vlaneseq
    %v69 = vshrl.u32 %v68, 7
    %v70 = vsub.s32 0, %v69
    %v71 = vrot.slane %v66, %v70
    %vm73 = vcmask 293888
    %v75 = vsel %vm73, %v45, 0
    %v78 = vsel %vm73, %v46, 0
    %v81 = vsel %vm73, %v47, 0
    %v84 = vsel %vm73, %v48, 0
    %v87 = vsel %vm73, %v49, 0
    %v90 = vsel %vm73, %v50, 0
    %v93 = vsel %vm73, %v51, 0
    %v96 = vsel %vm73, %v52, 0
    %v99 = vsel %vm73, %v53, 0
    %v102 = vsel %vm73, %v54, 0
    %v105 = vsel %vm73, %v55, 0
    %v108 = vsel %vm73, %v56, 0
    %v111 = vsel %vm73, %v57, 0
    %v114 = vsel %vm73, %v58, 0
    %v117 = vsel %vm73, %v59, 0
    %v120 = vsel %vm73, %v60, 0
    %vm122 = vcmask 1043456
    %v124 = vsel %vm122, %v65, 0
    %126 = vmatprep.subr.mxu0 0.0
    %127 = vmatpush1.msra.mxu0 0.0
    %128 = vmatprep.subr.mxu0 0.0
    %129 = vmatpush1.msra.mxu0 0.0
    %130 = vmatprep.subr.mxu0 0.0
    %131 = vmatpush1.msra.mxu0 0.0
    %132 = vmatprep.subr.mxu0 0.0
    %133 = vmatpush1.msra.mxu0 0.0
    %134 = vmatprep.subr.mxu0 0.0
    %135 = vmatpush1.msra.mxu0 0.0
    %136 = vmatprep.subr.mxu0 0.0
    %137 = vmatpush1.msra.mxu0 0.0
    %138 = vmatprep.subr.mxu0 0.0
    %139 = vmatpush1.msra.mxu0 0.0
    %140 = vmatprep.subr.mxu0 0.0
    %141 = vmatpush1.msra.mxu0 0.0
    %142 = vmatprep.subr.mxu0 0.0
    %143 = vmatpush1.msra.mxu0 0.0
    %144 = vmatprep.subr.mxu0 0.0
    %145 = vmatpush1.msra.mxu0 0.0
    %146 = vmatprep.subr.mxu0 0.0
    %147 = vmatpush1.msra.mxu0 0.0
    %148 = vmatprep.subr.mxu0 0.0
    %149 = vmatpush1.msra.mxu0 %v124
    %150 = vmatprep.subr.mxu0 0.0
    %151 = vmatpush1.msra.mxu0 %v64
    %152 = vmatprep.subr.mxu0 0.0
    %153 = vmatpush1.msra.mxu0 %v63
    %154 = vmatprep.subr.mxu0 0.0
    %155 = vmatpush1.msra.mxu0 %v62
    %156 = vmatprep.subr.mxu0 0.0
    %157 = vmatpush1.msra.mxu0 %v61
    %158 = vmatprep.subr.mxu0 0.0
    %159 = vmatpush2.msra.mxu0 0.0
    %160 = vmatprep.subr.mxu0 0.0
    %161 = vmatpush2.msra.mxu0 0.0
    %162 = vmatprep.subr.mxu0 0.0
    %163 = vmatpush2.msra.mxu0 0.0
    %164 = vmatprep.subr.mxu0 0.0
    %165 = vmatpush2.msra.mxu0 0.0
    %166 = vmatprep.subr.mxu0 0.0
    %167 = vmatpush2.msra.mxu0 0.0
    %168 = vmatprep.subr.mxu0 0.0
    %169 = vmatpush2.msra.mxu0 0.0
    %170 = vmatprep.subr.mxu0 0.0
    %171 = vmatpush2.msra.mxu0 0.0
    %172 = vmatprep.subr.mxu0 0.0
    %173 = vmatpush2.msra.mxu0 0.0
    %174 = vmatprep.subr.mxu0 0.0
    %175 = vmatpush2.msra.mxu0 0.0
    %176 = vmatprep.subr.mxu0 0.0
    %177 = vmatpush2.msra.mxu0 0.0
    %178 = vmatprep.subr.mxu0 0.0
    %179 = vmatpush2.msra.mxu0 0.0
    %180 = vmatprep.subr.mxu0 0.0
    %181 = vmatpush2.msra.mxu0 0.0
    %182 = vmatprep.subr.mxu0 0.0
    %183 = vmatpush2.msra.mxu0 0.0
    %184 = vmatprep.subr.mxu0 0.0
    %185 = vmatpush2.msra.mxu0 0.0
    %186 = vmatprep.subr.mxu0 0.0
    %187 = vmatpush2.msra.mxu0 0.0
    %188 = vmatprep.subr.mxu0 0.0
    %189 = vmatpush2.msra.mxu0 0.0
    %190 = vmatprep.mubr.f32.mxu0 0.0
    %191 = vmatmul.mubr.f32.gmra.mxu0 %v75
    %v192 = vpop.f32.mrf.mxu0
    %v193 = vadd.f32 %v71, %v192
    %v194 = vpop.f32.mrf.mxu0
    %195 = vmatprep.mubr.f32.mxu0 0.0
    %196 = vmatmul.mubr.f32.gmra.mxu0 %v78
    %v197 = vpop.f32.mrf.mxu0
    %v198 = vadd.f32 %v71, %v197
    %v199 = vpop.f32.mrf.mxu0
    %200 = vmatprep.mubr.f32.mxu0 0.0
    %201 = vmatmul.mubr.f32.gmra.mxu0 %v81
    %v202 = vpop.f32.mrf.mxu0
    %v203 = vadd.f32 %v71, %v202
    %v204 = vpop.f32.mrf.mxu0
    %205 = vmatprep.mubr.f32.mxu0 0.0
    %206 = vmatmul.mubr.f32.gmra.mxu0 %v84
    %v207 = vpop.f32.mrf.mxu0
    %v208 = vadd.f32 %v71, %v207
    %v209 = vpop.f32.mrf.mxu0
    %210 = vmatprep.mubr.f32.mxu0 0.0
    %211 = vmatmul.mubr.f32.gmra.mxu0 %v87
    %v212 = vpop.f32.mrf.mxu0
    %v213 = vadd.f32 %v71, %v212
    %v214 = vpop.f32.mrf.mxu0
    %215 = vmatprep.mubr.f32.mxu0 0.0
    %216 = vmatmul.mubr.f32.gmra.mxu0 %v90
    %v217 = vpop.f32.mrf.mxu0
    %v218 = vadd.f32 %v71, %v217
    %v219 = vpop.f32.mrf.mxu0
    %220 = vmatprep.mubr.f32.mxu0 0.0
    %221 = vmatmul.mubr.f32.gmra.mxu0 %v93
    %v222 = vpop.f32.mrf.mxu0
    %v223 = vadd.f32 %v71, %v222
    %v224 = vpop.f32.mrf.mxu0
    %225 = vmatprep.mubr.f32.mxu0 0.0
    %226 = vmatmul.mubr.f32.gmra.mxu0 %v96
    %v227 = vpop.f32.mrf.mxu0
    %v228 = vadd.f32 %v71, %v227
    %v229 = vpop.f32.mrf.mxu0
    %230 = vmatprep.mubr.f32.mxu0 0.0
    %231 = vmatmul.mubr.f32.gmra.mxu0 %v99
    %v232 = vpop.f32.mrf.mxu0
    %v233 = vadd.f32 %v71, %v232
    %v234 = vpop.f32.mrf.mxu0
    %235 = vmatprep.mubr.f32.mxu0 0.0
    %236 = vmatmul.mubr.f32.gmra.mxu0 %v102
    %v237 = vpop.f32.mrf.mxu0
    %v238 = vadd.f32 %v71, %v237
    %v239 = vpop.f32.mrf.mxu0
    %240 = vmatprep.mubr.f32.mxu0 0.0
    %241 = vmatmul.mubr.f32.gmra.mxu0 %v105
    %v242 = vpop.f32.mrf.mxu0
    %v243 = vadd.f32 %v71, %v242
    %v244 = vpop.f32.mrf.mxu0
    %245 = vmatprep.mubr.f32.mxu0 0.0
    %246 = vmatmul.mubr.f32.gmra.mxu0 %v108
    %v247 = vpop.f32.mrf.mxu0
    %v248 = vadd.f32 %v71, %v247
    %v249 = vpop.f32.mrf.mxu0
    %250 = vmatprep.mubr.f32.mxu0 0.0
    %251 = vmatmul.mubr.f32.gmra.mxu0 %v111
    %v252 = vpop.f32.mrf.mxu0
    %v253 = vadd.f32 %v71, %v252
    %v254 = vpop.f32.mrf.mxu0
    %255 = vmatprep.mubr.f32.mxu0 0.0
    %256 = vmatmul.mubr.f32.gmra.mxu0 %v114
    %v257 = vpop.f32.mrf.mxu0
    %v258 = vadd.f32 %v71, %v257
    %v259 = vpop.f32.mrf.mxu0
    %260 = vmatprep.mubr.f32.mxu0 0.0
    %261 = vmatmul.mubr.f32.gmra.mxu0 %v117
    %v262 = vpop.f32.mrf.mxu0
    %v263 = vadd.f32 %v71, %v262
    %v264 = vpop.f32.mrf.mxu0
    %265 = vmatprep.mubr.f32.mxu0 0.0
    %266 = vmatmul.mubr.f32.gmra.mxu0 %v120
    %v267 = vpop.f32.mrf.mxu0
    %v268 = vadd.f32 %v71, %v267
    %v269 = vpop.f32.mrf.mxu0
    %270 = vdwg.mxu0
    %v271 = vld [vmem:[%s3] sm:$0x1]
    %v272 = vld [vmem:[%s4] sm:$0x1]
    %vm273 = vcmask 261120
    %v274 = vsel %vm273, %v193, 0.0
    %v275 = vsel %vm273, %v198, 0.0
    %v276 = vadd.f32 %v274, %v275
    %v277 = vsel %vm273, %v203, 0.0
    %v278 = vadd.f32 %v276, %v277
    %v279 = vsel %vm273, %v208, 0.0
    %v280 = vadd.f32 %v278, %v279
    %v281 = vsel %vm273, %v213, 0.0
    %v282 = vadd.f32 %v280, %v281
    %v283 = vsel %vm273, %v218, 0.0
    %v284 = vadd.f32 %v282, %v283
    %v285 = vsel %vm273, %v223, 0.0
    %v286 = vadd.f32 %v284, %v285
    %v287 = vsel %vm273, %v228, 0.0
    %v288 = vadd.f32 %v286, %v287
    %v289 = vsel %vm273, %v233, 0.0
    %v290 = vadd.f32 %v288, %v289
    %v291 = vsel %vm273, %v238, 0.0
    %v292 = vadd.f32 %v290, %v291
    %v293 = vsel %vm273, %v243, 0.0
    %v294 = vadd.f32 %v292, %v293
    %v295 = vsel %vm273, %v248, 0.0
    %v296 = vadd.f32 %v294, %v295
    %v297 = vsel %vm273, %v253, 0.0
    %v298 = vadd.f32 %v296, %v297
    %v299 = vsel %vm273, %v258, 0.0
    %v300 = vadd.f32 %v298, %v299
    %v301 = vsel %vm273, %v263, 0.0
    %v302 = vadd.f32 %v300, %v301
    %v303 = vsel %vm273, %v268, 0.0
    %v304 = vadd.f32 %v302, %v303
    %v305 = vrot.slane %v304, 4
    %v306 = vadd.f32 %v304, %v305
    %v307 = vrot.slane %v306, 2
    %v308 = vadd.f32 %v306, %v307
    %v309 = vrot.slane %v308, 1
    %v310 = vadd.f32 %v308, %v309
    %v311 = vrcp.pop 128.0
    %v312 = vmul.f32 %v310, %v311
    %v313 = vsub.f32 %v193, %v312
    %v314 = vsub.f32 %v198, %v312
    %v315 = vsub.f32 %v203, %v312
    %v316 = vsub.f32 %v208, %v312
    %v317 = vsub.f32 %v213, %v312
    %v318 = vsub.f32 %v218, %v312
    %v319 = vsub.f32 %v223, %v312
    %v320 = vsub.f32 %v228, %v312
    %v321 = vsub.f32 %v233, %v312
    %v322 = vsub.f32 %v238, %v312
    %v323 = vsub.f32 %v243, %v312
    %v324 = vsub.f32 %v248, %v312
    %v325 = vsub.f32 %v253, %v312
    %v326 = vsub.f32 %v258, %v312
    %v327 = vsub.f32 %v263, %v312
    %v328 = vsub.f32 %v268, %v312
    %v329 = vmul.f32 %v313, %v313
    %v330 = vmul.f32 %v314, %v314
    %v331 = vmul.f32 %v315, %v315
    %v332 = vmul.f32 %v316, %v316
    %v333 = vmul.f32 %v317, %v317
    %v334 = vmul.f32 %v318, %v318
    %v335 = vmul.f32 %v319, %v319
    %v336 = vmul.f32 %v320, %v320
    %v337 = vmul.f32 %v321, %v321
    %v338 = vmul.f32 %v322, %v322
    %v339 = vmul.f32 %v323, %v323
    %v340 = vmul.f32 %v324, %v324
    %v341 = vmul.f32 %v325, %v325
    %v342 = vmul.f32 %v326, %v326
    %v343 = vmul.f32 %v327, %v327
    %v344 = vmul.f32 %v328, %v328
    %v345 = vsel %vm273, %v329, 0.0
    %v346 = vsel %vm273, %v330, 0.0
    %v347 = vadd.f32 %v345, %v346
    %v348 = vsel %vm273, %v331, 0.0
    %v349 = vadd.f32 %v347, %v348
    %v350 = vsel %vm273, %v332, 0.0
    %v351 = vadd.f32 %v349, %v350
    %v352 = vsel %vm273, %v333, 0.0
    %v353 = vadd.f32 %v351, %v352
    %v354 = vsel %vm273, %v334, 0.0
    %v355 = vadd.f32 %v353, %v354
    %v356 = vsel %vm273, %v335, 0.0
    %v357 = vadd.f32 %v355, %v356
    %v358 = vsel %vm273, %v336, 0.0
    %v359 = vadd.f32 %v357, %v358
    %v360 = vsel %vm273, %v337, 0.0
    %v361 = vadd.f32 %v359, %v360
    %v362 = vsel %vm273, %v338, 0.0
    %v363 = vadd.f32 %v361, %v362
    %v364 = vsel %vm273, %v339, 0.0
    %v365 = vadd.f32 %v363, %v364
    %v366 = vsel %vm273, %v340, 0.0
    %v367 = vadd.f32 %v365, %v366
    %v368 = vsel %vm273, %v341, 0.0
    %v369 = vadd.f32 %v367, %v368
    %v370 = vsel %vm273, %v342, 0.0
    %v371 = vadd.f32 %v369, %v370
    %v372 = vsel %vm273, %v343, 0.0
    %v373 = vadd.f32 %v371, %v372
    %v374 = vsel %vm273, %v344, 0.0
    %v375 = vadd.f32 %v373, %v374
    %v376 = vrot.slane %v375, 4
    %v377 = vadd.f32 %v375, %v376
    %v378 = vrot.slane %v377, 2
    %v379 = vadd.f32 %v377, %v378
    %v380 = vrot.slane %v379, 1
    %v381 = vadd.f32 %v379, %v380
    %v382 = vmul.f32 %v381, %v311
    %v383 = vadd.f32 %v382, 1e-05
    %v384 = vrsqrt.pop %v383
    %v385 = vmul.f32 %v313, %v384
    %v386 = vmul.f32 %v314, %v384
    %v387 = vmul.f32 %v315, %v384
    %v388 = vmul.f32 %v316, %v384
    %v389 = vmul.f32 %v317, %v384
    %v390 = vmul.f32 %v318, %v384
    %v391 = vmul.f32 %v319, %v384
    %v392 = vmul.f32 %v320, %v384
    %v393 = vmul.f32 %v321, %v384
    %v394 = vmul.f32 %v322, %v384
    %v395 = vmul.f32 %v323, %v384
    %v396 = vmul.f32 %v324, %v384
    %v397 = vmul.f32 %v325, %v384
    %v398 = vmul.f32 %v326, %v384
    %v399 = vmul.f32 %v327, %v384
    %v400 = vmul.f32 %v328, %v384
    %v402 = vlaneseq
    %v403 = vshrl.u32 %v402, 7
    %v404 = vsub.s32 0, %v403
    %v405 = vrot.slane %v271, %v404
    %v407 = vmul.f32 %v405, %v385
    %v408 = vmul.f32 %v405, %v386
    %v409 = vmul.f32 %v405, %v387
    %v410 = vmul.f32 %v405, %v388
    %v411 = vmul.f32 %v405, %v389
    %v412 = vmul.f32 %v405, %v390
    %v413 = vmul.f32 %v405, %v391
    %v414 = vmul.f32 %v405, %v392
    %v415 = vmul.f32 %v405, %v393
    %v416 = vmul.f32 %v405, %v394
    %v417 = vmul.f32 %v405, %v395
    %v418 = vmul.f32 %v405, %v396
    %v419 = vmul.f32 %v405, %v397
    %v420 = vmul.f32 %v405, %v398
    %v421 = vmul.f32 %v405, %v399
    %v422 = vmul.f32 %v405, %v400
    %v424 = vlaneseq
    %v425 = vshrl.u32 %v424, 7
    %v426 = vsub.s32 0, %v425
    %v427 = vrot.slane %v272, %v426
    %v429 = vadd.f32 %v407, %v427
    %v430 = vadd.f32 %v408, %v427
    %v431 = vadd.f32 %v409, %v427
    %v432 = vadd.f32 %v410, %v427
    %v433 = vadd.f32 %v411, %v427
    %v434 = vadd.f32 %v412, %v427
    %v435 = vadd.f32 %v413, %v427
    %v436 = vadd.f32 %v414, %v427
    %v437 = vadd.f32 %v415, %v427
    %v438 = vadd.f32 %v416, %v427
    %v439 = vadd.f32 %v417, %v427
    %v440 = vadd.f32 %v418, %v427
    %v441 = vadd.f32 %v419, %v427
    %v442 = vadd.f32 %v420, %v427
    %v443 = vadd.f32 %v421, %v427
    %v444 = vadd.f32 %v422, %v427
    %v445 = vmax.f32 %v429, 0.0
    %v446 = vmax.f32 %v430, 0.0
    %v447 = vmax.f32 %v431, 0.0
    %v448 = vmax.f32 %v432, 0.0
    %v449 = vmax.f32 %v433, 0.0
    %v450 = vmax.f32 %v434, 0.0
    %v451 = vmax.f32 %v435, 0.0
    %v452 = vmax.f32 %v436, 0.0
    %v453 = vmax.f32 %v437, 0.0
    %v454 = vmax.f32 %v438, 0.0
    %v455 = vmax.f32 %v439, 0.0
    %v456 = vmax.f32 %v440, 0.0
    %v457 = vmax.f32 %v441, 0.0
    %v458 = vmax.f32 %v442, 0.0
    %v459 = vmax.f32 %v443, 0.0
    %v460 = vmax.f32 %v444, 0.0
    %461 = vst.msk [vmem:[#allocation2] sm:$0xff] %vm273, %v445
    %462 = vst.msk [vmem:[#allocation2 + $0x8] sm:$0xff] %vm273, %v446
    %463 = vst.msk [vmem:[#allocation2 + $0x10] sm:$0xff] %vm273, %v447
    %464 = vst.msk [vmem:[#allocation2 + $0x18] sm:$0xff] %vm273, %v448
    %465 = vst.msk [vmem:[#allocation2 + $0x20] sm:$0xff] %vm273, %v449
    %466 = vst.msk [vmem:[#allocation2 + $0x28] sm:$0xff] %vm273, %v450
    %467 = vst.msk [vmem:[#allocation2 + $0x30] sm:$0xff] %vm273, %v451
    %468 = vst.msk [vmem:[#allocation2 + $0x38] sm:$0xff] %vm273, %v452
    %469 = vst.msk [vmem:[#allocation2 + $0x40] sm:$0xff] %vm273, %v453
    %470 = vst.msk [vmem:[#allocation2 + $0x48] sm:$0xff] %vm273, %v454
    %471 = vst.msk [vmem:[#allocation2 + $0x50] sm:$0xff] %vm273, %v455
    %472 = vst.msk [vmem:[#allocation2 + $0x58] sm:$0xff] %vm273, %v456
    %473 = vst.msk [vmem:[#allocation2 + $0x60] sm:$0xff] %vm273, %v457
    %474 = vst.msk [vmem:[#allocation2 + $0x68] sm:$0xff] %vm273, %v458
    %475 = vst.msk [vmem:[#allocation2 + $0x70] sm:$0xff] %vm273, %v459
    %476 = vst.msk [vmem:[#allocation2 + $0x78] sm:$0xff] %vm273, %v460
    %477 = vst.msk [vmem:[#allocation3] sm:$0xff] %vm273, 0.0
    %478 = vst.msk [vmem:[#allocation3 + $0x8] sm:$0xff] %vm273, 0.0
    %479 = vst.msk [vmem:[#allocation3 + $0x10] sm:$0xff] %vm273, 0.0
    %vm480 = vcmask 253952
    %481 = vst.msk [vmem:[#allocation3 + $0x18] sm:$0x1] %vm480, 0.0
    %482 = vst.msk [vmem:[#allocation3 + $0x20] sm:$0xff] %vm273, 0.0
    %483 = vst.msk [vmem:[#allocation3 + $0x28] sm:$0xff] %vm273, 0.0
    %484 = vst.msk [vmem:[#allocation3 + $0x30] sm:$0xff] %vm273, 0.0
    %485 = vst.msk [vmem:[#allocation3 + $0x38] sm:$0x1] %vm480, 0.0
    %486 = vst.msk [vmem:[#allocation4] sm:$0xff] %vm273, 0.0
    %487 = vst.msk [vmem:[#allocation4 + $0x8] sm:$0xff] %vm273, 0.0
    %488 = vst.msk [vmem:[#allocation4 + $0x10] sm:$0xff] %vm273, 0.0
    %489 = vst.msk [vmem:[#allocation4 + $0x18] sm:$0x1] %vm480, 0.0
    %490 = vst.msk [vmem:[#allocation4 + $0x20] sm:$0xff] %vm273, 0.0
    %491 = vst.msk [vmem:[#allocation4 + $0x28] sm:$0xff] %vm273, 0.0
    %492 = vst.msk [vmem:[#allocation4 + $0x30] sm:$0xff] %vm273, 0.0
    %493 = vst.msk [vmem:[#allocation4 + $0x38] sm:$0x1] %vm480, 0.0
    %494 = vst.msk [vmem:[#allocation5] sm:$0xff] %vm273, 0.0
    %495 = vst.msk [vmem:[#allocation5 + $0x8] sm:$0xff] %vm273, 0.0
    %496 = vst.msk [vmem:[#allocation5 + $0x10] sm:$0xff] %vm273, 0.0
    %497 = vst.msk [vmem:[#allocation5 + $0x18] sm:$0x1] %vm480, 0.0
    %498 = vst.msk [vmem:[#allocation5 + $0x20] sm:$0xff] %vm273, 0.0
    %499 = vst.msk [vmem:[#allocation5 + $0x28] sm:$0xff] %vm273, 0.0
    %500 = vst.msk [vmem:[#allocation5 + $0x30] sm:$0xff] %vm273, 0.0
    %501 = vst.msk [vmem:[#allocation5 + $0x38] sm:$0x1] %vm480, 0.0
    %502 = vst.msk [vmem:[#allocation6] sm:$0xff] %vm273, 0.0
    %503 = vst.msk [vmem:[#allocation6 + $0x8] sm:$0xff] %vm273, 0.0
    %504 = vst.msk [vmem:[#allocation6 + $0x10] sm:$0xff] %vm273, 0.0
    %505 = vst.msk [vmem:[#allocation6 + $0x18] sm:$0x1] %vm480, 0.0
    %506 = vst.msk [vmem:[#allocation6 + $0x20] sm:$0xff] %vm273, 0.0
    %507 = vst.msk [vmem:[#allocation6 + $0x28] sm:$0xff] %vm273, 0.0
    %508 = vst.msk [vmem:[#allocation6 + $0x30] sm:$0xff] %vm273, 0.0
    %509 = vst.msk [vmem:[#allocation6 + $0x38] sm:$0x1] %vm480, 0.0
    %v510 = vld [vmem:[#allocation2] sm:$0xf]
    %vm511 = vcmask 257024
    %512 = vst.msk [vmem:[#allocation6] sm:$0xf] %vm511, %v510
    %v513 = vld [vmem:[#allocation2 + $0x4] sm:$0xf]
    %514 = vst.msk [vmem:[#allocation6 + $0x5] sm:$0xf] %vm511, %v513
    %v515 = vld [vmem:[#allocation2 + $0x8] sm:$0xf]
    %516 = vst.msk [vmem:[#allocation6 + $0xa] sm:$0xf] %vm511, %v515
    %v517 = vld [vmem:[#allocation2 + $0xc] sm:$0xf]
    %518 = vst.msk [vmem:[#allocation6 + $0xf] sm:$0xf] %vm511, %v517
    %v519 = vld [vmem:[#allocation2 + $0x10] sm:$0xf]
    %s520 = scalar_lea.vmem [#allocation6], 32
    %521 = vst.msk [vmem:[%s520] sm:$0xf] %vm511, %v519
    %v522 = vld [vmem:[#allocation2 + $0x14] sm:$0xf]
    %523 = vst.msk [vmem:[%s520 + $0x5] sm:$0xf] %vm511, %v522
    %v524 = vld [vmem:[#allocation2 + $0x18] sm:$0xf]
    %525 = vst.msk [vmem:[%s520 + $0xa] sm:$0xf] %vm511, %v524
    %v526 = vld [vmem:[#allocation2 + $0x1c] sm:$0xf]
    %527 = vst.msk [vmem:[%s520 + $0xf] sm:$0xf] %vm511, %v526
    %v528 = vld [vmem:[#allocation2 + $0x20] sm:$0xf]
    %529 = vst.msk [vmem:[#allocation5 + $0x1] sm:$0xf] %vm511, %v528
    %v530 = vld [vmem:[#allocation2 + $0x24] sm:$0xf]
    %531 = vst.msk [vmem:[#allocation5 + $0x6] sm:$0xf] %vm511, %v530
    %v532 = vld [vmem:[#allocation2 + $0x28] sm:$0xf]
    %533 = vst.msk [vmem:[#allocation5 + $0xb] sm:$0xf] %vm511, %v532
    %v534 = vld [vmem:[#allocation2 + $0x2c] sm:$0xf]
    %535 = vst.msk [vmem:[#allocation5 + $0x10] sm:$0xf] %vm511, %v534
    %v536 = vld [vmem:[#allocation2 + $0x30] sm:$0xf]
    %s537 = scalar_lea.vmem [#allocation5], 32
    %538 = vst.msk [vmem:[%s537 + $0x1] sm:$0xf] %vm511, %v536
    %v539 = vld [vmem:[#allocation2 + $0x34] sm:$0xf]
    %540 = vst.msk [vmem:[%s537 + $0x6] sm:$0xf] %vm511, %v539
    %v541 = vld [vmem:[#allocation2 + $0x38] sm:$0xf]
    %542 = vst.msk [vmem:[%s537 + $0xb] sm:$0xf] %vm511, %v541
    %v543 = vld [vmem:[#allocation2 + $0x3c] sm:$0xf]
    %544 = vst.msk [vmem:[%s537 + $0x10] sm:$0xf] %vm511, %v543
    %v545 = vld [vmem:[#allocation2 + $0x40] sm:$0xf]
    %546 = vst.msk [vmem:[#allocation4 + $0x5] sm:$0xf] %vm511, %v545
    %v547 = vld [vmem:[#allocation2 + $0x44] sm:$0xf]
    %548 = vst.msk [vmem:[#allocation4 + $0xa] sm:$0xf] %vm511, %v547
    %v549 = vld [vmem:[#allocation2 + $0x48] sm:$0xf]
    %550 = vst.msk [vmem:[#allocation4 + $0xf] sm:$0xf] %vm511, %v549
    %v551 = vld [vmem:[#allocation2 + $0x4c] sm:$0xf]
    %552 = vst.msk [vmem:[#allocation4 + $0x14] sm:$0xf] %vm511, %v551
    %v553 = vld [vmem:[#allocation2 + $0x50] sm:$0xf]
    %s554 = scalar_lea.vmem [#allocation4], 32
    %555 = vst.msk [vmem:[%s554 + $0x5] sm:$0xf] %vm511, %v553
    %v556 = vld [vmem:[#allocation2 + $0x54] sm:$0xf]
    %557 = vst.msk [vmem:[%s554 + $0xa] sm:$0xf] %vm511, %v556
    %v558 = vld [vmem:[#allocation2 + $0x58] sm:$0xf]
    %559 = vst.msk [vmem:[%s554 + $0xf] sm:$0xf] %vm511, %v558
    %v560 = vld [vmem:[#allocation2 + $0x5c] sm:$0xf]
    %561 = vst.msk [vmem:[%s554 + $0x14] sm:$0xf] %vm511, %v560
    %v562 = vld [vmem:[#allocation2 + $0x60] sm:$0xf]
    %563 = vst.msk [vmem:[#allocation3 + $0x6] sm:$0xf] %vm511, %v562
    %v564 = vld [vmem:[#allocation2 + $0x64] sm:$0xf]
    %565 = vst.msk [vmem:[#allocation3 + $0xb] sm:$0xf] %vm511, %v564
    %v566 = vld [vmem:[#allocation2 + $0x68] sm:$0xf]
    %567 = vst.msk [vmem:[#allocation3 + $0x10] sm:$0xf] %vm511, %v566
    %v568 = vld [vmem:[#allocation2 + $0x6c] sm:$0xf]
    %569 = vst.msk [vmem:[#allocation3 + $0x15] sm:$0xf] %vm511, %v568
    %v570 = vld [vmem:[#allocation2 + $0x70] sm:$0xf]
    %s571 = scalar_lea.vmem [#allocation3], 32
    %572 = vst.msk [vmem:[%s571 + $0x6] sm:$0xf] %vm511, %v570
    %v573 = vld [vmem:[#allocation2 + $0x74] sm:$0xf]
    %574 = vst.msk [vmem:[%s571 + $0xb] sm:$0xf] %vm511, %v573
    %v575 = vld [vmem:[#allocation2 + $0x78] sm:$0xf]
    %576 = vst.msk [vmem:[%s571 + $0x10] sm:$0xf] %vm511, %v575
    %v577 = vld [vmem:[#allocation2 + $0x7c] sm:$0xf]
    %578 = vst.msk [vmem:[%s571 + $0x15] sm:$0xf] %vm511, %v577
    %v579 = vld [vmem:[#allocation3] sm:$0xf]
    %580 = vst.msk [vmem:[#allocation7] sm:$0xf] %vm511, %v579
    %v581 = vld [vmem:[#allocation3 + $0x5] sm:$0xf]
    %v583 = vrot.slane %v581, 4
    %vm585 = vcmask 261124
    %586 = vst.msk [vmem:[#allocation7] sm:$0xf0] %vm585, %v583
    %v587 = vld [vmem:[#allocation3 + $0xa] sm:$0xf]
    %588 = vst.msk [vmem:[#allocation7 + $0x18] sm:$0xf] %vm511, %v587
    %v589 = vld [vmem:[#allocation3 + $0xf] sm:$0xf]
    %v591 = vrot.slane %v589, 4
    %593 = vst.msk [vmem:[#allocation7 + $0x18] sm:$0xf0] %vm585, %v591
    %v594 = vld [vmem:[%s571] sm:$0xf]
    %595 = vst.msk [vmem:[#allocation7 + $0x30] sm:$0xf] %vm511, %v594
    %v596 = vld [vmem:[%s571 + $0x5] sm:$0xf]
    %v598 = vrot.slane %v596, 4
    %600 = vst.msk [vmem:[#allocation7 + $0x30] sm:$0xf0] %vm585, %v598
    %v601 = vld [vmem:[%s571 + $0xa] sm:$0xf]
    %602 = vst.msk [vmem:[#allocation7 + $0x48] sm:$0xf] %vm511, %v601
    %v603 = vld [vmem:[%s571 + $0xf] sm:$0xf]
    %v605 = vrot.slane %v603, 4
    %607 = vst.msk [vmem:[#allocation7 + $0x48] sm:$0xf0] %vm585, %v605
    %v608 = vld [vmem:[#allocation4] sm:$0xf]
    %610 = vrot.lane.b32.xlu0 %v608, 32
    %v611 = vpop.permute.xlu0 %610
    %vm613 = vcmask 519424
    %614 = vst.msk [vmem:[#allocation7] sm:$0xf] %vm613, %v611
    %v615 = vld [vmem:[#allocation4 + $0x5] sm:$0xf]
    %v617 = vrot.slane %v615, 4
    %618 = vrot.lane.b32.xlu0 %v617, 32
    %v619 = vpop.permute.xlu0 %618
    %vm621 = vcmask 523524
    %622 = vst.msk [vmem:[#allocation7] sm:$0xf0] %vm621, %v619
    %v623 = vld [vmem:[#allocation4 + $0xa] sm:$0xf]
    %625 = vrot.lane.b32.xlu0 %v623, 32
    %v626 = vpop.permute.xlu0 %625
    %628 = vst.msk [vmem:[#allocation7 + $0x18] sm:$0xf] %vm613, %v626
    %v629 = vld [vmem:[#allocation4 + $0xf] sm:$0xf]
    %v631 = vrot.slane %v629, 4
    %632 = vrot.lane.b32.xlu0 %v631, 32
    %v633 = vpop.permute.xlu0 %632
    %635 = vst.msk [vmem:[#allocation7 + $0x18] sm:$0xf0] %vm621, %v633
    %v636 = vld [vmem:[%s554] sm:$0xf]
    %638 = vrot.lane.b32.xlu0 %v636, 32
    %v639 = vpop.permute.xlu0 %638
    %641 = vst.msk [vmem:[#allocation7 + $0x30] sm:$0xf] %vm613, %v639
    %v642 = vld [vmem:[%s554 + $0x5] sm:$0xf]
    %v644 = vrot.slane %v642, 4
    %645 = vrot.lane.b32.xlu0 %v644, 32
    %v646 = vpop.permute.xlu0 %645
    %648 = vst.msk [vmem:[#allocation7 + $0x30] sm:$0xf0] %vm621, %v646
    %v649 = vld [vmem:[%s554 + $0xa] sm:$0xf]
    %651 = vrot.lane.b32.xlu0 %v649, 32
    %v652 = vpop.permute.xlu0 %651
    %654 = vst.msk [vmem:[#allocation7 + $0x48] sm:$0xf] %vm613, %v652
    %v655 = vld [vmem:[%s554 + $0xf] sm:$0xf]
    %v657 = vrot.slane %v655, 4
    %658 = vrot.lane.b32.xlu0 %v657, 32
    %v659 = vpop.permute.xlu0 %658
    %661 = vst.msk [vmem:[#allocation7 + $0x48] sm:$0xf0] %vm621, %v659
    %v662 = vld [vmem:[#allocation3 + $0x1] sm:$0xf]
    %664 = vrot.lane.b32.xlu0 %v662, 64
    %v665 = vpop.permute.xlu0 %664
    %vm667 = vcmask 781824
    %668 = vst.msk [vmem:[#allocation7] sm:$0xf] %vm667, %v665
    %v669 = vld [vmem:[#allocation3 + $0x6] sm:$0xf]
    %v671 = vrot.slane %v669, 4
    %672 = vrot.lane.b32.xlu0 %v671, 64
    %v673 = vpop.permute.xlu0 %672
    %vm675 = vcmask 785924
    %676 = vst.msk [vmem:[#allocation7] sm:$0xf0] %vm675, %v673
    %v677 = vld [vmem:[#allocation3 + $0xb] sm:$0xf]
    %679 = vrot.lane.b32.xlu0 %v677, 64
    %v680 = vpop.permute.xlu0 %679
    %682 = vst.msk [vmem:[#allocation7 + $0x18] sm:$0xf] %vm667, %v680
    %v683 = vld [vmem:[#allocation3 + $0x10] sm:$0xf]
    %v685 = vrot.slane %v683, 4
    %686 = vrot.lane.b32.xlu0 %v685, 64
    %v687 = vpop.permute.xlu0 %686
    %689 = vst.msk [vmem:[#allocation7 + $0x18] sm:$0xf0] %vm675, %v687
    %v690 = vld [vmem:[%s571 + $0x1] sm:$0xf]
    %692 = vrot.lane.b32.xlu0 %v690, 64
    %v693 = vpop.permute.xlu0 %692
    %695 = vst.msk [vmem:[#allocation7 + $0x30] sm:$0xf] %vm667, %v693
    %v696 = vld [vmem:[%s571 + $0x6] sm:$0xf]
    %v698 = vrot.slane %v696, 4
    %699 = vrot.lane.b32.xlu0 %v698, 64
    %v700 = vpop.permute.xlu0 %699
    %702 = vst.msk [vmem:[#allocation7 + $0x30] sm:$0xf0] %vm675, %v700
    %v703 = vld [vmem:[%s571 + $0xb] sm:$0xf]
    %705 = vrot.lane.b32.xlu0 %v703, 64
    %v706 = vpop.permute.xlu0 %705
    %708 = vst.msk [vmem:[#allocation7 + $0x48] sm:$0xf] %vm667, %v706
    %v709 = vld [vmem:[%s571 + $0x10] sm:$0xf]
    %v711 = vrot.slane %v709, 4
    %712 = vrot.lane.b32.xlu0 %v711, 64
    %v713 = vpop.permute.xlu0 %712
    %715 = vst.msk [vmem:[#allocation7 + $0x48] sm:$0xf0] %vm675, %v713
    %v716 = vld [vmem:[#allocation5] sm:$0xf]
    %718 = vrot.lane.b32.xlu0 %v716, 96
    %v719 = vpop.permute.xlu0 %718
    %vm721 = vcmask 1044224
    %722 = vst.msk [vmem:[#allocation7] sm:$0xf] %vm721, %v719
    %v723 = vld [vmem:[#allocation5 + $0x5] sm:$0xf]
    %v725 = vrot.slane %v723, 4
    %726 = vrot.lane.b32.xlu0 %v725, 96
    %v727 = vpop.permute.xlu0 %726
    %vm729 = vcmask 1048324
    %730 = vst.msk [vmem:[#allocation7] sm:$0xf0] %vm729, %v727
    %v731 = vld [vmem:[#allocation5 + $0xa] sm:$0xf]
    %733 = vrot.lane.b32.xlu0 %v731, 96
    %v734 = vpop.permute.xlu0 %733
    %736 = vst.msk [vmem:[#allocation7 + $0x18] sm:$0xf] %vm721, %v734
    %v737 = vld [vmem:[#allocation5 + $0xf] sm:$0xf]
    %v739 = vrot.slane %v737, 4
    %740 = vrot.lane.b32.xlu0 %v739, 96
    %v741 = vpop.permute.xlu0 %740
    %743 = vst.msk [vmem:[#allocation7 + $0x18] sm:$0xf0] %vm729, %v741
    %v744 = vld [vmem:[%s537] sm:$0xf]
    %746 = vrot.lane.b32.xlu0 %v744, 96
    %v747 = vpop.permute.xlu0 %746
    %749 = vst.msk [vmem:[#allocation7 + $0x30] sm:$0xf] %vm721, %v747
    %v750 = vld [vmem:[%s537 + $0x5] sm:$0xf]
    %v752 = vrot.slane %v750, 4
    %753 = vrot.lane.b32.xlu0 %v752, 96
    %v754 = vpop.permute.xlu0 %753
    %756 = vst.msk [vmem:[#allocation7 + $0x30] sm:$0xf0] %vm729, %v754
    %v757 = vld [vmem:[%s537 + $0xa] sm:$0xf]
    %759 = vrot.lane.b32.xlu0 %v757, 96
    %v760 = vpop.permute.xlu0 %759
    %762 = vst.msk [vmem:[#allocation7 + $0x48] sm:$0xf] %vm721, %v760
    %v763 = vld [vmem:[%s537 + $0xf] sm:$0xf]
    %v765 = vrot.slane %v763, 4
    %766 = vrot.lane.b32.xlu0 %v765, 96
    %v767 = vpop.permute.xlu0 %766
    %769 = vst.msk [vmem:[#allocation7 + $0x48] sm:$0xf0] %vm729, %v767
    %v770 = vld [vmem:[#allocation6] sm:$0xf]
    %771 = vst.msk [vmem:[#allocation7 + $0x8] sm:$0xf] %vm511, %v770
    %v772 = vld [vmem:[#allocation6 + $0x5] sm:$0xf]
    %v774 = vrot.slane %v772, 4
    %776 = vst.msk [vmem:[#allocation7 + $0x8] sm:$0xf0] %vm585, %v774
    %v777 = vld [vmem:[#allocation6 + $0xa] sm:$0xf]
    %778 = vst.msk [vmem:[#allocation7 + $0x20] sm:$0xf] %vm511, %v777
    %v779 = vld [vmem:[#allocation6 + $0xf] sm:$0xf]
    %v781 = vrot.slane %v779, 4
    %783 = vst.msk [vmem:[#allocation7 + $0x20] sm:$0xf0] %vm585, %v781
    %v784 = vld [vmem:[%s520] sm:$0xf]
    %785 = vst.msk [vmem:[#allocation7 + $0x38] sm:$0xf] %vm511, %v784
    %v786 = vld [vmem:[%s520 + $0x5] sm:$0xf]
    %v788 = vrot.slane %v786, 4
    %790 = vst.msk [vmem:[#allocation7 + $0x38] sm:$0xf0] %vm585, %v788
    %v791 = vld [vmem:[%s520 + $0xa] sm:$0xf]
    %792 = vst.msk [vmem:[#allocation7 + $0x50] sm:$0xf] %vm511, %v791
    %v793 = vld [vmem:[%s520 + $0xf] sm:$0xf]
    %v795 = vrot.slane %v793, 4
    %797 = vst.msk [vmem:[#allocation7 + $0x50] sm:$0xf0] %vm585, %v795
    %v798 = vld [vmem:[#allocation5 + $0x1] sm:$0xf]
    %800 = vrot.lane.b32.xlu0 %v798, 32
    %v801 = vpop.permute.xlu0 %800
    %803 = vst.msk [vmem:[#allocation7 + $0x8] sm:$0xf] %vm613, %v801
    %v804 = vld [vmem:[#allocation5 + $0x6] sm:$0xf]
    %v806 = vrot.slane %v804, 4
    %807 = vrot.lane.b32.xlu0 %v806, 32
    %v808 = vpop.permute.xlu0 %807
    %810 = vst.msk [vmem:[#allocation7 + $0x8] sm:$0xf0] %vm621, %v808
    %v811 = vld [vmem:[#allocation5 + $0xb] sm:$0xf]
    %813 = vrot.lane.b32.xlu0 %v811, 32
    %v814 = vpop.permute.xlu0 %813
    %816 = vst.msk [vmem:[#allocation7 + $0x20] sm:$0xf] %vm613, %v814
    %v817 = vld [vmem:[#allocation5 + $0x10] sm:$0xf]
    %v819 = vrot.slane %v817, 4
    %820 = vrot.lane.b32.xlu0 %v819, 32
    %v821 = vpop.permute.xlu0 %820
    %823 = vst.msk [vmem:[#allocation7 + $0x20] sm:$0xf0] %vm621, %v821
    %v824 = vld [vmem:[%s537 + $0x1] sm:$0xf]
    %826 = vrot.lane.b32.xlu0 %v824, 32
    %v827 = vpop.permute.xlu0 %826
    %829 = vst.msk [vmem:[#allocation7 + $0x38] sm:$0xf] %vm613, %v827
    %v830 = vld [vmem:[%s537 + $0x6] sm:$0xf]
    %v832 = vrot.slane %v830, 4
    %833 = vrot.lane.b32.xlu0 %v832, 32
    %v834 = vpop.permute.xlu0 %833
    %836 = vst.msk [vmem:[#allocation7 + $0x38] sm:$0xf0] %vm621, %v834
    %v837 = vld [vmem:[%s537 + $0xb] sm:$0xf]
    %839 = vrot.lane.b32.xlu0 %v837, 32
    %v840 = vpop.permute.xlu0 %839
    %842 = vst.msk [vmem:[#allocation7 + $0x50] sm:$0xf] %vm613, %v840
    %v843 = vld [vmem:[%s537 + $0x10] sm:$0xf]
    %v845 = vrot.slane %v843, 4
    %846 = vrot.lane.b32.xlu0 %v845, 32
    %v847 = vpop.permute.xlu0 %846
    %849 = vst.msk [vmem:[#allocation7 + $0x50] sm:$0xf0] %vm621, %v847
    %v850 = vld [vmem:[#allocation3 + $0x5] sm:$0xf]
    %852 = vrot.lane.b32.xlu0 %v850, 64
    %v853 = vpop.permute.xlu0 %852
    %855 = vst.msk [vmem:[#allocation7 + $0x8] sm:$0xf] %vm667, %v853
    %v856 = vld [vmem:[#allocation3 + $0xa] sm:$0xf]
    %v858 = vrot.slane %v856, 4
    %859 = vrot.lane.b32.xlu0 %v858, 64
    %v860 = vpop.permute.xlu0 %859
    %862 = vst.msk [vmem:[#allocation7 + $0x8] sm:$0xf0] %vm675, %v860
    %v863 = vld [vmem:[#allocation3 + $0xf] sm:$0xf]
    %865 = vrot.lane.b32.xlu0 %v863, 64
    %v866 = vpop.permute.xlu0 %865
    %868 = vst.msk [vmem:[#allocation7 + $0x20] sm:$0xf] %vm667, %v866
    %v869 = vld [vmem:[#allocation3 + $0x14] sm:$0xf]
    %v871 = vrot.slane %v869, 4
    %872 = vrot.lane.b32.xlu0 %v871, 64
    %v873 = vpop.permute.xlu0 %872
    %875 = vst.msk [vmem:[#allocation7 + $0x20] sm:$0xf0] %vm675, %v873
    %v876 = vld [vmem:[%s571 + $0x5] sm:$0xf]
    %878 = vrot.lane.b32.xlu0 %v876, 64
    %v879 = vpop.permute.xlu0 %878
    %881 = vst.msk [vmem:[#allocation7 + $0x38] sm:$0xf] %vm667, %v879
    %v882 = vld [vmem:[%s571 + $0xa] sm:$0xf]
    %v884 = vrot.slane %v882, 4
    %885 = vrot.lane.b32.xlu0 %v884, 64
    %v886 = vpop.permute.xlu0 %885
    %888 = vst.msk [vmem:[#allocation7 + $0x38] sm:$0xf0] %vm675, %v886
    %v889 = vld [vmem:[%s571 + $0xf] sm:$0xf]
    %891 = vrot.lane.b32.xlu0 %v889, 64
    %v892 = vpop.permute.xlu0 %891
    %894 = vst.msk [vmem:[#allocation7 + $0x50] sm:$0xf] %vm667, %v892
    %v895 = vld [vmem:[%s571 + $0x14] sm:$0xf]
    %v897 = vrot.slane %v895, 4
    %898 = vrot.lane.b32.xlu0 %v897, 64
    %v899 = vpop.permute.xlu0 %898
    %901 = vst.msk [vmem:[#allocation7 + $0x50] sm:$0xf0] %vm675, %v899
    %v902 = vld [vmem:[#allocation4 + $0x5] sm:$0xf]
    %904 = vrot.lane.b32.xlu0 %v902, 96
    %v905 = vpop.permute.xlu0 %904
    %907 = vst.msk [vmem:[#allocation7 + $0x8] sm:$0xf] %vm721, %v905
    %v908 = vld [vmem:[#allocation4 + $0xa] sm:$0xf]
    %v910 = vrot.slane %v908, 4
    %911 = vrot.lane.b32.xlu0 %v910, 96
    %v912 = vpop.permute.xlu0 %911
    %914 = vst.msk [vmem:[#allocation7 + $0x8] sm:$0xf0] %vm729, %v912
    %v915 = vld [vmem:[#allocation4 + $0xf] sm:$0xf]
    %917 = vrot.lane.b32.xlu0 %v915, 96
    %v918 = vpop.permute.xlu0 %917
    %920 = vst.msk [vmem:[#allocation7 + $0x20] sm:$0xf] %vm721, %v918
    %v921 = vld [vmem:[#allocation4 + $0x14] sm:$0xf]
    %v923 = vrot.slane %v921, 4
    %924 = vrot.lane.b32.xlu0 %v923, 96
    %v925 = vpop.permute.xlu0 %924
    %927 = vst.msk [vmem:[#allocation7 + $0x20] sm:$0xf0] %vm729, %v925
    %v928 = vld [vmem:[%s554 + $0x5] sm:$0xf]
    %930 = vrot.lane.b32.xlu0 %v928, 96
    %v931 = vpop.permute.xlu0 %930
    %933 = vst.msk [vmem:[#allocation7 + $0x38] sm:$0xf] %vm721, %v931
    %v934 = vld [vmem:[%s554 + $0xa] sm:$0xf]
    %v936 = vrot.slane %v934, 4
    %937 = vrot.lane.b32.xlu0 %v936, 96
    %v938 = vpop.permute.xlu0 %937
    %940 = vst.msk [vmem:[#allocation7 + $0x38] sm:$0xf0] %vm729, %v938
    %v941 = vld [vmem:[%s554 + $0xf] sm:$0xf]
    %943 = vrot.lane.b32.xlu0 %v941, 96
    %v944 = vpop.permute.xlu0 %943
    %946 = vst.msk [vmem:[#allocation7 + $0x50] sm:$0xf] %vm721, %v944
    %v947 = vld [vmem:[%s554 + $0x14] sm:$0xf]
    %v949 = vrot.slane %v947, 4
    %950 = vrot.lane.b32.xlu0 %v949, 96
    %v951 = vpop.permute.xlu0 %950
    %953 = vst.msk [vmem:[#allocation7 + $0x50] sm:$0xf0] %vm729, %v951
    %v954 = vld [vmem:[#allocation3 + $0x6] sm:$0xf]
    %955 = vst.msk [vmem:[#allocation7 + $0x10] sm:$0xf] %vm511, %v954
    %v956 = vld [vmem:[#allocation3 + $0xb] sm:$0xf]
    %v958 = vrot.slane %v956, 4
    %960 = vst.msk [vmem:[#allocation7 + $0x10] sm:$0xf0] %vm585, %v958
    %v961 = vld [vmem:[#allocation3 + $0x10] sm:$0xf]
    %962 = vst.msk [vmem:[#allocation7 + $0x28] sm:$0xf] %vm511, %v961
    %v963 = vld [vmem:[#allocation3 + $0x15] sm:$0xf]
    %v965 = vrot.slane %v963, 4
    %967 = vst.msk [vmem:[#allocation7 + $0x28] sm:$0xf0] %vm585, %v965
    %v968 = vld [vmem:[%s571 + $0x6] sm:$0xf]
    %969 = vst.msk [vmem:[#allocation7 + $0x40] sm:$0xf] %vm511, %v968
    %v970 = vld [vmem:[%s571 + $0xb] sm:$0xf]
    %v972 = vrot.slane %v970, 4
    %974 = vst.msk [vmem:[#allocation7 + $0x40] sm:$0xf0] %vm585, %v972
    %v975 = vld [vmem:[%s571 + $0x10] sm:$0xf]
    %976 = vst.msk [vmem:[#allocation7 + $0x58] sm:$0xf] %vm511, %v975
    %v977 = vld [vmem:[%s571 + $0x15] sm:$0xf]
    %v979 = vrot.slane %v977, 4
    %981 = vst.msk [vmem:[#allocation7 + $0x58] sm:$0xf0] %vm585, %v979
    %v982 = vld [vmem:[#allocation7] sm:$0xff]
    %v983 = vld [vmem:[#allocation7 + $0x8] sm:$0xff]
    %v984 = vld [vmem:[#allocation7 + $0x10] sm:$0xff]
    %v985 = vld [vmem:[#allocation7 + $0x18] sm:$0xff]
    %v986 = vld [vmem:[#allocation7 + $0x20] sm:$0xff]
    %v987 = vld [vmem:[#allocation7 + $0x28] sm:$0xff]
    %v988 = vld [vmem:[#allocation7 + $0x30] sm:$0xff]
    %v989 = vld [vmem:[#allocation7 + $0x38] sm:$0xff]
    %v990 = vld [vmem:[#allocation7 + $0x40] sm:$0xff]
    %v991 = vld [vmem:[#allocation7 + $0x48] sm:$0xff]
    %v992 = vld [vmem:[#allocation7 + $0x50] sm:$0xff]
    %v993 = vld [vmem:[#allocation7 + $0x58] sm:$0xff]
    %v994 = vld [vmem:[%s5] sm:$0xff]
    %v995 = vld [vmem:[%s5 + $0x8] sm:$0xff]
    %v996 = vld [vmem:[%s5 + $0x10] sm:$0xff]
    %v997 = vld [vmem:[%s5 + $0x18] sm:$0xff]
    %v998 = vld [vmem:[%s5 + $0x20] sm:$0xff]
    %v999 = vld [vmem:[%s5 + $0x28] sm:$0xff]
    %v1000 = vld [vmem:[%s5 + $0x30] sm:$0xff]
    %v1001 = vld [vmem:[%s5 + $0x38] sm:$0xff]
    %v1002 = vld [vmem:[%s5 + $0x40] sm:$0xff]
    %v1003 = vld [vmem:[%s5 + $0x48] sm:$0xff]
    %v1004 = vld [vmem:[%s5 + $0x50] sm:$0xff]
    %v1005 = vld [vmem:[%s5 + $0x58] sm:$0xff]
    %v1006 = vld [vmem:[%s5 + $0x60] sm:$0xff]
    %v1007 = vld [vmem:[%s5 + $0x68] sm:$0xff]
    %v1008 = vld [vmem:[%s5 + $0x70] sm:$0xff]
    %v1009 = vld [vmem:[%s5 + $0x78] sm:$0xff]
    %v1010 = vld [vmem:[%s5 + $0x80] sm:$0xff]
    %v1011 = vld [vmem:[%s5 + $0x88] sm:$0xff]
    %v1012 = vld [vmem:[%s5 + $0x90] sm:$0xff]
    %v1013 = vld [vmem:[%s5 + $0x98] sm:$0xff]
    %v1014 = vld [vmem:[%s5 + $0xa0] sm:$0xff]
    %v1015 = vld [vmem:[%s5 + $0xa8] sm:$0xff]
    %v1016 = vld [vmem:[%s5 + $0xb0] sm:$0xff]
    %v1017 = vld [vmem:[%s5 + $0xb8] sm:$0xff]
    %v1018 = vld [vmem:[%s5 + $0xc0] sm:$0xff]
    %v1019 = vld [vmem:[%s5 + $0xc8] sm:$0xff]
    %v1020 = vld [vmem:[%s5 + $0xd0] sm:$0xff]
    %v1021 = vld [vmem:[%s5 + $0xd8] sm:$0xff]
    %v1022 = vld [vmem:[%s5 + $0xe0] sm:$0xff]
    %v1023 = vld [vmem:[%s5 + $0xe8] sm:$0xff]
    %v1024 = vld [vmem:[%s5 + $0xf0] sm:$0xff]
    %v1025 = vld [vmem:[%s5 + $0xf8] sm:$0xff]
    %v1026 = vld [vmem:[%s5 + $0x100] sm:$0xff]
    %v1027 = vld [vmem:[%s5 + $0x108] sm:$0xff]
    %v1028 = vld [vmem:[%s5 + $0x110] sm:$0xff]
    %v1029 = vld [vmem:[%s5 + $0x118] sm:$0xff]
    %v1030 = vld [vmem:[%s6] sm:$0x1]
    %v1032 = vlaneseq
    %v1033 = vshrl.u32 %v1032, 7
    %v1034 = vsub.s32 0, %v1033
    %v1035 = vrot.slane %v1030, %v1034
    %v1038 = vsel %vm273, %v984, 0
    %v1041 = vsel %vm273, %v987, 0
    %v1044 = vsel %vm273, %v990, 0
    %v1047 = vsel %vm273, %v993, 0
    %1049 = vmatprep.subr.mxu0 0.0
    %1050 = vmatpush1.msra.mxu0 %v1009
    %1051 = vmatprep.subr.mxu0 0.0
    %1052 = vmatpush1.msra.mxu0 %v1008
    %1053 = vmatprep.subr.mxu0 0.0
    %1054 = vmatpush1.msra.mxu0 %v1007
    %1055 = vmatprep.subr.mxu0 0.0
    %1056 = vmatpush1.msra.mxu0 %v1006
    %1057 = vmatprep.subr.mxu0 0.0
    %1058 = vmatpush1.msra.mxu0 %v1005
    %1059 = vmatprep.subr.mxu0 0.0
    %1060 = vmatpush1.msra.mxu0 %v1004
    %1061 = vmatprep.subr.mxu0 0.0
    %1062 = vmatpush1.msra.mxu0 %v1003
    %1063 = vmatprep.subr.mxu0 0.0
    %1064 = vmatpush1.msra.mxu0 %v1002
    %1065 = vmatprep.subr.mxu0 0.0
    %1066 = vmatpush1.msra.mxu0 %v1001
    %1067 = vmatprep.subr.mxu0 0.0
    %1068 = vmatpush1.msra.mxu0 %v1000
    %1069 = vmatprep.subr.mxu0 0.0
    %1070 = vmatpush1.msra.mxu0 %v999
    %1071 = vmatprep.subr.mxu0 0.0
    %1072 = vmatpush1.msra.mxu0 %v998
    %1073 = vmatprep.subr.mxu0 0.0
    %1074 = vmatpush1.msra.mxu0 %v997
    %1075 = vmatprep.subr.mxu0 0.0
    %1076 = vmatpush1.msra.mxu0 %v996
    %1077 = vmatprep.subr.mxu0 0.0
    %1078 = vmatpush1.msra.mxu0 %v995
    %1079 = vmatprep.subr.mxu0 0.0
    %1080 = vmatpush1.msra.mxu0 %v994
    %1081 = vmatprep.subr.mxu0 0.0
    %1082 = vmatpush2.msra.mxu0 %v1025
    %1083 = vmatprep.subr.mxu0 0.0
    %1084 = vmatpush2.msra.mxu0 %v1024
    %1085 = vmatprep.subr.mxu0 0.0
    %1086 = vmatpush2.msra.mxu0 %v1023
    %1087 = vmatprep.subr.mxu0 0.0
    %1088 = vmatpush2.msra.mxu0 %v1022
    %1089 = vmatprep.subr.mxu0 0.0
    %1090 = vmatpush2.msra.mxu0 %v1021
    %1091 = vmatprep.subr.mxu0 0.0
    %1092 = vmatpush2.msra.mxu0 %v1020
    %1093 = vmatprep.subr.mxu0 0.0
    %1094 = vmatpush2.msra.mxu0 %v1019
    %1095 = vmatprep.subr.mxu0 0.0
    %1096 = vmatpush2.msra.mxu0 %v1018
    %1097 = vmatprep.subr.mxu0 0.0
    %1098 = vmatpush2.msra.mxu0 %v1017
    %1099 = vmatprep.subr.mxu0 0.0
    %1100 = vmatpush2.msra.mxu0 %v1016
    %1101 = vmatprep.subr.mxu0 0.0
    %1102 = vmatpush2.msra.mxu0 %v1015
    %1103 = vmatprep.subr.mxu0 0.0
    %1104 = vmatpush2.msra.mxu0 %v1014
    %1105 = vmatprep.subr.mxu0 0.0
    %1106 = vmatpush2.msra.mxu0 %v1013
    %1107 = vmatprep.subr.mxu0 0.0
    %1108 = vmatpush2.msra.mxu0 %v1012
    %1109 = vmatprep.subr.mxu0 0.0
    %1110 = vmatpush2.msra.mxu0 %v1011
    %1111 = vmatprep.subr.mxu0 0.0
    %1112 = vmatpush2.msra.mxu0 %v1010
    %1113 = vmatprep.mubr.f32.mxu0 %v983
    %1114 = vmatmul.mubr.f32.gmra.mxu0 %v982
    %v1115 = vpop.f32.mrf.mxu0
    %v1116 = vadd.f32 %v1035, %v1115
    %v1117 = vpop.f32.mrf.mxu0
    %1118 = vmatprep.mubr.f32.mxu0 %v986
    %1119 = vmatmul.mubr.f32.gmra.mxu0 %v985
    %v1120 = vpop.f32.mrf.mxu0
    %v1121 = vadd.f32 %v1035, %v1120
    %v1122 = vpop.f32.mrf.mxu0
    %1123 = vmatprep.mubr.f32.mxu0 %v989
    %1124 = vmatmul.mubr.f32.gmra.mxu0 %v988
    %v1125 = vpop.f32.mrf.mxu0
    %v1126 = vadd.f32 %v1035, %v1125
    %v1127 = vpop.f32.mrf.mxu0
    %1128 = vmatprep.mubr.f32.mxu0 %v992
    %1129 = vmatmul.mubr.f32.gmra.mxu0 %v991
    %v1130 = vpop.f32.mrf.mxu0
    %v1131 = vadd.f32 %v1035, %v1130
    %v1132 = vpop.f32.mrf.mxu0
    %1133 = vdwg.mxu0
    %1134 = vmatprep.subr.mxu0 0.0
    %1135 = vmatpush1.msra.mxu0 0.0
    %1136 = vmatprep.subr.mxu0 0.0
    %1137 = vmatpush1.msra.mxu0 0.0
    %1138 = vmatprep.subr.mxu0 0.0
    %1139 = vmatpush1.msra.mxu0 0.0
    %1140 = vmatprep.subr.mxu0 0.0
    %1141 = vmatpush1.msra.mxu0 0.0
    %1142 = vmatprep.subr.mxu0 0.0
    %1143 = vmatpush1.msra.mxu0 0.0
    %1144 = vmatprep.subr.mxu0 0.0
    %1145 = vmatpush1.msra.mxu0 0.0
    %1146 = vmatprep.subr.mxu0 0.0
    %1147 = vmatpush1.msra.mxu0 0.0
    %1148 = vmatprep.subr.mxu0 0.0
    %1149 = vmatpush1.msra.mxu0 0.0
    %1150 = vmatprep.subr.mxu0 0.0
    %1151 = vmatpush1.msra.mxu0 0.0
    %1152 = vmatprep.subr.mxu0 0.0
    %1153 = vmatpush1.msra.mxu0 0.0
    %1154 = vmatprep.subr.mxu0 0.0
    %1155 = vmatpush1.msra.mxu0 0.0
    %1156 = vmatprep.subr.mxu0 0.0
    %1157 = vmatpush1.msra.mxu0 0.0
    %1158 = vmatprep.subr.mxu0 0.0
    %1159 = vmatpush1.msra.mxu0 %v1029
    %1160 = vmatprep.subr.mxu0 0.0
    %1161 = vmatpush1.msra.mxu0 %v1028
    %1162 = vmatprep.subr.mxu0 0.0
    %1163 = vmatpush1.msra.mxu0 %v1027
    %1164 = vmatprep.subr.mxu0 0.0
    %1165 = vmatpush1.msra.mxu0 %v1026
    %1166 = vmatprep.subr.mxu0 0.0
    %1167 = vmatpush2.msra.mxu0 0.0
    %1168 = vmatprep.subr.mxu0 0.0
    %1169 = vmatpush2.msra.mxu0 0.0
    %1170 = vmatprep.subr.mxu0 0.0
    %1171 = vmatpush2.msra.mxu0 0.0
    %1172 = vmatprep.subr.mxu0 0.0
    %1173 = vmatpush2.msra.mxu0 0.0
    %1174 = vmatprep.subr.mxu0 0.0
    %1175 = vmatpush2.msra.mxu0 0.0
    %1176 = vmatprep.subr.mxu0 0.0
    %1177 = vmatpush2.msra.mxu0 0.0
    %1178 = vmatprep.subr.mxu0 0.0
    %1179 = vmatpush2.msra.mxu0 0.0
    %1180 = vmatprep.subr.mxu0 0.0
    %1181 = vmatpush2.msra.mxu0 0.0
    %1182 = vmatprep.subr.mxu0 0.0
    %1183 = vmatpush2.msra.mxu0 0.0
    %1184 = vmatprep.subr.mxu0 0.0
    %1185 = vmatpush2.msra.mxu0 0.0
    %1186 = vmatprep.subr.mxu0 0.0
    %1187 = vmatpush2.msra.mxu0 0.0
    %1188 = vmatprep.subr.mxu0 0.0
    %1189 = vmatpush2.msra.mxu0 0.0
    %1190 = vmatprep.subr.mxu0 0.0
    %1191 = vmatpush2.msra.mxu0 0.0
    %1192 = vmatprep.subr.mxu0 0.0
    %1193 = vmatpush2.msra.mxu0 0.0
    %1194 = vmatprep.subr.mxu0 0.0
    %1195 = vmatpush2.msra.mxu0 0.0
    %1196 = vmatprep.subr.mxu0 0.0
    %1197 = vmatpush2.msra.mxu0 0.0
    %1198 = vmatprep.mubr.f32.mxu0 0.0
    %1199 = vmatmul.mubr.f32.gmra.mxu0 %v1038
    %v1200 = vpop.f32.mrf.mxu0
    %v1201 = vadd.f32 %v1116, %v1200
    %v1202 = vpop.f32.mrf.mxu0
    %1203 = vmatprep.mubr.f32.mxu0 0.0
    %1204 = vmatmul.mubr.f32.gmra.mxu0 %v1041
    %v1205 = vpop.f32.mrf.mxu0
    %v1206 = vadd.f32 %v1121, %v1205
    %v1207 = vpop.f32.mrf.mxu0
    %1208 = vmatprep.mubr.f32.mxu0 0.0
    %1209 = vmatmul.mubr.f32.gmra.mxu0 %v1044
    %v1210 = vpop.f32.mrf.mxu0
    %v1211 = vadd.f32 %v1126, %v1210
    %v1212 = vpop.f32.mrf.mxu0
    %1213 = vmatprep.mubr.f32.mxu0 0.0
    %1214 = vmatmul.mubr.f32.gmra.mxu0 %v1047
    %v1215 = vpop.f32.mrf.mxu0
    %v1216 = vadd.f32 %v1131, %v1215
    %v1217 = vpop.f32.mrf.mxu0
    %1218 = vdwg.mxu0
    %v1219 = vld [vmem:[%s7] sm:$0x1]
    %v1220 = vld [vmem:[%s8] sm:$0x1]
    %v1221 = vsel %vm273, %v1201, 0.0
    %v1222 = vsel %vm273, %v1206, 0.0
    %v1223 = vadd.f32 %v1221, %v1222
    %v1224 = vsel %vm273, %v1211, 0.0
    %v1225 = vadd.f32 %v1223, %v1224
    %v1226 = vsel %vm273, %v1216, 0.0
    %v1227 = vadd.f32 %v1225, %v1226
    %v1228 = vrot.slane %v1227, 4
    %v1229 = vadd.f32 %v1227, %v1228
    %v1230 = vrot.slane %v1229, 2
    %v1231 = vadd.f32 %v1229, %v1230
    %v1232 = vrot.slane %v1231, 1
    %v1233 = vadd.f32 %v1231, %v1232
    %v1234 = vrcp.pop 32.0
    %v1235 = vmul.f32 %v1233, %v1234
    %v1236 = vsub.f32 %v1201, %v1235
    %v1237 = vsub.f32 %v1206, %v1235
    %v1238 = vsub.f32 %v1211, %v1235
    %v1239 = vsub.f32 %v1216, %v1235
    %v1240 = vmul.f32 %v1236, %v1236
    %v1241 = vmul.f32 %v1237, %v1237
    %v1242 = vmul.f32 %v1238, %v1238
    %v1243 = vmul.f32 %v1239, %v1239
    %v1244 = vsel %vm273, %v1240, 0.0
    %v1245 = vsel %vm273, %v1241, 0.0
    %v1246 = vadd.f32 %v1244, %v1245
    %v1247 = vsel %vm273, %v1242, 0.0
    %v1248 = vadd.f32 %v1246, %v1247
    %v1249 = vsel %vm273, %v1243, 0.0
    %v1250 = vadd.f32 %v1248, %v1249
    %v1251 = vrot.slane %v1250, 4
    %v1252 = vadd.f32 %v1250, %v1251
    %v1253 = vrot.slane %v1252, 2
    %v1254 = vadd.f32 %v1252, %v1253
    %v1255 = vrot.slane %v1254, 1
    %v1256 = vadd.f32 %v1254, %v1255
    %v1257 = vmul.f32 %v1256, %v1234
    %v1258 = vadd.f32 %v1257, 1e-05
    %v1259 = vrsqrt.pop %v1258
    %v1260 = vmul.f32 %v1236, %v1259
    %v1261 = vmul.f32 %v1237, %v1259
    %v1262 = vmul.f32 %v1238, %v1259
    %v1263 = vmul.f32 %v1239, %v1259
    %v1265 = vlaneseq
    %v1266 = vshrl.u32 %v1265, 7
    %v1267 = vsub.s32 0, %v1266
    %v1268 = vrot.slane %v1219, %v1267
    %v1270 = vmul.f32 %v1268, %v1260
    %v1271 = vmul.f32 %v1268, %v1261
    %v1272 = vmul.f32 %v1268, %v1262
    %v1273 = vmul.f32 %v1268, %v1263
    %v1275 = vlaneseq
    %v1276 = vshrl.u32 %v1275, 7
    %v1277 = vsub.s32 0, %v1276
    %v1278 = vrot.slane %v1220, %v1277
    %v1280 = vadd.f32 %v1270, %v1278
    %v1281 = vadd.f32 %v1271, %v1278
    %v1282 = vadd.f32 %v1272, %v1278
    %v1283 = vadd.f32 %v1273, %v1278
    %v1284 = vmax.f32 %v1280, 0.0
    %v1285 = vmax.f32 %v1281, 0.0
    %v1286 = vmax.f32 %v1282, 0.0
    %v1287 = vmax.f32 %v1283, 0.0
    %v1288 = vld [vmem:[%s9] sm:$0xff]
    %v1289 = vld [vmem:[%s9 + $0x8] sm:$0xff]
    %v1290 = vld [vmem:[%s9 + $0x10] sm:$0xff]
    %v1291 = vld [vmem:[%s9 + $0x18] sm:$0xff]
    %v1292 = vld [vmem:[%s10] sm:$0x1]
    %v1294 = vlaneseq
    %v1295 = vshrl.u32 %v1294, 7
    %v1296 = vsub.s32 0, %v1295
    %v1297 = vrot.slane %v1292, %v1296
    %v1300 = vsel %vm273, %v1284, 0
    %v1303 = vsel %vm273, %v1285, 0
    %v1306 = vsel %vm273, %v1286, 0
    %v1309 = vsel %vm273, %v1287, 0
    %1311 = vmatprep.subr.mxu0 0.0
    %1312 = vmatpush1.msra.mxu0 0.0
    %1313 = vmatprep.subr.mxu0 0.0
    %1314 = vmatpush1.msra.mxu0 0.0
    %1315 = vmatprep.subr.mxu0 0.0
    %1316 = vmatpush1.msra.mxu0 0.0
    %1317 = vmatprep.subr.mxu0 0.0
    %1318 = vmatpush1.msra.mxu0 0.0
    %1319 = vmatprep.subr.mxu0 0.0
    %1320 = vmatpush1.msra.mxu0 0.0
    %1321 = vmatprep.subr.mxu0 0.0
    %1322 = vmatpush1.msra.mxu0 0.0
    %1323 = vmatprep.subr.mxu0 0.0
    %1324 = vmatpush1.msra.mxu0 0.0
    %1325 = vmatprep.subr.mxu0 0.0
    %1326 = vmatpush1.msra.mxu0 0.0
    %1327 = vmatprep.subr.mxu0 0.0
    %1328 = vmatpush1.msra.mxu0 0.0
    %1329 = vmatprep.subr.mxu0 0.0
    %1330 = vmatpush1.msra.mxu0 0.0
    %1331 = vmatprep.subr.mxu0 0.0
    %1332 = vmatpush1.msra.mxu0 0.0
    %1333 = vmatprep.subr.mxu0 0.0
    %1334 = vmatpush1.msra.mxu0 0.0
    %1335 = vmatprep.subr.mxu0 0.0
    %1336 = vmatpush1.msra.mxu0 %v1291
    %1337 = vmatprep.subr.mxu0 0.0
    %1338 = vmatpush1.msra.mxu0 %v1290
    %1339 = vmatprep.subr.mxu0 0.0
    %1340 = vmatpush1.msra.mxu0 %v1289
    %1341 = vmatprep.subr.mxu0 0.0
    %1342 = vmatpush1.msra.mxu0 %v1288
    %1343 = vmatprep.subr.mxu0 0.0
    %1344 = vmatpush2.msra.mxu0 0.0
    %1345 = vmatprep.subr.mxu0 0.0
    %1346 = vmatpush2.msra.mxu0 0.0
    %1347 = vmatprep.subr.mxu0 0.0
    %1348 = vmatpush2.msra.mxu0 0.0
    %1349 = vmatprep.subr.mxu0 0.0
    %1350 = vmatpush2.msra.mxu0 0.0
    %1351 = vmatprep.subr.mxu0 0.0
    %1352 = vmatpush2.msra.mxu0 0.0
    %1353 = vmatprep.subr.mxu0 0.0
    %1354 = vmatpush2.msra.mxu0 0.0
    %1355 = vmatprep.subr.mxu0 0.0
    %1356 = vmatpush2.msra.mxu0 0.0
    %1357 = vmatprep.subr.mxu0 0.0
    %1358 = vmatpush2.msra.mxu0 0.0
    %1359 = vmatprep.subr.mxu0 0.0
    %1360 = vmatpush2.msra.mxu0 0.0
    %1361 = vmatprep.subr.mxu0 0.0
    %1362 = vmatpush2.msra.mxu0 0.0
    %1363 = vmatprep.subr.mxu0 0.0
    %1364 = vmatpush2.msra.mxu0 0.0
    %1365 = vmatprep.subr.mxu0 0.0
    %1366 = vmatpush2.msra.mxu0 0.0
    %1367 = vmatprep.subr.mxu0 0.0
    %1368 = vmatpush2.msra.mxu0 0.0
    %1369 = vmatprep.subr.mxu0 0.0
    %1370 = vmatpush2.msra.mxu0 0.0
    %1371 = vmatprep.subr.mxu0 0.0
    %1372 = vmatpush2.msra.mxu0 0.0
    %1373 = vmatprep.subr.mxu0 0.0
    %1374 = vmatpush2.msra.mxu0 0.0
    %1375 = vmatprep.mubr.f32.mxu0 0.0
    %1376 = vmatmul.mubr.f32.gmra.mxu0 %v1300
    %v1377 = vpop.f32.mrf.mxu0
    %v1378 = vadd.f32 %v1297, %v1377
    %v1379 = vpop.f32.mrf.mxu0
    %1380 = vmatprep.mubr.f32.mxu0 0.0
    %1381 = vmatmul.mubr.f32.gmra.mxu0 %v1303
    %v1382 = vpop.f32.mrf.mxu0
    %v1383 = vadd.f32 %v1297, %v1382
    %v1384 = vpop.f32.mrf.mxu0
    %1385 = vmatprep.mubr.f32.mxu0 0.0
    %1386 = vmatmul.mubr.f32.gmra.mxu0 %v1306
    %v1387 = vpop.f32.mrf.mxu0
    %v1388 = vadd.f32 %v1297, %v1387
    %v1389 = vpop.f32.mrf.mxu0
    %1390 = vmatprep.mubr.f32.mxu0 0.0
    %1391 = vmatmul.mubr.f32.gmra.mxu0 %v1309
    %v1392 = vpop.f32.mrf.mxu0
    %v1393 = vadd.f32 %v1297, %v1392
    %v1394 = vpop.f32.mrf.mxu0
    %1395 = vdwg.mxu0
    %v1396 = vmax.f32 %v1378, 0.0
    %v1397 = vmax.f32 %v1383, 0.0
    %v1398 = vmax.f32 %v1388, 0.0
    %v1399 = vmax.f32 %v1393, 0.0
    %vm1400 = vcmask 130048
    %v1401 = vsel %vm1400, %v1396, -inf
    %v1402 = vsel %vm1400, %v1397, -inf
    %v1403 = vmax.f32 %v1401, %v1402
    %v1404 = vrot.slane %v1403, 4
    %v1405 = vmax.f32 %v1403, %v1404
    %v1406 = vrot.slane %v1405, 2
    %v1407 = vmax.f32 %v1405, %v1406
    %v1408 = vrot.slane %v1407, 1
    %v1409 = vmax.f32 %v1407, %v1408
    %vm1410 = vcmask 122880
    %1411 = vst.msk [vmem:[#allocation8] sm:$0x1] %vm1410, %v1409
    %v1412 = vsel %vm1400, %v1398, -inf
    %v1413 = vsel %vm1400, %v1399, -inf
    %v1414 = vmax.f32 %v1412, %v1413
    %v1415 = vrot.slane %v1414, 4
    %v1416 = vmax.f32 %v1414, %v1415
    %v1417 = vrot.slane %v1416, 2
    %v1418 = vmax.f32 %v1416, %v1417
    %v1419 = vrot.slane %v1418, 1
    %v1420 = vmax.f32 %v1418, %v1419
    %1421 = vst.msk [vmem:[#allocation8 + $0x1] sm:$0x1] %vm1410, %v1420
    %v1422 = vld [vmem:[#allocation8] sm:$0x3]
    %v1423 = vld [vmem:[%s11] sm:$0xff]
    %v1424 = vld [vmem:[%s11 + $0x8] sm:$0xff]
    %v1425 = vld [vmem:[%s12] sm:$0x1]
    %v1427 = vlaneseq
    %v1428 = vshrl.u32 %v1427, 7
    %v1429 = vsub.s32 0, %v1428
    %v1430 = vrot.slane %v1425, %v1429
    %v1433 = vsel %vm1400, %v1422, 0
    %1435 = vmatprep.subr.mxu0 0.0
    %1436 = vmatpush1.msra.mxu0 0.0
    %1437 = vmatprep.subr.mxu0 0.0
    %1438 = vmatpush1.msra.mxu0 0.0
    %1439 = vmatprep.subr.mxu0 0.0
    %1440 = vmatpush1.msra.mxu0 0.0
    %1441 = vmatprep.subr.mxu0 0.0
    %1442 = vmatpush1.msra.mxu0 0.0
    %1443 = vmatprep.subr.mxu0 0.0
    %1444 = vmatpush1.msra.mxu0 0.0
    %1445 = vmatprep.subr.mxu0 0.0
    %1446 = vmatpush1.msra.mxu0 0.0
    %1447 = vmatprep.subr.mxu0 0.0
    %1448 = vmatpush1.msra.mxu0 0.0
    %1449 = vmatprep.subr.mxu0 0.0
    %1450 = vmatpush1.msra.mxu0 0.0
    %1451 = vmatprep.subr.mxu0 0.0
    %1452 = vmatpush1.msra.mxu0 0.0
    %1453 = vmatprep.subr.mxu0 0.0
    %1454 = vmatpush1.msra.mxu0 0.0
    %1455 = vmatprep.subr.mxu0 0.0
    %1456 = vmatpush1.msra.mxu0 0.0
    %1457 = vmatprep.subr.mxu0 0.0
    %1458 = vmatpush1.msra.mxu0 0.0
    %1459 = vmatprep.subr.mxu0 0.0
    %1460 = vmatpush1.msra.mxu0 0.0
    %1461 = vmatprep.subr.mxu0 0.0
    %1462 = vmatpush1.msra.mxu0 0.0
    %1463 = vmatprep.subr.mxu0 0.0
    %1464 = vmatpush1.msra.mxu0 %v1424
    %1465 = vmatprep.subr.mxu0 0.0
    %1466 = vmatpush1.msra.mxu0 %v1423
    %1467 = vmatprep.subr.mxu0 0.0
    %1468 = vmatpush2.msra.mxu0 0.0
    %1469 = vmatprep.subr.mxu0 0.0
    %1470 = vmatpush2.msra.mxu0 0.0
    %1471 = vmatprep.subr.mxu0 0.0
    %1472 = vmatpush2.msra.mxu0 0.0
    %1473 = vmatprep.subr.mxu0 0.0
    %1474 = vmatpush2.msra.mxu0 0.0
    %1475 = vmatprep.subr.mxu0 0.0
    %1476 = vmatpush2.msra.mxu0 0.0
    %1477 = vmatprep.subr.mxu0 0.0
    %1478 = vmatpush2.msra.mxu0 0.0
    %1479 = vmatprep.subr.mxu0 0.0
    %1480 = vmatpush2.msra.mxu0 0.0
    %1481 = vmatprep.subr.mxu0 0.0
    %1482 = vmatpush2.msra.mxu0 0.0
    %1483 = vmatprep.subr.mxu0 0.0
    %1484 = vmatpush2.msra.mxu0 0.0
    %1485 = vmatprep.subr.mxu0 0.0
    %1486 = vmatpush2.msra.mxu0 0.0
    %1487 = vmatprep.subr.mxu0 0.0
    %1488 = vmatpush2.msra.mxu0 0.0
    %1489 = vmatprep.subr.mxu0 0.0
    %1490 = vmatpush2.msra.mxu0 0.0
    %1491 = vmatprep.subr.mxu0 0.0
    %1492 = vmatpush2.msra.mxu0 0.0
    %1493 = vmatprep.subr.mxu0 0.0
    %1494 = vmatpush2.msra.mxu0 0.0
    %1495 = vmatprep.subr.mxu0 0.0
    %1496 = vmatpush2.msra.mxu0 0.0
    %1497 = vmatprep.subr.mxu0 0.0
    %1498 = vmatpush2.msra.mxu0 0.0
    %1499 = vmatprep.mubr.f32.mxu0 0.0
    %1500 = vmatmul.mubr.f32.gmra.mxu0 %v1433
    %v1501 = vpop.f32.mrf.mxu0
    %v1502 = vadd.f32 %v1430, %v1501
    %v1503 = vpop.f32.mrf.mxu0
    %1504 = vdwg.mxu0
    %vm1505 = vcmask 254976
    %v1506 = vsel %vm1505, %v1502, 0.0
    %v1507 = vrot.slane %v1506, 4
    %v1508 = vadd.f32 %v1506, %v1507
    %v1509 = vrot.slane %v1508, 2
    %v1510 = vadd.f32 %v1508, %v1509
    %v1511 = vrot.slane %v1510, 1
    %v1512 = vadd.f32 %v1510, %v1511
    %v1513 = vrcp.pop 2.0
    %v1514 = vmul.f32 %v1512, %v1513
    %v1515 = vsub.f32 %v1502, %v1514
    %v1516 = vmul.f32 %v1515, %v1515
    %v1517 = vsel %vm1505, %v1516, 0.0
    %v1518 = vrot.slane %v1517, 4
    %v1519 = vadd.f32 %v1517, %v1518
    %v1520 = vrot.slane %v1519, 2
    %v1521 = vadd.f32 %v1519, %v1520
    %v1522 = vrot.slane %v1521, 1
    %v1523 = vadd.f32 %v1521, %v1522
    %v1524 = vmul.f32 %v1523, %v1513
    %v1525 = vadd.f32 %v1524, 1e-05
    %v1526 = vrsqrt.pop %v1525
    %v1527 = vmul.f32 %v1515, %v1526
    %v1528 = vmax.f32 %v1527, 0.0
    %1529 = vst.msk [vmem:[#allocation9] sm:$0x3] %vm1505, %v1528
    // Predicated region
    $region54: #{filmed_net_forward.1} parent=1 // pred_check
      _
    $region55: #{filmed_net_forward.1} parent=1 // pred_check_branch
      %1531 = sbr.rel (0) target = $region57
    $region56: #{filmed_net_forward.1} parent=1 // pred_region
      %s1533 = ssub.s32 32, 32
      %1534 = vsyncadd [#allocation10], %s1533
      %s1536 = sshll.u32 [#allocation9], 4
      %s1537 = int_to_ptr.vmem [resolvable:$true] %s1536
      %1539 = dma.vmem_to_hbm [thread:$0]  %s1537, 32, %s13, [#allocation10]
    $region57: #{filmed_net_forward.1} parent=1 // pred_fallthru
      _
    // Predicated region
    $region58: #{filmed_net_forward.1} parent=1 // pred_check
      _
    $region59: #{filmed_net_forward.1} parent=1 // pred_check_branch
      %1541 = sbr.rel (0) target = $region61
    $region60: #{filmed_net_forward.1} parent=1 // pred_region
      %1542 = dma.done [#allocation10], 32
    $region61: #{filmed_net_forward.1} parent=1 // pred_fallthru
      _
    %1543 = vsyncpa [#allocation10], 1

</llo_original>
